<compile_context>
chip_gen: v7x
topology: tpu7x:2x2x1
jax: 0.10.0
libtpu: 0.0.40
codegen_flags: <defaults>
</compile_context>

<pallas_src>
import math

import jax
import jax.numpy as jnp
from jax.experimental import pallas as pl
from jax.experimental.pallas import tpu as pltpu

INPUT_SIZE = 32
OUTPUT_SIZE = 512

# (in, out) sizes for each Linear (PyTorch module order).
PRED_DIMS = [(INPUT_SIZE, 64), (64, 128), (128, 256),
             (256, OUTPUT_SIZE), (OUTPUT_SIZE, OUTPUT_SIZE),
             (OUTPUT_SIZE, OUTPUT_SIZE)]
TARG_DIMS = [(INPUT_SIZE, 64), (64, 128), (128, 256), (256, OUTPUT_SIZE)]

_LEAKY_SLOPE = 0.01  # nn.LeakyReLU() default


def _leaky_relu(x):
    return jnp.where(x >= 0, x, _LEAKY_SLOPE * x)


def _relu(x):
    return jnp.maximum(x, 0.0)


def rnd_kernel(x_ref,
               # fused layer 0 (predictor | target): [32,128]
               w0, b0,
               # fused layer 1 (block-diagonal): [128,256]
               w1, b1,
               # predictor layers 2..5 (unpadded)
               pw2, pb2, pw3, pb3, pw4, pb4, pw5, pb5,
               # target layers 2..3 (unpadded)
               tw2, tb2, tw3, tb3,
               # outputs
               pred_ref, targ_ref):
    def linear(h, w_ref, b_ref):
        # bf16 operands on the MXU, f32 accumulation; bias-add stays in f32.
        return (jnp.dot(h.astype(jnp.bfloat16), w_ref[...],
                        preferred_element_type=jnp.float32)
                + b_ref[...])

    x = x_ref[...]

    # Fused layer 0: [tb, 32] @ [32, 128] -> pred in cols 0..63, targ in 64..127.
    h0 = _leaky_relu(linear(x, w0, b0))

    # Fused layer 1 (block-diagonal): [tb, 128] @ [128, 256]
    #   -> pred in cols 0..127, targ in cols 128..255.
    h1 = _leaky_relu(linear(h0, w1, b1))

    # Lane-aligned split (multiple-of-128 boundary => cheap vreg selection).
    hp = h1[:, :128]
    ht = h1[:, 128:]

    # ---- predictor tail: LeakyReLU, ReLU, ReLU, Linear
    h = _leaky_relu(linear(hp, pw2, pb2))
    h = _relu(linear(h, pw3, pb3))
    h = _relu(linear(h, pw4, pb4))
    h = linear(h, pw5, pb5)
    pred_ref[...] = h.astype(pred_ref.dtype)

    # ---- target tail: LeakyReLU, Linear
    t = _leaky_relu(linear(ht, tw2, tb2))
    t = linear(t, tw3, tb3)
    targ_ref[...] = t.astype(targ_ref.dtype)


def _round_up(n, m):
    return -(-n // m) * m


def _pack_params(pred_params, targ_params):
    """Fuse shared-shape leading layers, cast weights to bf16 / biases to f32."""
    pw0, pb0 = pred_params[0]
    tw0, tb0 = targ_params[0]
    pw1, pb1 = pred_params[1]
    tw1, tb1 = targ_params[1]

    # Layer 0: [32,64] | [32,64] -> [32,128].
    w0f = jnp.concatenate([pw0, tw0], axis=1).astype(jnp.bfloat16)
    b0f = jnp.concatenate([pb0, tb0], axis=1).astype(jnp.float32)

    # Layer 1: block-diagonal [128,256] (pred block top-left, targ bottom-right).
    top = jnp.concatenate([pw1, jnp.zeros_like(tw1)], axis=1)
    bot = jnp.concatenate([jnp.zeros_like(pw1), tw1], axis=1)
    w1f = jnp.concatenate([top, bot], axis=0).astype(jnp.bfloat16)
    b1f = jnp.concatenate([pb1, tb1], axis=1).astype(jnp.float32)

    flat = [w0f, b0f, w1f, b1f]
    for (w, b) in pred_params[2:]:
        flat.append(w.astype(jnp.bfloat16))
        flat.append(b.astype(jnp.float32))
    for (w, b) in targ_params[2:]:
        flat.append(w.astype(jnp.bfloat16))
        flat.append(b.astype(jnp.float32))
    return flat


def rnd_forward(x, pred_params, targ_params, *, tile_b=None):
    """x: [B, INPUT_SIZE] float32. Returns (predict_feature, target_feature)."""
    B, D = x.shape
    assert D == INPUT_SIZE

    if tile_b is None:
        if B >= 512:
            tile_b = 512          # MXU-friendly large tile
        elif B >= 256:
            tile_b = 256
        else:
            tile_b = _round_up(B, 8)   # tiny batch: one grid step, no tiling

    Bp = _round_up(B, tile_b)
    if Bp != B:
        x = jnp.pad(x, ((0, Bp - B), (0, 0)))

    flat_params = _pack_params(pred_params, targ_params)

    # One block == whole array for weights / biases; constant index_map keeps
    # them VMEM-resident across the entire batch grid (single DMA).
    def rep_spec(shape):
        return pl.BlockSpec(shape, lambda i: (0, 0))

    in_specs = [pl.BlockSpec((tile_b, INPUT_SIZE), lambda i: (i, 0))]
    for p in flat_params:
        in_specs.append(rep_spec(p.shape))

    out_specs = [pl.BlockSpec((tile_b, OUTPUT_SIZE), lambda i: (i, 0)),
                 pl.BlockSpec((tile_b, OUTPUT_SIZE), lambda i: (i, 0))]
    out_shape = (jax.ShapeDtypeStruct((Bp, OUTPUT_SIZE), jnp.float32),
                 jax.ShapeDtypeStruct((Bp, OUTPUT_SIZE), jnp.float32))

    fn = pl.pallas_call(
        rnd_kernel,
        out_shape=out_shape,
        grid_spec=pltpu.PrefetchScalarGridSpec(
            num_scalar_prefetch=0,
            grid=(Bp // tile_b,),
            in_specs=in_specs,
            out_specs=out_specs,
        ),
        compiler_params=pltpu.CompilerParams(
            dimension_semantics=("parallel",),   # batch tiles shard across TCs
            vmem_limit_bytes=32 * 1024 * 1024,
        ),
    )
    pred_feat, targ_feat = fn(x, *flat_params)
    if Bp != B:
        pred_feat = pred_feat[:B]
        targ_feat = targ_feat[:B]
    return pred_feat, targ_feat


def init_params(key, dims):
    """Orthogonal init with gain sqrt(2) (as in the PyTorch module), zero bias.

    Weights stored as [in, out] (transpose of nn.Linear's [out, in])."""
    params = []
    ortho = jax.nn.initializers.orthogonal(scale=math.sqrt(2.0))
    for (din, dout) in dims:
        key, sub = jax.random.split(key)
        # init as (out, in) like PyTorch, then transpose to kernel layout (in, out)
        w = ortho(sub, (dout, din), jnp.float32).T
        b = jnp.zeros((1, dout), jnp.float32)
        params.append((w, b))
    return key, params


def rnd_reference(x, pred_params, targ_params):
    """Pure-JAX reference using the same bf16-on-MXU / f32-accumulate recipe."""
    def linear(h, w, b):
        return jnp.dot(h.astype(jnp.bfloat16), w.astype(jnp.bfloat16),
                       preferred_element_type=jnp.float32) + b

    pred_acts = [_leaky_relu, _leaky_relu, _leaky_relu, _relu, _relu, None]
    h = x
    for (w, b), act in zip(pred_params, pred_acts):
        h = linear(h, w, b)
        if act is not None:
            h = act(h)

    targ_acts = [_leaky_relu, _leaky_relu, _leaky_relu, None]
    t = x
    for (w, b), act in zip(targ_params, targ_acts):
        t = linear(t, w, b)
        if act is not None:
            t = act(t)
    return h, t


if __name__ == "__main__":
    key = jax.random.PRNGKey(0)
    key, pred_params = init_params(key, PRED_DIMS)
    key, targ_params = init_params(key, TARG_DIMS)

    key, xk = jax.random.split(key)
    batch = 8
    x = jax.random.normal(xk, (batch, INPUT_SIZE), jnp.float32)

    pred_feat, targ_feat = rnd_forward(x, pred_params, targ_params)
    jax.block_until_ready((pred_feat, targ_feat))

    assert pred_feat.shape == (batch, OUTPUT_SIZE)
    assert targ_feat.shape == (batch, OUTPUT_SIZE)

    # Validate against the pure-JAX reference (same bf16 matmul recipe).
    ref_pred, ref_targ = rnd_reference(x, pred_params, targ_params)
    assert jnp.allclose(pred_feat, ref_pred, atol=1e-2, rtol=1e-2)
    assert jnp.allclose(targ_feat, ref_targ, atol=1e-2, rtol=1e-2)

    print("KERNEL_OK")
</pallas_src>

<mosaic_0001>
module attributes {stable_mosaic.version = 11 : i64} {
  func.func @rnd_kernel(%arg0: i32, %arg1: memref<8x32xf32, #tpu.memory_space<vmem>>, %arg2: memref<32x128xbf16, #tpu.memory_space<vmem>>, %arg3: memref<1x128xf32, #tpu.memory_space<vmem>>, %arg4: memref<128x256xbf16, #tpu.memory_space<vmem>>, %arg5: memref<1x256xf32, #tpu.memory_space<vmem>>, %arg6: memref<128x256xbf16, #tpu.memory_space<vmem>>, %arg7: memref<1x256xf32, #tpu.memory_space<vmem>>, %arg8: memref<256x512xbf16, #tpu.memory_space<vmem>>, %arg9: memref<1x512xf32, #tpu.memory_space<vmem>>, %arg10: memref<512x512xbf16, #tpu.memory_space<vmem>>, %arg11: memref<1x512xf32, #tpu.memory_space<vmem>>, %arg12: memref<512x512xbf16, #tpu.memory_space<vmem>>, %arg13: memref<1x512xf32, #tpu.memory_space<vmem>>, %arg14: memref<128x256xbf16, #tpu.memory_space<vmem>>, %arg15: memref<1x256xf32, #tpu.memory_space<vmem>>, %arg16: memref<256x512xbf16, #tpu.memory_space<vmem>>, %arg17: memref<1x512xf32, #tpu.memory_space<vmem>>, %arg18: memref<8x512xf32, #tpu.memory_space<vmem>>, %arg19: memref<8x512xf32, #tpu.memory_space<vmem>>) attributes {dimension_semantics = [#tpu.dimension_semantics<parallel>], iteration_bounds = array<i64: 1>, scalar_prefetch = 0 : i64, scratch_operands = 0 : i64, tpu.core_type = #tpu.core_type<tc>, window_params = [{transform_indices = @transform_0, window_bounds = array<i64: 8, 32>}, {pipeline_mode = #tpu.pipeline_mode<synchronous>, transform_indices = @transform_1, window_bounds = array<i64: 32, 128>}, {pipeline_mode = #tpu.pipeline_mode<synchronous>, transform_indices = @transform_2, window_bounds = array<i64: 1, 128>}, {pipeline_mode = #tpu.pipeline_mode<synchronous>, transform_indices = @transform_3, window_bounds = array<i64: 128, 256>}, {pipeline_mode = #tpu.pipeline_mode<synchronous>, transform_indices = @transform_4, window_bounds = array<i64: 1, 256>}, {pipeline_mode = #tpu.pipeline_mode<synchronous>, transform_indices = @transform_5, window_bounds = array<i64: 128, 256>}, {pipeline_mode = #tpu.pipeline_mode<synchronous>, transform_indices = @transform_6, window_bounds = array<i64: 1, 256>}, {pipeline_mode = #tpu.pipeline_mode<synchronous>, transform_indices = @transform_7, window_bounds = array<i64: 256, 512>}, {pipeline_mode = #tpu.pipeline_mode<synchronous>, transform_indices = @transform_8, window_bounds = array<i64: 1, 512>}, {pipeline_mode = #tpu.pipeline_mode<synchronous>, transform_indices = @transform_9, window_bounds = array<i64: 512, 512>}, {pipeline_mode = #tpu.pipeline_mode<synchronous>, transform_indices = @transform_10, window_bounds = array<i64: 1, 512>}, {pipeline_mode = #tpu.pipeline_mode<synchronous>, transform_indices = @transform_11, window_bounds = array<i64: 512, 512>}, {pipeline_mode = #tpu.pipeline_mode<synchronous>, transform_indices = @transform_12, window_bounds = array<i64: 1, 512>}, {pipeline_mode = #tpu.pipeline_mode<synchronous>, transform_indices = @transform_13, window_bounds = array<i64: 128, 256>}, {pipeline_mode = #tpu.pipeline_mode<synchronous>, transform_indices = @transform_14, window_bounds = array<i64: 1, 256>}, {pipeline_mode = #tpu.pipeline_mode<synchronous>, transform_indices = @transform_15, window_bounds = array<i64: 256, 512>}, {pipeline_mode = #tpu.pipeline_mode<synchronous>, transform_indices = @transform_16, window_bounds = array<i64: 1, 512>}, {transform_indices = @transform_17, window_bounds = array<i64: 8, 512>}, {transform_indices = @transform_18, window_bounds = array<i64: 8, 512>}]} {
    %c0 = arith.constant 0 : index
    %c0_0 = arith.constant 0 : index
    %0 = vector.load %arg1[%c0, %c0_0] : memref<8x32xf32, #tpu.memory_space<vmem>>, vector<8x32xf32>
    %1 = arith.truncf %0 : vector<8x32xf32> to vector<8x32xbf16>
    %c0_1 = arith.constant 0 : index
    %c0_2 = arith.constant 0 : index
    %2 = vector.load %arg2[%c0_1, %c0_2] : memref<32x128xbf16, #tpu.memory_space<vmem>>, vector<32x128xbf16>
    %cst = arith.constant dense<0.000000e+00> : vector<8x128xf32>
    %3 = tpu.matmul %1, %2, %cst {dimension_numbers = #tpu.dot_dimension_numbers<[1], [0], [0], [1], [0, 0, 1, 1], [], []>} : vector<8x32xbf16>, vector<32x128xbf16>, vector<8x128xf32> -> vector<8x128xf32>
    %c0_3 = arith.constant 0 : index
    %c0_4 = arith.constant 0 : index
    %4 = vector.load %arg3[%c0_3, %c0_4] : memref<1x128xf32, #tpu.memory_space<vmem>>, vector<1x128xf32>
    %5 = vector.broadcast %4 : vector<1x128xf32> to vector<8x128xf32>
    %6 = arith.addf %3, %5 : vector<8x128xf32>
    %cst_5 = arith.constant 0.000000e+00 : f32
    %7 = vector.broadcast %cst_5 : f32 to vector<8x128xf32>
    %8 = arith.cmpf oge, %6, %7 : vector<8x128xf32>
    %cst_6 = arith.constant 0.00999999977 : f32
    %9 = vector.broadcast %cst_6 : f32 to vector<8x128xf32>
    %10 = arith.mulf %9, %6 : vector<8x128xf32>
    %11 = arith.select %8, %6, %10 : vector<8x128xi1>, vector<8x128xf32>
    %12 = arith.truncf %11 : vector<8x128xf32> to vector<8x128xbf16>
    %c0_7 = arith.constant 0 : index
    %c0_8 = arith.constant 0 : index
    %13 = vector.load %arg4[%c0_7, %c0_8] : memref<128x256xbf16, #tpu.memory_space<vmem>>, vector<128x256xbf16>
    %cst_9 = arith.constant dense<0.000000e+00> : vector<8x256xf32>
    %14 = tpu.matmul %12, %13, %cst_9 {dimension_numbers = #tpu.dot_dimension_numbers<[1], [0], [0], [1], [0, 0, 1, 1], [], []>} : vector<8x128xbf16>, vector<128x256xbf16>, vector<8x256xf32> -> vector<8x256xf32>
    %c0_10 = arith.constant 0 : index
    %c0_11 = arith.constant 0 : index
    %15 = vector.load %arg5[%c0_10, %c0_11] : memref<1x256xf32, #tpu.memory_space<vmem>>, vector<1x256xf32>
    %16 = vector.broadcast %15 : vector<1x256xf32> to vector<8x256xf32>
    %17 = arith.addf %14, %16 : vector<8x256xf32>
    %cst_12 = arith.constant 0.000000e+00 : f32
    %18 = vector.broadcast %cst_12 : f32 to vector<8x256xf32>
    %19 = arith.cmpf oge, %17, %18 : vector<8x256xf32>
    %cst_13 = arith.constant 0.00999999977 : f32
    %20 = vector.broadcast %cst_13 : f32 to vector<8x256xf32>
    %21 = arith.mulf %20, %17 : vector<8x256xf32>
    %22 = arith.select %19, %17, %21 : vector<8x256xi1>, vector<8x256xf32>
    %23 = vector.extract_strided_slice %22 {offsets = [0, 0], sizes = [8, 128], strides = [1, 1]} : vector<8x256xf32> to vector<8x128xf32>
    %24 = vector.extract_strided_slice %22 {offsets = [0, 128], sizes = [8, 128], strides = [1, 1]} : vector<8x256xf32> to vector<8x128xf32>
    %25 = arith.truncf %23 : vector<8x128xf32> to vector<8x128xbf16>
    %c0_14 = arith.constant 0 : index
    %c0_15 = arith.constant 0 : index
    %26 = vector.load %arg6[%c0_14, %c0_15] : memref<128x256xbf16, #tpu.memory_space<vmem>>, vector<128x256xbf16>
    %cst_16 = arith.constant dense<0.000000e+00> : vector<8x256xf32>
    %27 = tpu.matmul %25, %26, %cst_16 {dimension_numbers = #tpu.dot_dimension_numbers<[1], [0], [0], [1], [0, 0, 1, 1], [], []>} : vector<8x128xbf16>, vector<128x256xbf16>, vector<8x256xf32> -> vector<8x256xf32>
    %c0_17 = arith.constant 0 : index
    %c0_18 = arith.constant 0 : index
    %28 = vector.load %arg7[%c0_17, %c0_18] : memref<1x256xf32, #tpu.memory_space<vmem>>, vector<1x256xf32>
    %29 = vector.broadcast %28 : vector<1x256xf32> to vector<8x256xf32>
    %30 = arith.addf %27, %29 : vector<8x256xf32>
    %cst_19 = arith.constant 0.000000e+00 : f32
    %31 = vector.broadcast %cst_19 : f32 to vector<8x256xf32>
    %32 = arith.cmpf oge, %30, %31 : vector<8x256xf32>
    %cst_20 = arith.constant 0.00999999977 : f32
    %33 = vector.broadcast %cst_20 : f32 to vector<8x256xf32>
    %34 = arith.mulf %33, %30 : vector<8x256xf32>
    %35 = arith.select %32, %30, %34 : vector<8x256xi1>, vector<8x256xf32>
    %36 = arith.truncf %35 : vector<8x256xf32> to vector<8x256xbf16>
    %c0_21 = arith.constant 0 : index
    %c0_22 = arith.constant 0 : index
    %37 = vector.load %arg8[%c0_21, %c0_22] : memref<256x512xbf16, #tpu.memory_space<vmem>>, vector<256x512xbf16>
    %cst_23 = arith.constant dense<0.000000e+00> : vector<8x512xf32>
    %38 = tpu.matmul %36, %37, %cst_23 {dimension_numbers = #tpu.dot_dimension_numbers<[1], [0], [0], [1], [0, 0, 1, 1], [], []>} : vector<8x256xbf16>, vector<256x512xbf16>, vector<8x512xf32> -> vector<8x512xf32>
    %c0_24 = arith.constant 0 : index
    %c0_25 = arith.constant 0 : index
    %39 = vector.load %arg9[%c0_24, %c0_25] : memref<1x512xf32, #tpu.memory_space<vmem>>, vector<1x512xf32>
    %40 = vector.broadcast %39 : vector<1x512xf32> to vector<8x512xf32>
    %41 = arith.addf %38, %40 : vector<8x512xf32>
    %cst_26 = arith.constant 0.000000e+00 : f32
    %42 = vector.broadcast %cst_26 : f32 to vector<8x512xf32>
    %43 = arith.maximumf %41, %42 : vector<8x512xf32>
    %44 = arith.truncf %43 : vector<8x512xf32> to vector<8x512xbf16>
    %c0_27 = arith.constant 0 : index
    %c0_28 = arith.constant 0 : index
    %45 = vector.load %arg10[%c0_27, %c0_28] : memref<512x512xbf16, #tpu.memory_space<vmem>>, vector<512x512xbf16>
    %cst_29 = arith.constant dense<0.000000e+00> : vector<8x512xf32>
    %46 = tpu.matmul %44, %45, %cst_29 {dimension_numbers = #tpu.dot_dimension_numbers<[1], [0], [0], [1], [0, 0, 1, 1], [], []>} : vector<8x512xbf16>, vector<512x512xbf16>, vector<8x512xf32> -> vector<8x512xf32>
    %c0_30 = arith.constant 0 : index
    %c0_31 = arith.constant 0 : index
    %47 = vector.load %arg11[%c0_30, %c0_31] : memref<1x512xf32, #tpu.memory_space<vmem>>, vector<1x512xf32>
    %48 = vector.broadcast %47 : vector<1x512xf32> to vector<8x512xf32>
    %49 = arith.addf %46, %48 : vector<8x512xf32>
    %cst_32 = arith.constant 0.000000e+00 : f32
    %50 = vector.broadcast %cst_32 : f32 to vector<8x512xf32>
    %51 = arith.maximumf %49, %50 : vector<8x512xf32>
    %52 = arith.truncf %51 : vector<8x512xf32> to vector<8x512xbf16>
    %c0_33 = arith.constant 0 : index
    %c0_34 = arith.constant 0 : index
    %53 = vector.load %arg12[%c0_33, %c0_34] : memref<512x512xbf16, #tpu.memory_space<vmem>>, vector<512x512xbf16>
    %cst_35 = arith.constant dense<0.000000e+00> : vector<8x512xf32>
    %54 = tpu.matmul %52, %53, %cst_35 {dimension_numbers = #tpu.dot_dimension_numbers<[1], [0], [0], [1], [0, 0, 1, 1], [], []>} : vector<8x512xbf16>, vector<512x512xbf16>, vector<8x512xf32> -> vector<8x512xf32>
    %c0_36 = arith.constant 0 : index
    %c0_37 = arith.constant 0 : index
    %55 = vector.load %arg13[%c0_36, %c0_37] : memref<1x512xf32, #tpu.memory_space<vmem>>, vector<1x512xf32>
    %56 = vector.broadcast %55 : vector<1x512xf32> to vector<8x512xf32>
    %57 = arith.addf %54, %56 : vector<8x512xf32>
    %c0_38 = arith.constant 0 : index
    %c0_39 = arith.constant 0 : index
    %58 = vector.load %arg18[%c0_38, %c0_39] : memref<8x512xf32, #tpu.memory_space<vmem>>, vector<8x512xf32>
    tpu.vector_store %arg18[%c0_38, %c0_39], %57 {strides = array<i32>} : memref<8x512xf32, #tpu.memory_space<vmem>>, vector<8x512xf32>,
    %59 = arith.truncf %24 : vector<8x128xf32> to vector<8x128xbf16>
    %c0_40 = arith.constant 0 : index
    %c0_41 = arith.constant 0 : index
    %60 = vector.load %arg14[%c0_40, %c0_41] : memref<128x256xbf16, #tpu.memory_space<vmem>>, vector<128x256xbf16>
    %cst_42 = arith.constant dense<0.000000e+00> : vector<8x256xf32>
    %61 = tpu.matmul %59, %60, %cst_42 {dimension_numbers = #tpu.dot_dimension_numbers<[1], [0], [0], [1], [0, 0, 1, 1], [], []>} : vector<8x128xbf16>, vector<128x256xbf16>, vector<8x256xf32> -> vector<8x256xf32>
    %c0_43 = arith.constant 0 : index
    %c0_44 = arith.constant 0 : index
    %62 = vector.load %arg15[%c0_43, %c0_44] : memref<1x256xf32, #tpu.memory_space<vmem>>, vector<1x256xf32>
    %63 = vector.broadcast %62 : vector<1x256xf32> to vector<8x256xf32>
    %64 = arith.addf %61, %63 : vector<8x256xf32>
    %cst_45 = arith.constant 0.000000e+00 : f32
    %65 = vector.broadcast %cst_45 : f32 to vector<8x256xf32>
    %66 = arith.cmpf oge, %64, %65 : vector<8x256xf32>
    %cst_46 = arith.constant 0.00999999977 : f32
    %67 = vector.broadcast %cst_46 : f32 to vector<8x256xf32>
    %68 = arith.mulf %67, %64 : vector<8x256xf32>
    %69 = arith.select %66, %64, %68 : vector<8x256xi1>, vector<8x256xf32>
    %70 = arith.truncf %69 : vector<8x256xf32> to vector<8x256xbf16>
    %c0_47 = arith.constant 0 : index
    %c0_48 = arith.constant 0 : index
    %71 = vector.load %arg16[%c0_47, %c0_48] : memref<256x512xbf16, #tpu.memory_space<vmem>>, vector<256x512xbf16>
    %cst_49 = arith.constant dense<0.000000e+00> : vector<8x512xf32>
    %72 = tpu.matmul %70, %71, %cst_49 {dimension_numbers = #tpu.dot_dimension_numbers<[1], [0], [0], [1], [0, 0, 1, 1], [], []>} : vector<8x256xbf16>, vector<256x512xbf16>, vector<8x512xf32> -> vector<8x512xf32>
    %c0_50 = arith.constant 0 : index
    %c0_51 = arith.constant 0 : index
    %73 = vector.load %arg17[%c0_50, %c0_51] : memref<1x512xf32, #tpu.memory_space<vmem>>, vector<1x512xf32>
    %74 = vector.broadcast %73 : vector<1x512xf32> to vector<8x512xf32>
    %75 = arith.addf %72, %74 : vector<8x512xf32>
    %c0_52 = arith.constant 0 : index
    %c0_53 = arith.constant 0 : index
    %76 = vector.load %arg19[%c0_52, %c0_53] : memref<8x512xf32, #tpu.memory_space<vmem>>, vector<8x512xf32>
    tpu.vector_store %arg19[%c0_52, %c0_53], %75 {strides = array<i32>} : memref<8x512xf32, #tpu.memory_space<vmem>>, vector<8x512xf32>,
    return
  }
  func.func @transform_0(%arg0: i32) -> (i32, i32) {
    %c0_i32 = arith.constant 0 : i32
    %c0_i32_0 = arith.constant 0 : i32
    return %arg0, %c0_i32 : i32, i32
  }
  func.func @transform_1(%arg0: i32) -> (i32, i32) {
    %c0_i32 = arith.constant 0 : i32
    %c0_i32_0 = arith.constant 0 : i32
    %c0_i32_1 = arith.constant 0 : i32
    return %c0_i32, %c0_i32_0 : i32, i32
  }
  func.func @transform_2(%arg0: i32) -> (i32, i32) {
    %c0_i32 = arith.constant 0 : i32
    %c0_i32_0 = arith.constant 0 : i32
    %c0_i32_1 = arith.constant 0 : i32
    return %c0_i32, %c0_i32_0 : i32, i32
  }
  func.func @transform_3(%arg0: i32) -> (i32, i32) {
    %c0_i32 = arith.constant 0 : i32
    %c0_i32_0 = arith.constant 0 : i32
    %c0_i32_1 = arith.constant 0 : i32
    return %c0_i32, %c0_i32_0 : i32, i32
  }
  func.func @transform_4(%arg0: i32) -> (i32, i32) {
    %c0_i32 = arith.constant 0 : i32
    %c0_i32_0 = arith.constant 0 : i32
    %c0_i32_1 = arith.constant 0 : i32
    return %c0_i32, %c0_i32_0 : i32, i32
  }
  func.func @transform_5(%arg0: i32) -> (i32, i32) {
    %c0_i32 = arith.constant 0 : i32
    %c0_i32_0 = arith.constant 0 : i32
    %c0_i32_1 = arith.constant 0 : i32
    return %c0_i32, %c0_i32_0 : i32, i32
  }
  func.func @transform_6(%arg0: i32) -> (i32, i32) {
    %c0_i32 = arith.constant 0 : i32
    %c0_i32_0 = arith.constant 0 : i32
    %c0_i32_1 = arith.constant 0 : i32
    return %c0_i32, %c0_i32_0 : i32, i32
  }
  func.func @transform_7(%arg0: i32) -> (i32, i32) {
    %c0_i32 = arith.constant 0 : i32
    %c0_i32_0 = arith.constant 0 : i32
    %c0_i32_1 = arith.constant 0 : i32
    return %c0_i32, %c0_i32_0 : i32, i32
  }
  func.func @transform_8(%arg0: i32) -> (i32, i32) {
    %c0_i32 = arith.constant 0 : i32
    %c0_i32_0 = arith.constant 0 : i32
    %c0_i32_1 = arith.constant 0 : i32
    return %c0_i32, %c0_i32_0 : i32, i32
  }
  func.func @transform_9(%arg0: i32) -> (i32, i32) {
    %c0_i32 = arith.constant 0 : i32
    %c0_i32_0 = arith.constant 0 : i32
    %c0_i32_1 = arith.constant 0 : i32
    return %c0_i32, %c0_i32_0 : i32, i32
  }
  func.func @transform_10(%arg0: i32) -> (i32, i32) {
    %c0_i32 = arith.constant 0 : i32
    %c0_i32_0 = arith.constant 0 : i32
    %c0_i32_1 = arith.constant 0 : i32
    return %c0_i32, %c0_i32_0 : i32, i32
  }
  func.func @transform_11(%arg0: i32) -> (i32, i32) {
    %c0_i32 = arith.constant 0 : i32
    %c0_i32_0 = arith.constant 0 : i32
    %c0_i32_1 = arith.constant 0 : i32
    return %c0_i32, %c0_i32_0 : i32, i32
  }
  func.func @transform_12(%arg0: i32) -> (i32, i32) {
    %c0_i32 = arith.constant 0 : i32
    %c0_i32_0 = arith.constant 0 : i32
    %c0_i32_1 = arith.constant 0 : i32
    return %c0_i32, %c0_i32_0 : i32, i32
  }
  func.func @transform_13(%arg0: i32) -> (i32, i32) {
    %c0_i32 = arith.constant 0 : i32
    %c0_i32_0 = arith.constant 0 : i32
    %c0_i32_1 = arith.constant 0 : i32
    return %c0_i32, %c0_i32_0 : i32, i32
  }
  func.func @transform_14(%arg0: i32) -> (i32, i32) {
    %c0_i32 = arith.constant 0 : i32
    %c0_i32_0 = arith.constant 0 : i32
    %c0_i32_1 = arith.constant 0 : i32
    return %c0_i32, %c0_i32_0 : i32, i32
  }
  func.func @transform_15(%arg0: i32) -> (i32, i32) {
    %c0_i32 = arith.constant 0 : i32
    %c0_i32_0 = arith.constant 0 : i32
    %c0_i32_1 = arith.constant 0 : i32
    return %c0_i32, %c0_i32_0 : i32, i32
  }
  func.func @transform_16(%arg0: i32) -> (i32, i32) {
    %c0_i32 = arith.constant 0 : i32
    %c0_i32_0 = arith.constant 0 : i32
    %c0_i32_1 = arith.constant 0 : i32
    return %c0_i32, %c0_i32_0 : i32, i32
  }
  func.func @transform_17(%arg0: i32) -> (i32, i32) {
    %c0_i32 = arith.constant 0 : i32
    %c0_i32_0 = arith.constant 0 : i32
    return %arg0, %c0_i32 : i32, i32
  }
  func.func @transform_18(%arg0: i32) -> (i32, i32) {
    %c0_i32 = arith.constant 0 : i32
    %c0_i32_0 = arith.constant 0 : i32
    return %arg0, %c0_i32 : i32, i32
  }
}

</mosaic_0001>

<llo_original>
// kernel: tpu_custom_call.1
$region0: #{tpu_custom_call.1}
  #allocation0 [shape = 'u32[]', space=smem, size = 0x4, offset = 0x4, fixed_abs, tag = 'smem constant byte address 0x4 - core index']
  #allocation1 [shape = 'u32[144,128]{1,0:T(1,128)}', space=vmem, size = 0x12000, scoped, tag = 'internal scratch']
  %s0 = inlined_call_operand.hbm [shape: f32[8,32], index: 0, kind: input, shape index: {}]
  %s1 = inlined_call_operand.hbm [shape: bf16[32,128], index: 1, kind: input, shape index: {}]
  %s2 = inlined_call_operand.hbm [shape: f32[1,128], index: 2, kind: input, shape index: {}]
  %s3 = inlined_call_operand.hbm [shape: bf16[128,256], index: 3, kind: input, shape index: {}]
  %s4 = inlined_call_operand.vmem [shape: f32[1,256], index: 4, kind: input, shape index: {}]
  %s5 = inlined_call_operand.hbm [shape: bf16[128,256], index: 5, kind: input, shape index: {}]
  %s6 = inlined_call_operand.vmem [shape: f32[1,256], index: 6, kind: input, shape index: {}]
  %s7 = inlined_call_operand.hbm [shape: bf16[256,512], index: 7, kind: input, shape index: {}]
  %s8 = inlined_call_operand.vmem [shape: f32[1,512], index: 8, kind: input, shape index: {}]
  %s9 = inlined_call_operand.hbm [shape: bf16[512,512], index: 9, kind: input, shape index: {}]
  %s10 = inlined_call_operand.vmem [shape: f32[1,512], index: 10, kind: input, shape index: {}]
  %s11 = inlined_call_operand.hbm [shape: bf16[512,512], index: 11, kind: input, shape index: {}]
  %s12 = inlined_call_operand.vmem [shape: f32[1,512], index: 12, kind: input, shape index: {}]
  %s13 = inlined_call_operand.hbm [shape: bf16[128,256], index: 13, kind: input, shape index: {}]
  %s14 = inlined_call_operand.vmem [shape: f32[1,256], index: 14, kind: input, shape index: {}]
  %s15 = inlined_call_operand.hbm [shape: bf16[256,512], index: 15, kind: input, shape index: {}]
  %s16 = inlined_call_operand.vmem [shape: f32[1,512], index: 16, kind: input, shape index: {}]
  %s17 = inlined_call_operand.hbm [shape: f32[8,512], index: 17, kind: output, shape index: {0}]
  %s18 = inlined_call_operand.hbm [shape: f32[8,512], index: 18, kind: output, shape index: {1}]
  %19 = xla_tuple %s17, %s18
  %s20 = sld [smem:[#allocation0]]
  $region126: #{tpu_custom_call.1} parent=0
    _
  %s22 = ssub.s32 1, %s20
  %s23 = scalar_select 0, %s22, %s20
  $region1: #{tpu_custom_call.1} parent=0
    #allocation2 [shape = 'u8[4096]{0}', space=vmem, size = 0x1000, scoped, tag = 'input window, operand 0, single buffered']
    #allocation3 [shape = 's32[1]{0}', space=sflag, size = 0x4, scoped, tag = 'scoped memory for tpu_custom_call.1']
    #allocation4 [shape = 's32[1]{0}', space=sflag, size = 0x4, scoped, tag = 'scoped memory for tpu_custom_call.1']
    #allocation5 [shape = 'u8[8192]{0}', space=vmem, size = 0x2000, scoped, tag = 'input window, operand 1, single buffered']
    #allocation6 [shape = 's32[1]{0}', space=sflag, size = 0x4, scoped, tag = 'scoped memory for tpu_custom_call.1']
    #allocation7 [shape = 'u8[512]{0}', space=vmem, size = 0x400, scoped, tag = 'input window, operand 2, single buffered']
    #allocation8 [shape = 'u8[65536]{0}', space=vmem, size = 0x10000, scoped, tag = 'input window, operand 3, single buffered']
    #allocation9 [shape = 's32[1]{0}', space=sflag, size = 0x4, scoped, tag = 'scoped memory for tpu_custom_call.1']
    #allocation10 [shape = 'u8[65536]{0}', space=vmem, size = 0x10000, scoped, tag = 'input window, operand 5, single buffered']
    #allocation11 [shape = 'u8[262144]{0}', space=vmem, size = 0x40000, scoped, tag = 'input window, operand 7, single buffered']
    #allocation12 [shape = 's32[1]{0}', space=sflag, size = 0x4, scoped, tag = 'scoped memory for tpu_custom_call.1']
    #allocation13 [shape = 'u8[524288]{0}', space=vmem, size = 0x80000, scoped, tag = 'input window, operand 9, single buffered']
    #allocation14 [shape = 'u8[524288]{0}', space=vmem, size = 0x80000, scoped, tag = 'input window, operand 11, single buffered']
    #allocation15 [shape = 's32[1]{0}', space=sflag, size = 0x4, scoped, tag = 'scoped memory for tpu_custom_call.1']
    #allocation16 [shape = 'u8[65536]{0}', space=vmem, size = 0x10000, scoped, tag = 'input window, operand 13, single buffered']
    #allocation17 [shape = 'u8[262144]{0}', space=vmem, size = 0x40000, scoped, tag = 'input window, operand 15, single buffered']
    #allocation18 [shape = 's32[1]{0}', space=sflag, size = 0x4, scoped, tag = 'scoped memory for tpu_custom_call.1']
    #allocation19 [shape = 'u8[16384]{0}', space=vmem, size = 0x4000, scoped, tag = 'output window, operand 0, single buffered']
    #allocation20 [shape = 'u8[16384]{0}', space=vmem, size = 0x4000, scoped, tag = 'output window, operand 1, single buffered']
    #allocation21 [shape = 's32[1]{0}', space=sflag, size = 0x4, scoped, tag = 'scoped memory for tpu_custom_call.1']
    %24 = vsyncpa [#allocation3], 0
    %25 = vsyncpa [#allocation6], 0
    %26 = vsyncpa [#allocation9], 0
    %27 = vsyncpa [#allocation12], 0
    %28 = vsyncpa [#allocation15], 0
    %29 = vsyncpa [#allocation18], 0
    %30 = vsyncpa [#allocation4], 0
    %31 = vsyncpa [#allocation21], 0
    // Predicated region
    $region2: #{tpu_custom_call.1} parent=1 // pred_check
      _
    $region3: #{tpu_custom_call.1} parent=1 // pred_check_branch
      %33 = sbr.rel (0) target = $region5
    $region4: #{tpu_custom_call.1} parent=1 // pred_region
      %s35 = ssub.s32 128, 128
      %36 = vsyncadd [#allocation3], %s35
      %s38 = sshll.u32 [#allocation2], 4
      %s39 = int_to_ptr.vmem [resolvable:$true] %s38
      %41 = dma.hbm_to_vmem [thread:$0]  %s0, 128, %s39, [#allocation3]
    $region5: #{tpu_custom_call.1} parent=1 // pred_fallthru
      _
    // Predicated region
    $region6: #{tpu_custom_call.1} parent=1 // pred_check
      _
    $region7: #{tpu_custom_call.1} parent=1 // pred_check_branch
      %43 = sbr.rel (0) target = $region9
    $region8: #{tpu_custom_call.1} parent=1 // pred_region
      %s45 = ssub.s32 256, 256
      %46 = vsyncadd [#allocation6], %s45
      %s47 = sshll.u32 [#allocation5], 4
      %s48 = int_to_ptr.vmem [resolvable:$true] %s47
      %53 = dma.hbm_to_vmem [thread:$0]  %s1, 256, %s48, [#allocation6], 64, 64, 4
    $region9: #{tpu_custom_call.1} parent=1 // pred_fallthru
      _
    // Predicated region
    $region10: #{tpu_custom_call.1} parent=1 // pred_check
      _
    $region11: #{tpu_custom_call.1} parent=1 // pred_check_branch
      %55 = sbr.rel (0) target = $region13
    $region12: #{tpu_custom_call.1} parent=1 // pred_region
      %s57 = ssub.s32 16, 16
      %58 = vsyncadd [#allocation6], %s57
      %s60 = sshll.u32 [#allocation7], 4
      %s61 = int_to_ptr.vmem [resolvable:$true] %s60
      %63 = dma.hbm_to_vmem [thread:$0]  %s2, 16, %s61, [#allocation6]
    $region13: #{tpu_custom_call.1} parent=1 // pred_fallthru
      _
    // Predicated region
    $region14: #{tpu_custom_call.1} parent=1 // pred_check
      _
    $region15: #{tpu_custom_call.1} parent=1 // pred_check_branch
      %65 = sbr.rel (0) target = $region17
    $region16: #{tpu_custom_call.1} parent=1 // pred_region
      %s67 = ssub.s32 2048, 2048
      %68 = vsyncadd [#allocation9], %s67
      %s69 = sshll.u32 [#allocation8], 4
      %s70 = int_to_ptr.vmem [resolvable:$true] %s69
      %75 = dma.hbm_to_vmem [thread:$0]  %s3, 2048, %s70, [#allocation9], 128, 128, 8
    $region17: #{tpu_custom_call.1} parent=1 // pred_fallthru
      _
    // Predicated region
    $region18: #{tpu_custom_call.1} parent=1 // pred_check
      _
    $region19: #{tpu_custom_call.1} parent=1 // pred_check_branch
      %77 = sbr.rel (0) target = $region21
    $region20: #{tpu_custom_call.1} parent=1 // pred_region
      _
    $region21: #{tpu_custom_call.1} parent=1 // pred_fallthru
      _
    // Predicated region
    $region22: #{tpu_custom_call.1} parent=1 // pred_check
      _
    $region23: #{tpu_custom_call.1} parent=1 // pred_check_branch
      %79 = sbr.rel (0) target = $region25
    $region24: #{tpu_custom_call.1} parent=1 // pred_region
      %s81 = ssub.s32 2048, 2048
      %82 = vsyncadd [#allocation9], %s81
      %s83 = sshll.u32 [#allocation10], 4
      %s84 = int_to_ptr.vmem [resolvable:$true] %s83
      %89 = dma.hbm_to_vmem [thread:$0]  %s5, 2048, %s84, [#allocation9], 128, 128, 8
    $region25: #{tpu_custom_call.1} parent=1 // pred_fallthru
      _
    // Predicated region
    $region26: #{tpu_custom_call.1} parent=1 // pred_check
      _
    $region27: #{tpu_custom_call.1} parent=1 // pred_check_branch
      %91 = sbr.rel (0) target = $region29
    $region28: #{tpu_custom_call.1} parent=1 // pred_region
      _
    $region29: #{tpu_custom_call.1} parent=1 // pred_fallthru
      _
    // Predicated region
    $region30: #{tpu_custom_call.1} parent=1 // pred_check
      _
    $region31: #{tpu_custom_call.1} parent=1 // pred_check_branch
      %93 = sbr.rel (0) target = $region33
    $region32: #{tpu_custom_call.1} parent=1 // pred_region
      %s95 = ssub.s32 8192, 8192
      %96 = vsyncadd [#allocation12], %s95
      %s97 = sshll.u32 [#allocation11], 4
      %s98 = int_to_ptr.vmem [resolvable:$true] %s97
      %103 = dma.hbm_to_vmem [thread:$0]  %s7, 8192, %s98, [#allocation12], 256, 256, 16
    $region33: #{tpu_custom_call.1} parent=1 // pred_fallthru
      _
    // Predicated region
    $region34: #{tpu_custom_call.1} parent=1 // pred_check
      _
    $region35: #{tpu_custom_call.1} parent=1 // pred_check_branch
      %105 = sbr.rel (0) target = $region37
    $region36: #{tpu_custom_call.1} parent=1 // pred_region
      _
    $region37: #{tpu_custom_call.1} parent=1 // pred_fallthru
      _
    // Predicated region
    $region38: #{tpu_custom_call.1} parent=1 // pred_check
      _
    $region39: #{tpu_custom_call.1} parent=1 // pred_check_branch
      %107 = sbr.rel (0) target = $region41
    $region40: #{tpu_custom_call.1} parent=1 // pred_region
      %s109 = ssub.s32 16384, 16384
      %110 = vsyncadd [#allocation12], %s109
      %s111 = sshll.u32 [#allocation13], 4
      %s112 = int_to_ptr.vmem [resolvable:$true] %s111
      %117 = dma.hbm_to_vmem [thread:$0]  %s9, 16384, %s112, [#allocation12], 256, 256, 16
    $region41: #{tpu_custom_call.1} parent=1 // pred_fallthru
      _
    // Predicated region
    $region42: #{tpu_custom_call.1} parent=1 // pred_check
      _
    $region43: #{tpu_custom_call.1} parent=1 // pred_check_branch
      %119 = sbr.rel (0) target = $region45
    $region44: #{tpu_custom_call.1} parent=1 // pred_region
      _
    $region45: #{tpu_custom_call.1} parent=1 // pred_fallthru
      _
    // Predicated region
    $region46: #{tpu_custom_call.1} parent=1 // pred_check
      _
    $region47: #{tpu_custom_call.1} parent=1 // pred_check_branch
      %121 = sbr.rel (0) target = $region49
    $region48: #{tpu_custom_call.1} parent=1 // pred_region
      %s123 = ssub.s32 16384, 16384
      %124 = vsyncadd [#allocation15], %s123
      %s125 = sshll.u32 [#allocation14], 4
      %s126 = int_to_ptr.vmem [resolvable:$true] %s125
      %131 = dma.hbm_to_vmem [thread:$0]  %s11, 16384, %s126, [#allocation15], 256, 256, 16
    $region49: #{tpu_custom_call.1} parent=1 // pred_fallthru
      _
    // Predicated region
    $region50: #{tpu_custom_call.1} parent=1 // pred_check
      _
    $region51: #{tpu_custom_call.1} parent=1 // pred_check_branch
      %133 = sbr.rel (0) target = $region53
    $region52: #{tpu_custom_call.1} parent=1 // pred_region
      _
    $region53: #{tpu_custom_call.1} parent=1 // pred_fallthru
      _
    // Predicated region
    $region54: #{tpu_custom_call.1} parent=1 // pred_check
      _
    $region55: #{tpu_custom_call.1} parent=1 // pred_check_branch
      %135 = sbr.rel (0) target = $region57
    $region56: #{tpu_custom_call.1} parent=1 // pred_region
      %s137 = ssub.s32 2048, 2048
      %138 = vsyncadd [#allocation15], %s137
      %s139 = sshll.u32 [#allocation16], 4
      %s140 = int_to_ptr.vmem [resolvable:$true] %s139
      %145 = dma.hbm_to_vmem [thread:$0]  %s13, 2048, %s140, [#allocation15], 128, 128, 8
    $region57: #{tpu_custom_call.1} parent=1 // pred_fallthru
      _
    // Predicated region
    $region58: #{tpu_custom_call.1} parent=1 // pred_check
      _
    $region59: #{tpu_custom_call.1} parent=1 // pred_check_branch
      %147 = sbr.rel (0) target = $region61
    $region60: #{tpu_custom_call.1} parent=1 // pred_region
      _
    $region61: #{tpu_custom_call.1} parent=1 // pred_fallthru
      _
    // Predicated region
    $region62: #{tpu_custom_call.1} parent=1 // pred_check
      _
    $region63: #{tpu_custom_call.1} parent=1 // pred_check_branch
      %149 = sbr.rel (0) target = $region65
    $region64: #{tpu_custom_call.1} parent=1 // pred_region
      %s151 = ssub.s32 8192, 8192
      %152 = vsyncadd [#allocation18], %s151
      %s153 = sshll.u32 [#allocation17], 4
      %s154 = int_to_ptr.vmem [resolvable:$true] %s153
      %159 = dma.hbm_to_vmem [thread:$0]  %s15, 8192, %s154, [#allocation18], 256, 256, 16
    $region65: #{tpu_custom_call.1} parent=1 // pred_fallthru
      _
    // Predicated region
    $region66: #{tpu_custom_call.1} parent=1 // pred_check
      _
    $region67: #{tpu_custom_call.1} parent=1 // pred_check_branch
      %161 = sbr.rel (0) target = $region69
    $region68: #{tpu_custom_call.1} parent=1 // pred_region
      _
    $region69: #{tpu_custom_call.1} parent=1 // pred_fallthru
      _
    // Predicated region
    $region70: #{tpu_custom_call.1} parent=1 // pred_check
      _
    $region71: #{tpu_custom_call.1} parent=1 // pred_check_branch
      %163 = sbr.rel (0) target = $region73
    $region72: #{tpu_custom_call.1} parent=1 // pred_region
      %164 = dma.done [#allocation3], 128
    $region73: #{tpu_custom_call.1} parent=1 // pred_fallthru
      _
    // Predicated region
    $region74: #{tpu_custom_call.1} parent=1 // pred_check
      _
    $region75: #{tpu_custom_call.1} parent=1 // pred_check_branch
      %166 = sbr.rel (0) target = $region77
    $region76: #{tpu_custom_call.1} parent=1 // pred_region
      %167 = dma.done [#allocation6], 256
    $region77: #{tpu_custom_call.1} parent=1 // pred_fallthru
      _
    // Predicated region
    $region78: #{tpu_custom_call.1} parent=1 // pred_check
      _
    $region79: #{tpu_custom_call.1} parent=1 // pred_check_branch
      %169 = sbr.rel (0) target = $region81
    $region80: #{tpu_custom_call.1} parent=1 // pred_region
      %170 = dma.done [#allocation6], 16
    $region81: #{tpu_custom_call.1} parent=1 // pred_fallthru
      _
    // Predicated region
    $region82: #{tpu_custom_call.1} parent=1 // pred_check
      _
    $region83: #{tpu_custom_call.1} parent=1 // pred_check_branch
      %172 = sbr.rel (0) target = $region85
    $region84: #{tpu_custom_call.1} parent=1 // pred_region
      %173 = dma.done [#allocation9], 2048
    $region85: #{tpu_custom_call.1} parent=1 // pred_fallthru
      _
    // Predicated region
    $region86: #{tpu_custom_call.1} parent=1 // pred_check
      _
    $region87: #{tpu_custom_call.1} parent=1 // pred_check_branch
      %175 = sbr.rel (0) target = $region89
    $region88: #{tpu_custom_call.1} parent=1 // pred_region
      %176 = dma.done [#allocation9], 2048
    $region89: #{tpu_custom_call.1} parent=1 // pred_fallthru
      _
    // Predicated region
    $region90: #{tpu_custom_call.1} parent=1 // pred_check
      _
    $region91: #{tpu_custom_call.1} parent=1 // pred_check_branch
      %178 = sbr.rel (0) target = $region93
    $region92: #{tpu_custom_call.1} parent=1 // pred_region
      %179 = dma.done [#allocation12], 8192
    $region93: #{tpu_custom_call.1} parent=1 // pred_fallthru
      _
    // Predicated region
    $region94: #{tpu_custom_call.1} parent=1 // pred_check
      _
    $region95: #{tpu_custom_call.1} parent=1 // pred_check_branch
      %181 = sbr.rel (0) target = $region97
    $region96: #{tpu_custom_call.1} parent=1 // pred_region
      %182 = dma.done [#allocation12], 16384
    $region97: #{tpu_custom_call.1} parent=1 // pred_fallthru
      _
    // Predicated region
    $region98: #{tpu_custom_call.1} parent=1 // pred_check
      _
    $region99: #{tpu_custom_call.1} parent=1 // pred_check_branch
      %184 = sbr.rel (0) target = $region101
    $region100: #{tpu_custom_call.1} parent=1 // pred_region
      %185 = dma.done [#allocation15], 16384
    $region101: #{tpu_custom_call.1} parent=1 // pred_fallthru
      _
    // Predicated region
    $region102: #{tpu_custom_call.1} parent=1 // pred_check
      _
    $region103: #{tpu_custom_call.1} parent=1 // pred_check_branch
      %187 = sbr.rel (0) target = $region105
    $region104: #{tpu_custom_call.1} parent=1 // pred_region
      %188 = dma.done [#allocation15], 2048
    $region105: #{tpu_custom_call.1} parent=1 // pred_fallthru
      _
    // Predicated region
    $region106: #{tpu_custom_call.1} parent=1 // pred_check
      _
    $region107: #{tpu_custom_call.1} parent=1 // pred_check_branch
      %190 = sbr.rel (0) target = $region109
    $region108: #{tpu_custom_call.1} parent=1 // pred_region
      %191 = dma.done [#allocation18], 8192
    $region109: #{tpu_custom_call.1} parent=1 // pred_fallthru
      _
    %v193 = vld [vmem:[#allocation2] sm:$0xff]
    %v194 = vpack.c.bf16 %v193, %v193
    %v195 = vld [vmem:[#allocation5] sm:$0xf]
    %v196 = vld [vmem:[#allocation5 + $0x4] sm:$0xf]
    %v197 = vld [vmem:[#allocation5 + $0x8] sm:$0xf]
    %v198 = vld [vmem:[#allocation5 + $0xc] sm:$0xf]
    %v199 = vld [vmem:[#allocation7] sm:$0x1]
    %v201 = vlaneseq
    %v202 = vshrl.u32 %v201, 7
    %v203 = vsub.s32 0, %v202
    %v204 = vrot.slane %v199, %v203
    %v210 = vunpack.c.l.b16 %v195
    %v211 = vunpack.c.l.b16 %v196
    %v212 = vunpack.c.l.b16 %v197
    %v213 = vunpack.c.l.b16 %v198
    %v214 = vpack.c.b16 %v211, %v210
    %v215 = vpack.c.b16 %v213, %v212
    %vm218 = vcmask 261120
    %v220 = vsel %vm218, %v194, 0
    %222 = vmatprep.subr.bf16.mxu0 0
    %223 = vmatpush1.bf16.msra.mxu0 %v214
    %224 = vmatprep.subr.bf16.mxu0 0
    %225 = vmatpush1.bf16.msra.mxu0 %v215
    %226 = vmatprep.subr.bf16.mxu0 0
    %227 = vmatpush1.bf16.msra.mxu0 0
    %228 = vmatprep.subr.bf16.mxu0 0
    %229 = vmatpush1.bf16.msra.mxu0 0
    %230 = vmatprep.subr.bf16.mxu0 0
    %231 = vmatpush1.bf16.msra.mxu0 0
    %232 = vmatprep.subr.bf16.mxu0 0
    %233 = vmatpush1.bf16.msra.mxu0 0
    %234 = vmatprep.subr.bf16.mxu0 0
    %235 = vmatpush1.bf16.msra.mxu0 0
    %236 = vmatprep.subr.bf16.mxu0 0
    %237 = vmatpush1.bf16.msra.mxu0 0
    %238 = vmatprep.subr.bf16.mxu0 0
    %239 = vmatpush1.bf16.msra.mxu0 0
    %240 = vmatprep.subr.bf16.mxu0 0
    %241 = vmatpush1.bf16.msra.mxu0 0
    %242 = vmatprep.subr.bf16.mxu0 0
    %243 = vmatpush1.bf16.msra.mxu0 0
    %244 = vmatprep.subr.bf16.mxu0 0
    %245 = vmatpush1.bf16.msra.mxu0 0
    %246 = vmatprep.subr.bf16.mxu0 0
    %247 = vmatpush1.bf16.msra.mxu0 0
    %248 = vmatprep.subr.bf16.mxu0 0
    %249 = vmatpush1.bf16.msra.mxu0 0
    %250 = vmatprep.subr.bf16.mxu0 0
    %251 = vmatpush1.bf16.msra.mxu0 0
    %252 = vmatprep.subr.bf16.mxu0 0
    %253 = vmatpush1.bf16.msra.mxu0 0
    %254 = vmatprep.mubr.bf16.mxu0 0
    %255 = vmatmul.mubr.bf16.gmra.mrb[0].mxu0 %v220
    %v256 = vpop.f32.mrb[0].mxu0
    %v257 = vadd.f32 %v204, %v256
    %v258 = vpop.f32.mrb[0].mxu0
    %v259 = vpop.f32.mrb[0].mxu0
    %v260 = vpop.f32.mrb[0].mxu0
    %261 = vdwg.mxu0
    %vm262 = vcmp.ge.f32.partialorder %v257, 0.0
    %v263 = vmul.f32 %v257, 0.01
    %v264 = vsel %vm262, %v257, %v263
    %v265 = vpack.c.bf16 %v264, %v264
    %v266 = vld [vmem:[#allocation8] sm:$0xff]
    %v267 = vld [vmem:[#allocation8 + $0x8] sm:$0xff]
    %v268 = vld [vmem:[#allocation8 + $0x10] sm:$0xff]
    %v269 = vld [vmem:[#allocation8 + $0x18] sm:$0xff]
    %v270 = vld [vmem:[#allocation8 + $0x20] sm:$0xff]
    %v271 = vld [vmem:[#allocation8 + $0x28] sm:$0xff]
    %v272 = vld [vmem:[#allocation8 + $0x30] sm:$0xff]
    %v273 = vld [vmem:[#allocation8 + $0x38] sm:$0xff]
    %v274 = vld [vmem:[#allocation8 + $0x40] sm:$0xff]
    %v275 = vld [vmem:[#allocation8 + $0x48] sm:$0xff]
    %v276 = vld [vmem:[#allocation8 + $0x50] sm:$0xff]
    %v277 = vld [vmem:[#allocation8 + $0x58] sm:$0xff]
    %v278 = vld [vmem:[#allocation8 + $0x60] sm:$0xff]
    %v279 = vld [vmem:[#allocation8 + $0x68] sm:$0xff]
    %v280 = vld [vmem:[#allocation8 + $0x70] sm:$0xff]
    %v281 = vld [vmem:[#allocation8 + $0x78] sm:$0xff]
    %v282 = vld [vmem:[%s4] sm:$0x3]
    %v284 = vlaneseq
    %v285 = vshrl.u32 %v284, 7
    %v286 = vsub.s32 0, %v285
    %v287 = vrot.slane %v282, %v286
    %v288 = vlaneseq
    %v289 = vshrl.u32 %v288, 7
    %v290 = vsub.s32 1, %v289
    %v291 = vrot.slane %v282, %v290
    %v310 = vunpack.c.l.b16 %v266
    %v311 = vunpack.c.h.b16 %v266
    %v312 = vunpack.c.l.b16 %v267
    %v313 = vunpack.c.h.b16 %v267
    %v314 = vunpack.c.l.b16 %v268
    %v315 = vunpack.c.h.b16 %v268
    %v316 = vunpack.c.l.b16 %v269
    %v317 = vunpack.c.h.b16 %v269
    %v318 = vunpack.c.l.b16 %v270
    %v319 = vunpack.c.h.b16 %v270
    %v320 = vunpack.c.l.b16 %v271
    %v321 = vunpack.c.h.b16 %v271
    %v322 = vunpack.c.l.b16 %v272
    %v323 = vunpack.c.h.b16 %v272
    %v324 = vunpack.c.l.b16 %v273
    %v325 = vunpack.c.h.b16 %v273
    %v326 = vunpack.c.l.b16 %v274
    %v327 = vunpack.c.h.b16 %v274
    %v328 = vunpack.c.l.b16 %v275
    %v329 = vunpack.c.h.b16 %v275
    %v330 = vunpack.c.l.b16 %v276
    %v331 = vunpack.c.h.b16 %v276
    %v332 = vunpack.c.l.b16 %v277
    %v333 = vunpack.c.h.b16 %v277
    %v334 = vunpack.c.l.b16 %v278
    %v335 = vunpack.c.h.b16 %v278
    %v336 = vunpack.c.l.b16 %v279
    %v337 = vunpack.c.h.b16 %v279
    %v338 = vunpack.c.l.b16 %v280
    %v339 = vunpack.c.h.b16 %v280
    %v340 = vunpack.c.l.b16 %v281
    %v341 = vunpack.c.h.b16 %v281
    %v342 = vpack.c.b16 %v312, %v310
    %v343 = vpack.c.b16 %v313, %v311
    %v344 = vpack.c.b16 %v316, %v314
    %v345 = vpack.c.b16 %v317, %v315
    %v346 = vpack.c.b16 %v320, %v318
    %v347 = vpack.c.b16 %v321, %v319
    %v348 = vpack.c.b16 %v324, %v322
    %v349 = vpack.c.b16 %v325, %v323
    %v350 = vpack.c.b16 %v328, %v326
    %v351 = vpack.c.b16 %v329, %v327
    %v352 = vpack.c.b16 %v332, %v330
    %v353 = vpack.c.b16 %v333, %v331
    %v354 = vpack.c.b16 %v336, %v334
    %v355 = vpack.c.b16 %v337, %v335
    %v356 = vpack.c.b16 %v340, %v338
    %v357 = vpack.c.b16 %v341, %v339
    %374 = vmatprep.subr.bf16.mxu0 %v343
    %375 = vmatpush1.bf16.msra.mxu0 %v342
    %376 = vmatprep.subr.bf16.mxu0 %v345
    %377 = vmatpush1.bf16.msra.mxu0 %v344
    %378 = vmatprep.subr.bf16.mxu0 %v347
    %379 = vmatpush1.bf16.msra.mxu0 %v346
    %380 = vmatprep.subr.bf16.mxu0 %v349
    %381 = vmatpush1.bf16.msra.mxu0 %v348
    %382 = vmatprep.subr.bf16.mxu0 %v351
    %383 = vmatpush1.bf16.msra.mxu0 %v350
    %384 = vmatprep.subr.bf16.mxu0 %v353
    %385 = vmatpush1.bf16.msra.mxu0 %v352
    %386 = vmatprep.subr.bf16.mxu0 %v355
    %387 = vmatpush1.bf16.msra.mxu0 %v354
    %388 = vmatprep.subr.bf16.mxu0 %v357
    %389 = vmatpush1.bf16.msra.mxu0 %v356
    %390 = vmatprep.subr.bf16.mxu0 0
    %391 = vmatpush1.bf16.msra.mxu0 0
    %392 = vmatprep.subr.bf16.mxu0 0
    %393 = vmatpush1.bf16.msra.mxu0 0
    %394 = vmatprep.subr.bf16.mxu0 0
    %395 = vmatpush1.bf16.msra.mxu0 0
    %396 = vmatprep.subr.bf16.mxu0 0
    %397 = vmatpush1.bf16.msra.mxu0 0
    %398 = vmatprep.subr.bf16.mxu0 0
    %399 = vmatpush1.bf16.msra.mxu0 0
    %400 = vmatprep.subr.bf16.mxu0 0
    %401 = vmatpush1.bf16.msra.mxu0 0
    %402 = vmatprep.subr.bf16.mxu0 0
    %403 = vmatpush1.bf16.msra.mxu0 0
    %404 = vmatprep.subr.bf16.mxu0 0
    %405 = vmatpush1.bf16.msra.mxu0 0
    %406 = vmatprep.mubr.bf16.mxu0 0
    %407 = vmatmul.mubr.bf16.gmra.mrb[0].mxu0 %v265
    %v408 = vpop.f32.mrb[0].mxu0
    %v409 = vadd.f32 %v287, %v408
    %v410 = vpop.f32.mrb[0].mxu0
    %v411 = vadd.f32 %v291, %v410
    %v412 = vpop.f32.mrb[0].mxu0
    %v413 = vpop.f32.mrb[0].mxu0
    %414 = vdwg.mxu0
    %vm415 = vcmp.ge.f32.partialorder %v409, 0.0
    %vm416 = vcmp.ge.f32.partialorder %v411, 0.0
    %v417 = vmul.f32 %v409, 0.01
    %v418 = vmul.f32 %v411, 0.01
    %v419 = vsel %vm415, %v409, %v417
    %v420 = vsel %vm416, %v411, %v418
    %v421 = vpack.c.bf16 %v419, %v419
    %v422 = vld [vmem:[#allocation10] sm:$0xff]
    %v423 = vld [vmem:[#allocation10 + $0x8] sm:$0xff]
    %v424 = vld [vmem:[#allocation10 + $0x10] sm:$0xff]
    %v425 = vld [vmem:[#allocation10 + $0x18] sm:$0xff]
    %v426 = vld [vmem:[#allocation10 + $0x20] sm:$0xff]
    %v427 = vld [vmem:[#allocation10 + $0x28] sm:$0xff]
    %v428 = vld [vmem:[#allocation10 + $0x30] sm:$0xff]
    %v429 = vld [vmem:[#allocation10 + $0x38] sm:$0xff]
    %v430 = vld [vmem:[#allocation10 + $0x40] sm:$0xff]
    %v431 = vld [vmem:[#allocation10 + $0x48] sm:$0xff]
    %v432 = vld [vmem:[#allocation10 + $0x50] sm:$0xff]
    %v433 = vld [vmem:[#allocation10 + $0x58] sm:$0xff]
    %v434 = vld [vmem:[#allocation10 + $0x60] sm:$0xff]
    %v435 = vld [vmem:[#allocation10 + $0x68] sm:$0xff]
    %v436 = vld [vmem:[#allocation10 + $0x70] sm:$0xff]
    %v437 = vld [vmem:[#allocation10 + $0x78] sm:$0xff]
    %v438 = vld [vmem:[%s6] sm:$0x3]
    %v440 = vlaneseq
    %v441 = vshrl.u32 %v440, 7
    %v442 = vsub.s32 0, %v441
    %v443 = vrot.slane %v438, %v442
    %v444 = vlaneseq
    %v445 = vshrl.u32 %v444, 7
    %v446 = vsub.s32 1, %v445
    %v447 = vrot.slane %v438, %v446
    %v466 = vunpack.c.l.b16 %v422
    %v467 = vunpack.c.h.b16 %v422
    %v468 = vunpack.c.l.b16 %v423
    %v469 = vunpack.c.h.b16 %v423
    %v470 = vunpack.c.l.b16 %v424
    %v471 = vunpack.c.h.b16 %v424
    %v472 = vunpack.c.l.b16 %v425
    %v473 = vunpack.c.h.b16 %v425
    %v474 = vunpack.c.l.b16 %v426
    %v475 = vunpack.c.h.b16 %v426
    %v476 = vunpack.c.l.b16 %v427
    %v477 = vunpack.c.h.b16 %v427
    %v478 = vunpack.c.l.b16 %v428
    %v479 = vunpack.c.h.b16 %v428
    %v480 = vunpack.c.l.b16 %v429
    %v481 = vunpack.c.h.b16 %v429
    %v482 = vunpack.c.l.b16 %v430
    %v483 = vunpack.c.h.b16 %v430
    %v484 = vunpack.c.l.b16 %v431
    %v485 = vunpack.c.h.b16 %v431
    %v486 = vunpack.c.l.b16 %v432
    %v487 = vunpack.c.h.b16 %v432
    %v488 = vunpack.c.l.b16 %v433
    %v489 = vunpack.c.h.b16 %v433
    %v490 = vunpack.c.l.b16 %v434
    %v491 = vunpack.c.h.b16 %v434
    %v492 = vunpack.c.l.b16 %v435
    %v493 = vunpack.c.h.b16 %v435
    %v494 = vunpack.c.l.b16 %v436
    %v495 = vunpack.c.h.b16 %v436
    %v496 = vunpack.c.l.b16 %v437
    %v497 = vunpack.c.h.b16 %v437
    %v498 = vpack.c.b16 %v468, %v466
    %v499 = vpack.c.b16 %v469, %v467
    %v500 = vpack.c.b16 %v472, %v470
    %v501 = vpack.c.b16 %v473, %v471
    %v502 = vpack.c.b16 %v476, %v474
    %v503 = vpack.c.b16 %v477, %v475
    %v504 = vpack.c.b16 %v480, %v478
    %v505 = vpack.c.b16 %v481, %v479
    %v506 = vpack.c.b16 %v484, %v482
    %v507 = vpack.c.b16 %v485, %v483
    %v508 = vpack.c.b16 %v488, %v486
    %v509 = vpack.c.b16 %v489, %v487
    %v510 = vpack.c.b16 %v492, %v490
    %v511 = vpack.c.b16 %v493, %v491
    %v512 = vpack.c.b16 %v496, %v494
    %v513 = vpack.c.b16 %v497, %v495
    %530 = vmatprep.subr.bf16.mxu0 %v499
    %531 = vmatpush1.bf16.msra.mxu0 %v498
    %532 = vmatprep.subr.bf16.mxu0 %v501
    %533 = vmatpush1.bf16.msra.mxu0 %v500
    %534 = vmatprep.subr.bf16.mxu0 %v503
    %535 = vmatpush1.bf16.msra.mxu0 %v502
    %536 = vmatprep.subr.bf16.mxu0 %v505
    %537 = vmatpush1.bf16.msra.mxu0 %v504
    %538 = vmatprep.subr.bf16.mxu0 %v507
    %539 = vmatpush1.bf16.msra.mxu0 %v506
    %540 = vmatprep.subr.bf16.mxu0 %v509
    %541 = vmatpush1.bf16.msra.mxu0 %v508
    %542 = vmatprep.subr.bf16.mxu0 %v511
    %543 = vmatpush1.bf16.msra.mxu0 %v510
    %544 = vmatprep.subr.bf16.mxu0 %v513
    %545 = vmatpush1.bf16.msra.mxu0 %v512
    %546 = vmatprep.subr.bf16.mxu0 0
    %547 = vmatpush1.bf16.msra.mxu0 0
    %548 = vmatprep.subr.bf16.mxu0 0
    %549 = vmatpush1.bf16.msra.mxu0 0
    %550 = vmatprep.subr.bf16.mxu0 0
    %551 = vmatpush1.bf16.msra.mxu0 0
    %552 = vmatprep.subr.bf16.mxu0 0
    %553 = vmatpush1.bf16.msra.mxu0 0
    %554 = vmatprep.subr.bf16.mxu0 0
    %555 = vmatpush1.bf16.msra.mxu0 0
    %556 = vmatprep.subr.bf16.mxu0 0
    %557 = vmatpush1.bf16.msra.mxu0 0
    %558 = vmatprep.subr.bf16.mxu0 0
    %559 = vmatpush1.bf16.msra.mxu0 0
    %560 = vmatprep.subr.bf16.mxu0 0
    %561 = vmatpush1.bf16.msra.mxu0 0
    %562 = vmatprep.mubr.bf16.mxu0 0
    %563 = vmatmul.mubr.bf16.gmra.mrb[0].mxu0 %v421
    %v564 = vpop.f32.mrb[0].mxu0
    %v565 = vadd.f32 %v443, %v564
    %v566 = vpop.f32.mrb[0].mxu0
    %v567 = vadd.f32 %v447, %v566
    %v568 = vpop.f32.mrb[0].mxu0
    %v569 = vpop.f32.mrb[0].mxu0
    %570 = vdwg.mxu0
    %vm571 = vcmp.ge.f32.partialorder %v565, 0.0
    %vm572 = vcmp.ge.f32.partialorder %v567, 0.0
    %v573 = vmul.f32 %v565, 0.01
    %v574 = vmul.f32 %v567, 0.01
    %v575 = vsel %vm571, %v565, %v573
    %v576 = vsel %vm572, %v567, %v574
    %v577 = vpack.c.bf16 %v575, %v575
    %v578 = vpack.c.bf16 %v576, %v576
    %v579 = vld [vmem:[#allocation11] sm:$0xff]
    %v580 = vld [vmem:[#allocation11 + $0x8] sm:$0xff]
    %v581 = vld [vmem:[#allocation11 + $0x10] sm:$0xff]
    %v582 = vld [vmem:[#allocation11 + $0x18] sm:$0xff]
    %v583 = vld [vmem:[#allocation11 + $0x20] sm:$0xff]
    %v584 = vld [vmem:[#allocation11 + $0x28] sm:$0xff]
    %v585 = vld [vmem:[#allocation11 + $0x30] sm:$0xff]
    %v586 = vld [vmem:[#allocation11 + $0x38] sm:$0xff]
    %v587 = vld [vmem:[#allocation11 + $0x40] sm:$0xff]
    %v588 = vld [vmem:[#allocation11 + $0x48] sm:$0xff]
    %v589 = vld [vmem:[#allocation11 + $0x50] sm:$0xff]
    %v590 = vld [vmem:[#allocation11 + $0x58] sm:$0xff]
    %v591 = vld [vmem:[#allocation11 + $0x60] sm:$0xff]
    %v592 = vld [vmem:[#allocation11 + $0x68] sm:$0xff]
    %v593 = vld [vmem:[#allocation11 + $0x70] sm:$0xff]
    %v594 = vld [vmem:[#allocation11 + $0x78] sm:$0xff]
    %v595 = vld [vmem:[#allocation11 + $0x80] sm:$0xff]
    %v596 = vld [vmem:[#allocation11 + $0x88] sm:$0xff]
    %v597 = vld [vmem:[#allocation11 + $0x90] sm:$0xff]
    %v598 = vld [vmem:[#allocation11 + $0x98] sm:$0xff]
    %v599 = vld [vmem:[#allocation11 + $0xa0] sm:$0xff]
    %v600 = vld [vmem:[#allocation11 + $0xa8] sm:$0xff]
    %v601 = vld [vmem:[#allocation11 + $0xb0] sm:$0xff]
    %v602 = vld [vmem:[#allocation11 + $0xb8] sm:$0xff]
    %v603 = vld [vmem:[#allocation11 + $0xc0] sm:$0xff]
    %v604 = vld [vmem:[#allocation11 + $0xc8] sm:$0xff]
    %v605 = vld [vmem:[#allocation11 + $0xd0] sm:$0xff]
    %v606 = vld [vmem:[#allocation11 + $0xd8] sm:$0xff]
    %v607 = vld [vmem:[#allocation11 + $0xe0] sm:$0xff]
    %v608 = vld [vmem:[#allocation11 + $0xe8] sm:$0xff]
    %v609 = vld [vmem:[#allocation11 + $0xf0] sm:$0xff]
    %v610 = vld [vmem:[#allocation11 + $0xf8] sm:$0xff]
    %v611 = vld [vmem:[#allocation11 + $0x100] sm:$0xff]
    %v612 = vld [vmem:[#allocation11 + $0x108] sm:$0xff]
    %v613 = vld [vmem:[#allocation11 + $0x110] sm:$0xff]
    %v614 = vld [vmem:[#allocation11 + $0x118] sm:$0xff]
    %v615 = vld [vmem:[#allocation11 + $0x120] sm:$0xff]
    %v616 = vld [vmem:[#allocation11 + $0x128] sm:$0xff]
    %v617 = vld [vmem:[#allocation11 + $0x130] sm:$0xff]
    %v618 = vld [vmem:[#allocation11 + $0x138] sm:$0xff]
    %v619 = vld [vmem:[#allocation11 + $0x140] sm:$0xff]
    %v620 = vld [vmem:[#allocation11 + $0x148] sm:$0xff]
    %v621 = vld [vmem:[#allocation11 + $0x150] sm:$0xff]
    %v622 = vld [vmem:[#allocation11 + $0x158] sm:$0xff]
    %v623 = vld [vmem:[#allocation11 + $0x160] sm:$0xff]
    %v624 = vld [vmem:[#allocation11 + $0x168] sm:$0xff]
    %v625 = vld [vmem:[#allocation11 + $0x170] sm:$0xff]
    %v626 = vld [vmem:[#allocation11 + $0x178] sm:$0xff]
    %v627 = vld [vmem:[#allocation11 + $0x180] sm:$0xff]
    %v628 = vld [vmem:[#allocation11 + $0x188] sm:$0xff]
    %v629 = vld [vmem:[#allocation11 + $0x190] sm:$0xff]
    %v630 = vld [vmem:[#allocation11 + $0x198] sm:$0xff]
    %v631 = vld [vmem:[#allocation11 + $0x1a0] sm:$0xff]
    %v632 = vld [vmem:[#allocation11 + $0x1a8] sm:$0xff]
    %v633 = vld [vmem:[#allocation11 + $0x1b0] sm:$0xff]
    %v634 = vld [vmem:[#allocation11 + $0x1b8] sm:$0xff]
    %v635 = vld [vmem:[#allocation11 + $0x1c0] sm:$0xff]
    %v636 = vld [vmem:[#allocation11 + $0x1c8] sm:$0xff]
    %v637 = vld [vmem:[#allocation11 + $0x1d0] sm:$0xff]
    %v638 = vld [vmem:[#allocation11 + $0x1d8] sm:$0xff]
    %v639 = vld [vmem:[#allocation11 + $0x1e0] sm:$0xff]
    %v640 = vld [vmem:[#allocation11 + $0x1e8] sm:$0xff]
    %v641 = vld [vmem:[#allocation11 + $0x1f0] sm:$0xff]
    %v642 = vld [vmem:[#allocation11 + $0x1f8] sm:$0xff]
    %v643 = vld [vmem:[%s8] sm:$0xf]
    %v645 = vlaneseq
    %v646 = vshrl.u32 %v645, 7
    %v647 = vsub.s32 0, %v646
    %v648 = vrot.slane %v643, %v647
    %v649 = vlaneseq
    %v650 = vshrl.u32 %v649, 7
    %v651 = vsub.s32 1, %v650
    %v652 = vrot.slane %v643, %v651
    %v653 = vlaneseq
    %v654 = vshrl.u32 %v653, 7
    %v655 = vsub.s32 2, %v654
    %v656 = vrot.slane %v643, %v655
    %v657 = vlaneseq
    %v658 = vshrl.u32 %v657, 7
    %v659 = vsub.s32 3, %v658
    %v660 = vrot.slane %v643, %v659
    %v729 = vunpack.c.l.b16 %v579
    %v730 = vunpack.c.h.b16 %v579
    %v731 = vunpack.c.l.b16 %v580
    %v732 = vunpack.c.h.b16 %v580
    %v733 = vunpack.c.l.b16 %v581
    %v734 = vunpack.c.h.b16 %v581
    %v735 = vunpack.c.l.b16 %v582
    %v736 = vunpack.c.h.b16 %v582
    %v737 = vunpack.c.l.b16 %v583
    %v738 = vunpack.c.h.b16 %v583
    %v739 = vunpack.c.l.b16 %v584
    %v740 = vunpack.c.h.b16 %v584
    %v741 = vunpack.c.l.b16 %v585
    %v742 = vunpack.c.h.b16 %v585
    %v743 = vunpack.c.l.b16 %v586
    %v744 = vunpack.c.h.b16 %v586
    %v745 = vunpack.c.l.b16 %v587
    %v746 = vunpack.c.h.b16 %v587
    %v747 = vunpack.c.l.b16 %v588
    %v748 = vunpack.c.h.b16 %v588
    %v749 = vunpack.c.l.b16 %v589
    %v750 = vunpack.c.h.b16 %v589
    %v751 = vunpack.c.l.b16 %v590
    %v752 = vunpack.c.h.b16 %v590
    %v753 = vunpack.c.l.b16 %v591
    %v754 = vunpack.c.h.b16 %v591
    %v755 = vunpack.c.l.b16 %v592
    %v756 = vunpack.c.h.b16 %v592
    %v757 = vunpack.c.l.b16 %v593
    %v758 = vunpack.c.h.b16 %v593
    %v759 = vunpack.c.l.b16 %v594
    %v760 = vunpack.c.h.b16 %v594
    %v761 = vunpack.c.l.b16 %v595
    %v762 = vunpack.c.h.b16 %v595
    %v763 = vunpack.c.l.b16 %v596
    %v764 = vunpack.c.h.b16 %v596
    %v765 = vunpack.c.l.b16 %v597
    %v766 = vunpack.c.h.b16 %v597
    %v767 = vunpack.c.l.b16 %v598
    %v768 = vunpack.c.h.b16 %v598
    %v769 = vunpack.c.l.b16 %v599
    %v770 = vunpack.c.h.b16 %v599
    %v771 = vunpack.c.l.b16 %v600
    %v772 = vunpack.c.h.b16 %v600
    %v773 = vunpack.c.l.b16 %v601
    %v774 = vunpack.c.h.b16 %v601
    %v775 = vunpack.c.l.b16 %v602
    %v776 = vunpack.c.h.b16 %v602
    %v777 = vunpack.c.l.b16 %v603
    %v778 = vunpack.c.h.b16 %v603
    %v779 = vunpack.c.l.b16 %v604
    %v780 = vunpack.c.h.b16 %v604
    %v781 = vunpack.c.l.b16 %v605
    %v782 = vunpack.c.h.b16 %v605
    %v783 = vunpack.c.l.b16 %v606
    %v784 = vunpack.c.h.b16 %v606
    %v785 = vunpack.c.l.b16 %v607
    %v786 = vunpack.c.h.b16 %v607
    %v787 = vunpack.c.l.b16 %v608
    %v788 = vunpack.c.h.b16 %v608
    %v789 = vunpack.c.l.b16 %v609
    %v790 = vunpack.c.h.b16 %v609
    %v791 = vunpack.c.l.b16 %v610
    %v792 = vunpack.c.h.b16 %v610
    %v793 = vunpack.c.l.b16 %v611
    %v794 = vunpack.c.h.b16 %v611
    %v795 = vunpack.c.l.b16 %v612
    %v796 = vunpack.c.h.b16 %v612
    %v797 = vunpack.c.l.b16 %v613
    %v798 = vunpack.c.h.b16 %v613
    %v799 = vunpack.c.l.b16 %v614
    %v800 = vunpack.c.h.b16 %v614
    %v801 = vunpack.c.l.b16 %v615
    %v802 = vunpack.c.h.b16 %v615
    %v803 = vunpack.c.l.b16 %v616
    %v804 = vunpack.c.h.b16 %v616
    %v805 = vunpack.c.l.b16 %v617
    %v806 = vunpack.c.h.b16 %v617
    %v807 = vunpack.c.l.b16 %v618
    %v808 = vunpack.c.h.b16 %v618
    %v809 = vunpack.c.l.b16 %v619
    %v810 = vunpack.c.h.b16 %v619
    %v811 = vunpack.c.l.b16 %v620
    %v812 = vunpack.c.h.b16 %v620
    %v813 = vunpack.c.l.b16 %v621
    %v814 = vunpack.c.h.b16 %v621
    %v815 = vunpack.c.l.b16 %v622
    %v816 = vunpack.c.h.b16 %v622
    %v817 = vunpack.c.l.b16 %v623
    %v818 = vunpack.c.h.b16 %v623
    %v819 = vunpack.c.l.b16 %v624
    %v820 = vunpack.c.h.b16 %v624
    %v821 = vunpack.c.l.b16 %v625
    %v822 = vunpack.c.h.b16 %v625
    %v823 = vunpack.c.l.b16 %v626
    %v824 = vunpack.c.h.b16 %v626
    %v825 = vunpack.c.l.b16 %v627
    %v826 = vunpack.c.h.b16 %v627
    %v827 = vunpack.c.l.b16 %v628
    %v828 = vunpack.c.h.b16 %v628
    %v829 = vunpack.c.l.b16 %v629
    %v830 = vunpack.c.h.b16 %v629
    %v831 = vunpack.c.l.b16 %v630
    %v832 = vunpack.c.h.b16 %v630
    %v833 = vunpack.c.l.b16 %v631
    %v834 = vunpack.c.h.b16 %v631
    %v835 = vunpack.c.l.b16 %v632
    %v836 = vunpack.c.h.b16 %v632
    %v837 = vunpack.c.l.b16 %v633
    %v838 = vunpack.c.h.b16 %v633
    %v839 = vunpack.c.l.b16 %v634
    %v840 = vunpack.c.h.b16 %v634
    %v841 = vunpack.c.l.b16 %v635
    %v842 = vunpack.c.h.b16 %v635
    %v843 = vunpack.c.l.b16 %v636
    %v844 = vunpack.c.h.b16 %v636
    %v845 = vunpack.c.l.b16 %v637
    %v846 = vunpack.c.h.b16 %v637
    %v847 = vunpack.c.l.b16 %v638
    %v848 = vunpack.c.h.b16 %v638
    %v849 = vunpack.c.l.b16 %v639
    %v850 = vunpack.c.h.b16 %v639
    %v851 = vunpack.c.l.b16 %v640
    %v852 = vunpack.c.h.b16 %v640
    %v853 = vunpack.c.l.b16 %v641
    %v854 = vunpack.c.h.b16 %v641
    %v855 = vunpack.c.l.b16 %v642
    %v856 = vunpack.c.h.b16 %v642
    %v857 = vpack.c.b16 %v733, %v729
    %v858 = vpack.c.b16 %v734, %v730
    %v859 = vpack.c.b16 %v735, %v731
    %v860 = vpack.c.b16 %v736, %v732
    %v861 = vpack.c.b16 %v741, %v737
    %v862 = vpack.c.b16 %v742, %v738
    %v863 = vpack.c.b16 %v743, %v739
    %v864 = vpack.c.b16 %v744, %v740
    %v865 = vpack.c.b16 %v749, %v745
    %v866 = vpack.c.b16 %v750, %v746
    %v867 = vpack.c.b16 %v751, %v747
    %v868 = vpack.c.b16 %v752, %v748
    %v869 = vpack.c.b16 %v757, %v753
    %v870 = vpack.c.b16 %v758, %v754
    %v871 = vpack.c.b16 %v759, %v755
    %v872 = vpack.c.b16 %v760, %v756
    %v873 = vpack.c.b16 %v765, %v761
    %v874 = vpack.c.b16 %v766, %v762
    %v875 = vpack.c.b16 %v767, %v763
    %v876 = vpack.c.b16 %v768, %v764
    %v877 = vpack.c.b16 %v773, %v769
    %v878 = vpack.c.b16 %v774, %v770
    %v879 = vpack.c.b16 %v775, %v771
    %v880 = vpack.c.b16 %v776, %v772
    %v881 = vpack.c.b16 %v781, %v777
    %v882 = vpack.c.b16 %v782, %v778
    %v883 = vpack.c.b16 %v783, %v779
    %v884 = vpack.c.b16 %v784, %v780
    %v885 = vpack.c.b16 %v789, %v785
    %v886 = vpack.c.b16 %v790, %v786
    %v887 = vpack.c.b16 %v791, %v787
    %v888 = vpack.c.b16 %v792, %v788
    %v889 = vpack.c.b16 %v797, %v793
    %v890 = vpack.c.b16 %v798, %v794
    %v891 = vpack.c.b16 %v799, %v795
    %v892 = vpack.c.b16 %v800, %v796
    %v893 = vpack.c.b16 %v805, %v801
    %v894 = vpack.c.b16 %v806, %v802
    %v895 = vpack.c.b16 %v807, %v803
    %v896 = vpack.c.b16 %v808, %v804
    %v897 = vpack.c.b16 %v813, %v809
    %v898 = vpack.c.b16 %v814, %v810
    %v899 = vpack.c.b16 %v815, %v811
    %v900 = vpack.c.b16 %v816, %v812
    %v901 = vpack.c.b16 %v821, %v817
    %v902 = vpack.c.b16 %v822, %v818
    %v903 = vpack.c.b16 %v823, %v819
    %v904 = vpack.c.b16 %v824, %v820
    %v905 = vpack.c.b16 %v829, %v825
    %v906 = vpack.c.b16 %v830, %v826
    %v907 = vpack.c.b16 %v831, %v827
    %v908 = vpack.c.b16 %v832, %v828
    %v909 = vpack.c.b16 %v837, %v833
    %v910 = vpack.c.b16 %v838, %v834
    %v911 = vpack.c.b16 %v839, %v835
    %v912 = vpack.c.b16 %v840, %v836
    %v913 = vpack.c.b16 %v845, %v841
    %v914 = vpack.c.b16 %v846, %v842
    %v915 = vpack.c.b16 %v847, %v843
    %v916 = vpack.c.b16 %v848, %v844
    %v917 = vpack.c.b16 %v853, %v849
    %v918 = vpack.c.b16 %v854, %v850
    %v919 = vpack.c.b16 %v855, %v851
    %v920 = vpack.c.b16 %v856, %v852
    %985 = vmatprep.subr.bf16.mxu0 %v858
    %986 = vmatpush1.bf16.msra.mxu0 %v857
    %987 = vmatprep.subr.bf16.mxu0 %v862
    %988 = vmatpush1.bf16.msra.mxu0 %v861
    %989 = vmatprep.subr.bf16.mxu0 %v866
    %990 = vmatpush1.bf16.msra.mxu0 %v865
    %991 = vmatprep.subr.bf16.mxu0 %v870
    %992 = vmatpush1.bf16.msra.mxu0 %v869
    %993 = vmatprep.subr.bf16.mxu0 %v874
    %994 = vmatpush1.bf16.msra.mxu0 %v873
    %995 = vmatprep.subr.bf16.mxu0 %v878
    %996 = vmatpush1.bf16.msra.mxu0 %v877
    %997 = vmatprep.subr.bf16.mxu0 %v882
    %998 = vmatpush1.bf16.msra.mxu0 %v881
    %999 = vmatprep.subr.bf16.mxu0 %v886
    %1000 = vmatpush1.bf16.msra.mxu0 %v885
    %1001 = vmatprep.subr.bf16.mxu0 %v890
    %1002 = vmatpush1.bf16.msra.mxu0 %v889
    %1003 = vmatprep.subr.bf16.mxu0 %v894
    %1004 = vmatpush1.bf16.msra.mxu0 %v893
    %1005 = vmatprep.subr.bf16.mxu0 %v898
    %1006 = vmatpush1.bf16.msra.mxu0 %v897
    %1007 = vmatprep.subr.bf16.mxu0 %v902
    %1008 = vmatpush1.bf16.msra.mxu0 %v901
    %1009 = vmatprep.subr.bf16.mxu0 %v906
    %1010 = vmatpush1.bf16.msra.mxu0 %v905
    %1011 = vmatprep.subr.bf16.mxu0 %v910
    %1012 = vmatpush1.bf16.msra.mxu0 %v909
    %1013 = vmatprep.subr.bf16.mxu0 %v914
    %1014 = vmatpush1.bf16.msra.mxu0 %v913
    %1015 = vmatprep.subr.bf16.mxu0 %v918
    %1016 = vmatpush1.bf16.msra.mxu0 %v917
    %1017 = vmatprep.mubr.bf16.mxu0 %v578
    %1018 = vmatmul.mubr.bf16.gmra.mrb[0].mxu0 %v577
    %v1019 = vpop.f32.mrb[0].mxu0
    %v1020 = vadd.f32 %v648, %v1019
    %v1021 = vpop.f32.mrb[0].mxu0
    %v1022 = vadd.f32 %v652, %v1021
    %v1023 = vpop.f32.mrb[0].mxu0
    %v1024 = vpop.f32.mrb[0].mxu0
    %1025 = vdwg.mxu0
    %1026 = vmatprep.subr.bf16.mxu0 %v860
    %1027 = vmatpush1.bf16.msra.mxu0 %v859
    %1028 = vmatprep.subr.bf16.mxu0 %v864
    %1029 = vmatpush1.bf16.msra.mxu0 %v863
    %1030 = vmatprep.subr.bf16.mxu0 %v868
    %1031 = vmatpush1.bf16.msra.mxu0 %v867
    %1032 = vmatprep.subr.bf16.mxu0 %v872
    %1033 = vmatpush1.bf16.msra.mxu0 %v871
    %1034 = vmatprep.subr.bf16.mxu0 %v876
    %1035 = vmatpush1.bf16.msra.mxu0 %v875
    %1036 = vmatprep.subr.bf16.mxu0 %v880
    %1037 = vmatpush1.bf16.msra.mxu0 %v879
    %1038 = vmatprep.subr.bf16.mxu0 %v884
    %1039 = vmatpush1.bf16.msra.mxu0 %v883
    %1040 = vmatprep.subr.bf16.mxu0 %v888
    %1041 = vmatpush1.bf16.msra.mxu0 %v887
    %1042 = vmatprep.subr.bf16.mxu0 %v892
    %1043 = vmatpush1.bf16.msra.mxu0 %v891
    %1044 = vmatprep.subr.bf16.mxu0 %v896
    %1045 = vmatpush1.bf16.msra.mxu0 %v895
    %1046 = vmatprep.subr.bf16.mxu0 %v900
    %1047 = vmatpush1.bf16.msra.mxu0 %v899
    %1048 = vmatprep.subr.bf16.mxu0 %v904
    %1049 = vmatpush1.bf16.msra.mxu0 %v903
    %1050 = vmatprep.subr.bf16.mxu0 %v908
    %1051 = vmatpush1.bf16.msra.mxu0 %v907
    %1052 = vmatprep.subr.bf16.mxu0 %v912
    %1053 = vmatpush1.bf16.msra.mxu0 %v911
    %1054 = vmatprep.subr.bf16.mxu0 %v916
    %1055 = vmatpush1.bf16.msra.mxu0 %v915
    %1056 = vmatprep.subr.bf16.mxu0 %v920
    %1057 = vmatpush1.bf16.msra.mxu0 %v919
    %1058 = vmatprep.mubr.bf16.mxu0 %v578
    %1059 = vmatmul.mubr.bf16.gmra.mrb[0].mxu0 %v577
    %v1060 = vpop.f32.mrb[0].mxu0
    %v1061 = vadd.f32 %v656, %v1060
    %v1062 = vpop.f32.mrb[0].mxu0
    %v1063 = vadd.f32 %v660, %v1062
    %v1064 = vpop.f32.mrb[0].mxu0
    %v1065 = vpop.f32.mrb[0].mxu0
    %1066 = vdwg.mxu0
    %v1067 = vmax.f32 %v1020, 0.0
    %v1068 = vmax.f32 %v1022, 0.0
    %v1069 = vmax.f32 %v1061, 0.0
    %v1070 = vmax.f32 %v1063, 0.0
    %v1071 = vpack.c.bf16 %v1067, %v1067
    %v1072 = vpack.c.bf16 %v1068, %v1068
    %v1073 = vpack.c.bf16 %v1069, %v1069
    %v1074 = vpack.c.bf16 %v1070, %v1070
    %v1075 = vld [vmem:[#allocation13] sm:$0xff]
    %v1076 = vld [vmem:[#allocation13 + $0x8] sm:$0xff]
    %v1077 = vld [vmem:[#allocation13 + $0x10] sm:$0xff]
    %v1078 = vld [vmem:[#allocation13 + $0x18] sm:$0xff]
    %v1079 = vld [vmem:[#allocation13 + $0x20] sm:$0xff]
    %v1080 = vld [vmem:[#allocation13 + $0x28] sm:$0xff]
    %v1081 = vld [vmem:[#allocation13 + $0x30] sm:$0xff]
    %v1082 = vld [vmem:[#allocation13 + $0x38] sm:$0xff]
    %v1083 = vld [vmem:[#allocation13 + $0x40] sm:$0xff]
    %v1084 = vld [vmem:[#allocation13 + $0x48] sm:$0xff]
    %v1085 = vld [vmem:[#allocation13 + $0x50] sm:$0xff]
    %v1086 = vld [vmem:[#allocation13 + $0x58] sm:$0xff]
    %v1087 = vld [vmem:[#allocation13 + $0x60] sm:$0xff]
    %v1088 = vld [vmem:[#allocation13 + $0x68] sm:$0xff]
    %v1089 = vld [vmem:[#allocation13 + $0x70] sm:$0xff]
    %v1090 = vld [vmem:[#allocation13 + $0x78] sm:$0xff]
    %v1091 = vld [vmem:[#allocation13 + $0x80] sm:$0xff]
    %v1092 = vld [vmem:[#allocation13 + $0x88] sm:$0xff]
    %v1093 = vld [vmem:[#allocation13 + $0x90] sm:$0xff]
    %v1094 = vld [vmem:[#allocation13 + $0x98] sm:$0xff]
    %v1095 = vld [vmem:[#allocation13 + $0xa0] sm:$0xff]
    %v1096 = vld [vmem:[#allocation13 + $0xa8] sm:$0xff]
    %v1097 = vld [vmem:[#allocation13 + $0xb0] sm:$0xff]
    %v1098 = vld [vmem:[#allocation13 + $0xb8] sm:$0xff]
    %v1099 = vld [vmem:[#allocation13 + $0xc0] sm:$0xff]
    %v1100 = vld [vmem:[#allocation13 + $0xc8] sm:$0xff]
    %v1101 = vld [vmem:[#allocation13 + $0xd0] sm:$0xff]
    %v1102 = vld [vmem:[#allocation13 + $0xd8] sm:$0xff]
    %v1103 = vld [vmem:[#allocation13 + $0xe0] sm:$0xff]
    %v1104 = vld [vmem:[#allocation13 + $0xe8] sm:$0xff]
    %v1105 = vld [vmem:[#allocation13 + $0xf0] sm:$0xff]
    %v1106 = vld [vmem:[#allocation13 + $0xf8] sm:$0xff]
    %v1107 = vld [vmem:[#allocation13 + $0x100] sm:$0xff]
    %v1108 = vld [vmem:[#allocation13 + $0x108] sm:$0xff]
    %v1109 = vld [vmem:[#allocation13 + $0x110] sm:$0xff]
    %v1110 = vld [vmem:[#allocation13 + $0x118] sm:$0xff]
    %v1111 = vld [vmem:[#allocation13 + $0x120] sm:$0xff]
    %v1112 = vld [vmem:[#allocation13 + $0x128] sm:$0xff]
    %v1113 = vld [vmem:[#allocation13 + $0x130] sm:$0xff]
    %v1114 = vld [vmem:[#allocation13 + $0x138] sm:$0xff]
    %v1115 = vld [vmem:[#allocation13 + $0x140] sm:$0xff]
    %v1116 = vld [vmem:[#allocation13 + $0x148] sm:$0xff]
    %v1117 = vld [vmem:[#allocation13 + $0x150] sm:$0xff]
    %v1118 = vld [vmem:[#allocation13 + $0x158] sm:$0xff]
    %v1119 = vld [vmem:[#allocation13 + $0x160] sm:$0xff]
    %v1120 = vld [vmem:[#allocation13 + $0x168] sm:$0xff]
    %v1121 = vld [vmem:[#allocation13 + $0x170] sm:$0xff]
    %v1122 = vld [vmem:[#allocation13 + $0x178] sm:$0xff]
    %v1123 = vld [vmem:[#allocation13 + $0x180] sm:$0xff]
    %v1124 = vld [vmem:[#allocation13 + $0x188] sm:$0xff]
    %v1125 = vld [vmem:[#allocation13 + $0x190] sm:$0xff]
    %v1126 = vld [vmem:[#allocation13 + $0x198] sm:$0xff]
    %v1127 = vld [vmem:[#allocation13 + $0x1a0] sm:$0xff]
    %v1128 = vld [vmem:[#allocation13 + $0x1a8] sm:$0xff]
    %v1129 = vld [vmem:[#allocation13 + $0x1b0] sm:$0xff]
    %v1130 = vld [vmem:[#allocation13 + $0x1b8] sm:$0xff]
    %v1131 = vld [vmem:[#allocation13 + $0x1c0] sm:$0xff]
    %v1132 = vld [vmem:[#allocation13 + $0x1c8] sm:$0xff]
    %v1133 = vld [vmem:[#allocation13 + $0x1d0] sm:$0xff]
    %v1134 = vld [vmem:[#allocation13 + $0x1d8] sm:$0xff]
    %v1135 = vld [vmem:[#allocation13 + $0x1e0] sm:$0xff]
    %v1136 = vld [vmem:[#allocation13 + $0x1e8] sm:$0xff]
    %v1137 = vld [vmem:[#allocation13 + $0x1f0] sm:$0xff]
    %v1138 = vld [vmem:[#allocation13 + $0x1f8] sm:$0xff]
    %v1139 = vld [vmem:[#allocation13 + $0x200] sm:$0xff]
    %v1140 = vld [vmem:[#allocation13 + $0x208] sm:$0xff]
    %v1141 = vld [vmem:[#allocation13 + $0x210] sm:$0xff]
    %v1142 = vld [vmem:[#allocation13 + $0x218] sm:$0xff]
    %v1143 = vld [vmem:[#allocation13 + $0x220] sm:$0xff]
    %v1144 = vld [vmem:[#allocation13 + $0x228] sm:$0xff]
    %v1145 = vld [vmem:[#allocation13 + $0x230] sm:$0xff]
    %v1146 = vld [vmem:[#allocation13 + $0x238] sm:$0xff]
    %v1147 = vld [vmem:[#allocation13 + $0x240] sm:$0xff]
    %v1148 = vld [vmem:[#allocation13 + $0x248] sm:$0xff]
    %v1149 = vld [vmem:[#allocation13 + $0x250] sm:$0xff]
    %v1150 = vld [vmem:[#allocation13 + $0x258] sm:$0xff]
    %v1151 = vld [vmem:[#allocation13 + $0x260] sm:$0xff]
    %v1152 = vld [vmem:[#allocation13 + $0x268] sm:$0xff]
    %v1153 = vld [vmem:[#allocation13 + $0x270] sm:$0xff]
    %v1154 = vld [vmem:[#allocation13 + $0x278] sm:$0xff]
    %v1155 = vld [vmem:[#allocation13 + $0x280] sm:$0xff]
    %v1156 = vld [vmem:[#allocation13 + $0x288] sm:$0xff]
    %v1157 = vld [vmem:[#allocation13 + $0x290] sm:$0xff]
    %v1158 = vld [vmem:[#allocation13 + $0x298] sm:$0xff]
    %v1159 = vld [vmem:[#allocation13 + $0x2a0] sm:$0xff]
    %v1160 = vld [vmem:[#allocation13 + $0x2a8] sm:$0xff]
    %v1161 = vld [vmem:[#allocation13 + $0x2b0] sm:$0xff]
    %v1162 = vld [vmem:[#allocation13 + $0x2b8] sm:$0xff]
    %v1163 = vld [vmem:[#allocation13 + $0x2c0] sm:$0xff]
    %v1164 = vld [vmem:[#allocation13 + $0x2c8] sm:$0xff]
    %v1165 = vld [vmem:[#allocation13 + $0x2d0] sm:$0xff]
    %v1166 = vld [vmem:[#allocation13 + $0x2d8] sm:$0xff]
    %v1167 = vld [vmem:[#allocation13 + $0x2e0] sm:$0xff]
    %v1168 = vld [vmem:[#allocation13 + $0x2e8] sm:$0xff]
    %v1169 = vld [vmem:[#allocation13 + $0x2f0] sm:$0xff]
    %v1170 = vld [vmem:[#allocation13 + $0x2f8] sm:$0xff]
    %v1171 = vld [vmem:[#allocation13 + $0x300] sm:$0xff]
    %v1172 = vld [vmem:[#allocation13 + $0x308] sm:$0xff]
    %v1173 = vld [vmem:[#allocation13 + $0x310] sm:$0xff]
    %v1174 = vld [vmem:[#allocation13 + $0x318] sm:$0xff]
    %v1175 = vld [vmem:[#allocation13 + $0x320] sm:$0xff]
    %v1176 = vld [vmem:[#allocation13 + $0x328] sm:$0xff]
    %v1177 = vld [vmem:[#allocation13 + $0x330] sm:$0xff]
    %v1178 = vld [vmem:[#allocation13 + $0x338] sm:$0xff]
    %v1179 = vld [vmem:[#allocation13 + $0x340] sm:$0xff]
    %v1180 = vld [vmem:[#allocation13 + $0x348] sm:$0xff]
    %v1181 = vld [vmem:[#allocation13 + $0x350] sm:$0xff]
    %v1182 = vld [vmem:[#allocation13 + $0x358] sm:$0xff]
    %v1183 = vld [vmem:[#allocation13 + $0x360] sm:$0xff]
    %v1184 = vld [vmem:[#allocation13 + $0x368] sm:$0xff]
    %v1185 = vld [vmem:[#allocation13 + $0x370] sm:$0xff]
    %v1186 = vld [vmem:[#allocation13 + $0x378] sm:$0xff]
    %v1187 = vld [vmem:[#allocation13 + $0x380] sm:$0xff]
    %v1188 = vld [vmem:[#allocation13 + $0x388] sm:$0xff]
    %v1189 = vld [vmem:[#allocation13 + $0x390] sm:$0xff]
    %v1190 = vld [vmem:[#allocation13 + $0x398] sm:$0xff]
    %v1191 = vld [vmem:[#allocation13 + $0x3a0] sm:$0xff]
    %v1192 = vld [vmem:[#allocation13 + $0x3a8] sm:$0xff]
    %v1193 = vld [vmem:[#allocation13 + $0x3b0] sm:$0xff]
    %v1194 = vld [vmem:[#allocation13 + $0x3b8] sm:$0xff]
    %v1195 = vld [vmem:[#allocation13 + $0x3c0] sm:$0xff]
    %v1196 = vld [vmem:[#allocation13 + $0x3c8] sm:$0xff]
    %v1197 = vld [vmem:[#allocation13 + $0x3d0] sm:$0xff]
    %v1198 = vld [vmem:[#allocation13 + $0x3d8] sm:$0xff]
    %v1199 = vld [vmem:[#allocation13 + $0x3e0] sm:$0xff]
    %v1200 = vld [vmem:[#allocation13 + $0x3e8] sm:$0xff]
    %v1201 = vld [vmem:[#allocation13 + $0x3f0] sm:$0xff]
    %v1202 = vld [vmem:[#allocation13 + $0x3f8] sm:$0xff]
    %v1203 = vld [vmem:[%s10] sm:$0xf]
    %v1205 = vlaneseq
    %v1206 = vshrl.u32 %v1205, 7
    %v1207 = vsub.s32 0, %v1206
    %v1208 = vrot.slane %v1203, %v1207
    %v1209 = vlaneseq
    %v1210 = vshrl.u32 %v1209, 7
    %v1211 = vsub.s32 1, %v1210
    %v1212 = vrot.slane %v1203, %v1211
    %v1213 = vlaneseq
    %v1214 = vshrl.u32 %v1213, 7
    %v1215 = vsub.s32 2, %v1214
    %v1216 = vrot.slane %v1203, %v1215
    %v1217 = vlaneseq
    %v1218 = vshrl.u32 %v1217, 7
    %v1219 = vsub.s32 3, %v1218
    %v1220 = vrot.slane %v1203, %v1219
    %v1353 = vunpack.c.l.b16 %v1075
    %v1354 = vunpack.c.h.b16 %v1075
    %v1355 = vunpack.c.l.b16 %v1076
    %v1356 = vunpack.c.h.b16 %v1076
    %v1357 = vunpack.c.l.b16 %v1077
    %v1358 = vunpack.c.h.b16 %v1077
    %v1359 = vunpack.c.l.b16 %v1078
    %v1360 = vunpack.c.h.b16 %v1078
    %v1361 = vunpack.c.l.b16 %v1079
    %v1362 = vunpack.c.h.b16 %v1079
    %v1363 = vunpack.c.l.b16 %v1080
    %v1364 = vunpack.c.h.b16 %v1080
    %v1365 = vunpack.c.l.b16 %v1081
    %v1366 = vunpack.c.h.b16 %v1081
    %v1367 = vunpack.c.l.b16 %v1082
    %v1368 = vunpack.c.h.b16 %v1082
    %v1369 = vunpack.c.l.b16 %v1083
    %v1370 = vunpack.c.h.b16 %v1083
    %v1371 = vunpack.c.l.b16 %v1084
    %v1372 = vunpack.c.h.b16 %v1084
    %v1373 = vunpack.c.l.b16 %v1085
    %v1374 = vunpack.c.h.b16 %v1085
    %v1375 = vunpack.c.l.b16 %v1086
    %v1376 = vunpack.c.h.b16 %v1086
    %v1377 = vunpack.c.l.b16 %v1087
    %v1378 = vunpack.c.h.b16 %v1087
    %v1379 = vunpack.c.l.b16 %v1088
    %v1380 = vunpack.c.h.b16 %v1088
    %v1381 = vunpack.c.l.b16 %v1089
    %v1382 = vunpack.c.h.b16 %v1089
    %v1383 = vunpack.c.l.b16 %v1090
    %v1384 = vunpack.c.h.b16 %v1090
    %v1385 = vunpack.c.l.b16 %v1091
    %v1386 = vunpack.c.h.b16 %v1091
    %v1387 = vunpack.c.l.b16 %v1092
    %v1388 = vunpack.c.h.b16 %v1092
    %v1389 = vunpack.c.l.b16 %v1093
    %v1390 = vunpack.c.h.b16 %v1093
    %v1391 = vunpack.c.l.b16 %v1094
    %v1392 = vunpack.c.h.b16 %v1094
    %v1393 = vunpack.c.l.b16 %v1095
    %v1394 = vunpack.c.h.b16 %v1095
    %v1395 = vunpack.c.l.b16 %v1096
    %v1396 = vunpack.c.h.b16 %v1096
    %v1397 = vunpack.c.l.b16 %v1097
    %v1398 = vunpack.c.h.b16 %v1097
    %v1399 = vunpack.c.l.b16 %v1098
    %v1400 = vunpack.c.h.b16 %v1098
    %v1401 = vunpack.c.l.b16 %v1099
    %v1402 = vunpack.c.h.b16 %v1099
    %v1403 = vunpack.c.l.b16 %v1100
    %v1404 = vunpack.c.h.b16 %v1100
    %v1405 = vunpack.c.l.b16 %v1101
    %v1406 = vunpack.c.h.b16 %v1101
    %v1407 = vunpack.c.l.b16 %v1102
    %v1408 = vunpack.c.h.b16 %v1102
    %v1409 = vunpack.c.l.b16 %v1103
    %v1410 = vunpack.c.h.b16 %v1103
    %v1411 = vunpack.c.l.b16 %v1104
    %v1412 = vunpack.c.h.b16 %v1104
    %v1413 = vunpack.c.l.b16 %v1105
    %v1414 = vunpack.c.h.b16 %v1105
    %v1415 = vunpack.c.l.b16 %v1106
    %v1416 = vunpack.c.h.b16 %v1106
    %v1417 = vunpack.c.l.b16 %v1107
    %v1418 = vunpack.c.h.b16 %v1107
    %v1419 = vunpack.c.l.b16 %v1108
    %v1420 = vunpack.c.h.b16 %v1108
    %v1421 = vunpack.c.l.b16 %v1109
    %v1422 = vunpack.c.h.b16 %v1109
    %v1423 = vunpack.c.l.b16 %v1110
    %v1424 = vunpack.c.h.b16 %v1110
    %v1425 = vunpack.c.l.b16 %v1111
    %v1426 = vunpack.c.h.b16 %v1111
    %v1427 = vunpack.c.l.b16 %v1112
    %v1428 = vunpack.c.h.b16 %v1112
    %v1429 = vunpack.c.l.b16 %v1113
    %v1430 = vunpack.c.h.b16 %v1113
    %v1431 = vunpack.c.l.b16 %v1114
    %v1432 = vunpack.c.h.b16 %v1114
    %v1433 = vunpack.c.l.b16 %v1115
    %v1434 = vunpack.c.h.b16 %v1115
    %v1435 = vunpack.c.l.b16 %v1116
    %v1436 = vunpack.c.h.b16 %v1116
    %v1437 = vunpack.c.l.b16 %v1117
    %v1438 = vunpack.c.h.b16 %v1117
    %v1439 = vunpack.c.l.b16 %v1118
    %v1440 = vunpack.c.h.b16 %v1118
    %v1441 = vunpack.c.l.b16 %v1119
    %v1442 = vunpack.c.h.b16 %v1119
    %v1443 = vunpack.c.l.b16 %v1120
    %v1444 = vunpack.c.h.b16 %v1120
    %v1445 = vunpack.c.l.b16 %v1121
    %v1446 = vunpack.c.h.b16 %v1121
    %v1447 = vunpack.c.l.b16 %v1122
    %v1448 = vunpack.c.h.b16 %v1122
    %v1449 = vunpack.c.l.b16 %v1123
    %v1450 = vunpack.c.h.b16 %v1123
    %v1451 = vunpack.c.l.b16 %v1124
    %v1452 = vunpack.c.h.b16 %v1124
    %v1453 = vunpack.c.l.b16 %v1125
    %v1454 = vunpack.c.h.b16 %v1125
    %v1455 = vunpack.c.l.b16 %v1126
    %v1456 = vunpack.c.h.b16 %v1126
    %v1457 = vunpack.c.l.b16 %v1127
    %v1458 = vunpack.c.h.b16 %v1127
    %v1459 = vunpack.c.l.b16 %v1128
    %v1460 = vunpack.c.h.b16 %v1128
    %v1461 = vunpack.c.l.b16 %v1129
    %v1462 = vunpack.c.h.b16 %v1129
    %v1463 = vunpack.c.l.b16 %v1130
    %v1464 = vunpack.c.h.b16 %v1130
    %v1465 = vunpack.c.l.b16 %v1131
    %v1466 = vunpack.c.h.b16 %v1131
    %v1467 = vunpack.c.l.b16 %v1132
    %v1468 = vunpack.c.h.b16 %v1132
    %v1469 = vunpack.c.l.b16 %v1133
    %v1470 = vunpack.c.h.b16 %v1133
    %v1471 = vunpack.c.l.b16 %v1134
    %v1472 = vunpack.c.h.b16 %v1134
    %v1473 = vunpack.c.l.b16 %v1135
    %v1474 = vunpack.c.h.b16 %v1135
    %v1475 = vunpack.c.l.b16 %v1136
    %v1476 = vunpack.c.h.b16 %v1136
    %v1477 = vunpack.c.l.b16 %v1137
    %v1478 = vunpack.c.h.b16 %v1137
    %v1479 = vunpack.c.l.b16 %v1138
    %v1480 = vunpack.c.h.b16 %v1138
    %v1481 = vunpack.c.l.b16 %v1139
    %v1482 = vunpack.c.h.b16 %v1139
    %v1483 = vunpack.c.l.b16 %v1140
    %v1484 = vunpack.c.h.b16 %v1140
    %v1485 = vunpack.c.l.b16 %v1141
    %v1486 = vunpack.c.h.b16 %v1141
    %v1487 = vunpack.c.l.b16 %v1142
    %v1488 = vunpack.c.h.b16 %v1142
    %v1489 = vunpack.c.l.b16 %v1143
    %v1490 = vunpack.c.h.b16 %v1143
    %v1491 = vunpack.c.l.b16 %v1144
    %v1492 = vunpack.c.h.b16 %v1144
    %v1493 = vunpack.c.l.b16 %v1145
    %v1494 = vunpack.c.h.b16 %v1145
    %v1495 = vunpack.c.l.b16 %v1146
    %v1496 = vunpack.c.h.b16 %v1146
    %v1497 = vunpack.c.l.b16 %v1147
    %v1498 = vunpack.c.h.b16 %v1147
    %v1499 = vunpack.c.l.b16 %v1148
    %v1500 = vunpack.c.h.b16 %v1148
    %v1501 = vunpack.c.l.b16 %v1149
    %v1502 = vunpack.c.h.b16 %v1149
    %v1503 = vunpack.c.l.b16 %v1150
    %v1504 = vunpack.c.h.b16 %v1150
    %v1505 = vunpack.c.l.b16 %v1151
    %v1506 = vunpack.c.h.b16 %v1151
    %v1507 = vunpack.c.l.b16 %v1152
    %v1508 = vunpack.c.h.b16 %v1152
    %v1509 = vunpack.c.l.b16 %v1153
    %v1510 = vunpack.c.h.b16 %v1153
    %v1511 = vunpack.c.l.b16 %v1154
    %v1512 = vunpack.c.h.b16 %v1154
    %v1513 = vunpack.c.l.b16 %v1155
    %v1514 = vunpack.c.h.b16 %v1155
    %v1515 = vunpack.c.l.b16 %v1156
    %v1516 = vunpack.c.h.b16 %v1156
    %v1517 = vunpack.c.l.b16 %v1157
    %v1518 = vunpack.c.h.b16 %v1157
    %v1519 = vunpack.c.l.b16 %v1158
    %v1520 = vunpack.c.h.b16 %v1158
    %v1521 = vunpack.c.l.b16 %v1159
    %v1522 = vunpack.c.h.b16 %v1159
    %v1523 = vunpack.c.l.b16 %v1160
    %v1524 = vunpack.c.h.b16 %v1160
    %v1525 = vunpack.c.l.b16 %v1161
    %v1526 = vunpack.c.h.b16 %v1161
    %v1527 = vunpack.c.l.b16 %v1162
    %v1528 = vunpack.c.h.b16 %v1162
    %v1529 = vunpack.c.l.b16 %v1163
    %v1530 = vunpack.c.h.b16 %v1163
    %v1531 = vunpack.c.l.b16 %v1164
    %v1532 = vunpack.c.h.b16 %v1164
    %v1533 = vunpack.c.l.b16 %v1165
    %v1534 = vunpack.c.h.b16 %v1165
    %v1535 = vunpack.c.l.b16 %v1166
    %v1536 = vunpack.c.h.b16 %v1166
    %v1537 = vunpack.c.l.b16 %v1167
    %v1538 = vunpack.c.h.b16 %v1167
    %v1539 = vunpack.c.l.b16 %v1168
    %v1540 = vunpack.c.h.b16 %v1168
    %v1541 = vunpack.c.l.b16 %v1169
    %v1542 = vunpack.c.h.b16 %v1169
    %v1543 = vunpack.c.l.b16 %v1170
    %v1544 = vunpack.c.h.b16 %v1170
    %v1545 = vunpack.c.l.b16 %v1171
    %v1546 = vunpack.c.h.b16 %v1171
    %v1547 = vunpack.c.l.b16 %v1172
    %v1548 = vunpack.c.h.b16 %v1172
    %v1549 = vunpack.c.l.b16 %v1173
    %v1550 = vunpack.c.h.b16 %v1173
    %v1551 = vunpack.c.l.b16 %v1174
    %v1552 = vunpack.c.h.b16 %v1174
    %v1553 = vunpack.c.l.b16 %v1175
    %v1554 = vunpack.c.h.b16 %v1175
    %v1555 = vunpack.c.l.b16 %v1176
    %v1556 = vunpack.c.h.b16 %v1176
    %v1557 = vunpack.c.l.b16 %v1177
    %v1558 = vunpack.c.h.b16 %v1177
    %v1559 = vunpack.c.l.b16 %v1178
    %v1560 = vunpack.c.h.b16 %v1178
    %v1561 = vunpack.c.l.b16 %v1179
    %v1562 = vunpack.c.h.b16 %v1179
    %v1563 = vunpack.c.l.b16 %v1180
    %v1564 = vunpack.c.h.b16 %v1180
    %v1565 = vunpack.c.l.b16 %v1181
    %v1566 = vunpack.c.h.b16 %v1181
    %v1567 = vunpack.c.l.b16 %v1182
    %v1568 = vunpack.c.h.b16 %v1182
    %v1569 = vunpack.c.l.b16 %v1183
    %v1570 = vunpack.c.h.b16 %v1183
    %v1571 = vunpack.c.l.b16 %v1184
    %v1572 = vunpack.c.h.b16 %v1184
    %v1573 = vunpack.c.l.b16 %v1185
    %v1574 = vunpack.c.h.b16 %v1185
    %v1575 = vunpack.c.l.b16 %v1186
    %v1576 = vunpack.c.h.b16 %v1186
    %v1577 = vunpack.c.l.b16 %v1187
    %v1578 = vunpack.c.h.b16 %v1187
    %v1579 = vunpack.c.l.b16 %v1188
    %v1580 = vunpack.c.h.b16 %v1188
    %v1581 = vunpack.c.l.b16 %v1189
    %v1582 = vunpack.c.h.b16 %v1189
    %v1583 = vunpack.c.l.b16 %v1190
    %v1584 = vunpack.c.h.b16 %v1190
    %v1585 = vunpack.c.l.b16 %v1191
    %v1586 = vunpack.c.h.b16 %v1191
    %v1587 = vunpack.c.l.b16 %v1192
    %v1588 = vunpack.c.h.b16 %v1192
    %v1589 = vunpack.c.l.b16 %v1193
    %v1590 = vunpack.c.h.b16 %v1193
    %v1591 = vunpack.c.l.b16 %v1194
    %v1592 = vunpack.c.h.b16 %v1194
    %v1593 = vunpack.c.l.b16 %v1195
    %v1594 = vunpack.c.h.b16 %v1195
    %v1595 = vunpack.c.l.b16 %v1196
    %v1596 = vunpack.c.h.b16 %v1196
    %v1597 = vunpack.c.l.b16 %v1197
    %v1598 = vunpack.c.h.b16 %v1197
    %v1599 = vunpack.c.l.b16 %v1198
    %v1600 = vunpack.c.h.b16 %v1198
    %v1601 = vunpack.c.l.b16 %v1199
    %v1602 = vunpack.c.h.b16 %v1199
    %v1603 = vunpack.c.l.b16 %v1200
    %v1604 = vunpack.c.h.b16 %v1200
    %v1605 = vunpack.c.l.b16 %v1201
    %v1606 = vunpack.c.h.b16 %v1201
    %v1607 = vunpack.c.l.b16 %v1202
    %v1608 = vunpack.c.h.b16 %v1202
    %v1609 = vpack.c.b16 %v1357, %v1353
    %v1610 = vpack.c.b16 %v1358, %v1354
    %v1611 = vpack.c.b16 %v1359, %v1355
    %v1612 = vpack.c.b16 %v1360, %v1356
    %v1613 = vpack.c.b16 %v1365, %v1361
    %v1614 = vpack.c.b16 %v1366, %v1362
    %v1615 = vpack.c.b16 %v1367, %v1363
    %v1616 = vpack.c.b16 %v1368, %v1364
    %v1617 = vpack.c.b16 %v1373, %v1369
    %v1618 = vpack.c.b16 %v1374, %v1370
    %v1619 = vpack.c.b16 %v1375, %v1371
    %v1620 = vpack.c.b16 %v1376, %v1372
    %v1621 = vpack.c.b16 %v1381, %v1377
    %v1622 = vpack.c.b16 %v1382, %v1378
    %v1623 = vpack.c.b16 %v1383, %v1379
    %v1624 = vpack.c.b16 %v1384, %v1380
    %v1625 = vpack.c.b16 %v1389, %v1385
    %v1626 = vpack.c.b16 %v1390, %v1386
    %v1627 = vpack.c.b16 %v1391, %v1387
    %v1628 = vpack.c.b16 %v1392, %v1388
    %v1629 = vpack.c.b16 %v1397, %v1393
    %v1630 = vpack.c.b16 %v1398, %v1394
    %v1631 = vpack.c.b16 %v1399, %v1395
    %v1632 = vpack.c.b16 %v1400, %v1396
    %v1633 = vpack.c.b16 %v1405, %v1401
    %v1634 = vpack.c.b16 %v1406, %v1402
    %v1635 = vpack.c.b16 %v1407, %v1403
    %v1636 = vpack.c.b16 %v1408, %v1404
    %v1637 = vpack.c.b16 %v1413, %v1409
    %v1638 = vpack.c.b16 %v1414, %v1410
    %v1639 = vpack.c.b16 %v1415, %v1411
    %v1640 = vpack.c.b16 %v1416, %v1412
    %v1641 = vpack.c.b16 %v1421, %v1417
    %v1642 = vpack.c.b16 %v1422, %v1418
    %v1643 = vpack.c.b16 %v1423, %v1419
    %v1644 = vpack.c.b16 %v1424, %v1420
    %v1645 = vpack.c.b16 %v1429, %v1425
    %v1646 = vpack.c.b16 %v1430, %v1426
    %v1647 = vpack.c.b16 %v1431, %v1427
    %v1648 = vpack.c.b16 %v1432, %v1428
    %v1649 = vpack.c.b16 %v1437, %v1433
    %v1650 = vpack.c.b16 %v1438, %v1434
    %v1651 = vpack.c.b16 %v1439, %v1435
    %v1652 = vpack.c.b16 %v1440, %v1436
    %v1653 = vpack.c.b16 %v1445, %v1441
    %v1654 = vpack.c.b16 %v1446, %v1442
    %v1655 = vpack.c.b16 %v1447, %v1443
    %v1656 = vpack.c.b16 %v1448, %v1444
    %v1657 = vpack.c.b16 %v1453, %v1449
    %v1658 = vpack.c.b16 %v1454, %v1450
    %v1659 = vpack.c.b16 %v1455, %v1451
    %v1660 = vpack.c.b16 %v1456, %v1452
    %v1661 = vpack.c.b16 %v1461, %v1457
    %v1662 = vpack.c.b16 %v1462, %v1458
    %v1663 = vpack.c.b16 %v1463, %v1459
    %v1664 = vpack.c.b16 %v1464, %v1460
    %v1665 = vpack.c.b16 %v1469, %v1465
    %v1666 = vpack.c.b16 %v1470, %v1466
    %v1667 = vpack.c.b16 %v1471, %v1467
    %v1668 = vpack.c.b16 %v1472, %v1468
    %v1669 = vpack.c.b16 %v1477, %v1473
    %v1670 = vpack.c.b16 %v1478, %v1474
    %v1671 = vpack.c.b16 %v1479, %v1475
    %v1672 = vpack.c.b16 %v1480, %v1476
    %v1673 = vpack.c.b16 %v1485, %v1481
    %v1674 = vpack.c.b16 %v1486, %v1482
    %v1675 = vpack.c.b16 %v1487, %v1483
    %v1676 = vpack.c.b16 %v1488, %v1484
    %v1677 = vpack.c.b16 %v1493, %v1489
    %v1678 = vpack.c.b16 %v1494, %v1490
    %v1679 = vpack.c.b16 %v1495, %v1491
    %v1680 = vpack.c.b16 %v1496, %v1492
    %v1681 = vpack.c.b16 %v1501, %v1497
    %v1682 = vpack.c.b16 %v1502, %v1498
    %v1683 = vpack.c.b16 %v1503, %v1499
    %v1684 = vpack.c.b16 %v1504, %v1500
    %v1685 = vpack.c.b16 %v1509, %v1505
    %v1686 = vpack.c.b16 %v1510, %v1506
    %v1687 = vpack.c.b16 %v1511, %v1507
    %v1688 = vpack.c.b16 %v1512, %v1508
    %v1689 = vpack.c.b16 %v1517, %v1513
    %v1690 = vpack.c.b16 %v1518, %v1514
    %v1691 = vpack.c.b16 %v1519, %v1515
    %v1692 = vpack.c.b16 %v1520, %v1516
    %v1693 = vpack.c.b16 %v1525, %v1521
    %v1694 = vpack.c.b16 %v1526, %v1522
    %v1695 = vpack.c.b16 %v1527, %v1523
    %v1696 = vpack.c.b16 %v1528, %v1524
    %v1697 = vpack.c.b16 %v1533, %v1529
    %v1698 = vpack.c.b16 %v1534, %v1530
    %v1699 = vpack.c.b16 %v1535, %v1531
    %v1700 = vpack.c.b16 %v1536, %v1532
    %v1701 = vpack.c.b16 %v1541, %v1537
    %v1702 = vpack.c.b16 %v1542, %v1538
    %v1703 = vpack.c.b16 %v1543, %v1539
    %v1704 = vpack.c.b16 %v1544, %v1540
    %v1705 = vpack.c.b16 %v1549, %v1545
    %v1706 = vpack.c.b16 %v1550, %v1546
    %v1707 = vpack.c.b16 %v1551, %v1547
    %v1708 = vpack.c.b16 %v1552, %v1548
    %v1709 = vpack.c.b16 %v1557, %v1553
    %v1710 = vpack.c.b16 %v1558, %v1554
    %v1711 = vpack.c.b16 %v1559, %v1555
    %v1712 = vpack.c.b16 %v1560, %v1556
    %v1713 = vpack.c.b16 %v1565, %v1561
    %v1714 = vpack.c.b16 %v1566, %v1562
    %v1715 = vpack.c.b16 %v1567, %v1563
    %v1716 = vpack.c.b16 %v1568, %v1564
    %v1717 = vpack.c.b16 %v1573, %v1569
    %v1718 = vpack.c.b16 %v1574, %v1570
    %v1719 = vpack.c.b16 %v1575, %v1571
    %v1720 = vpack.c.b16 %v1576, %v1572
    %v1721 = vpack.c.b16 %v1581, %v1577
    %v1722 = vpack.c.b16 %v1582, %v1578
    %v1723 = vpack.c.b16 %v1583, %v1579
    %v1724 = vpack.c.b16 %v1584, %v1580
    %v1725 = vpack.c.b16 %v1589, %v1585
    %v1726 = vpack.c.b16 %v1590, %v1586
    %v1727 = vpack.c.b16 %v1591, %v1587
    %v1728 = vpack.c.b16 %v1592, %v1588
    %v1729 = vpack.c.b16 %v1597, %v1593
    %v1730 = vpack.c.b16 %v1598, %v1594
    %v1731 = vpack.c.b16 %v1599, %v1595
    %v1732 = vpack.c.b16 %v1600, %v1596
    %v1733 = vpack.c.b16 %v1605, %v1601
    %v1734 = vpack.c.b16 %v1606, %v1602
    %v1735 = vpack.c.b16 %v1607, %v1603
    %v1736 = vpack.c.b16 %v1608, %v1604
    %1865 = vmatprep.subr.bf16.mxu0 %v1610
    %1866 = vmatpush1.bf16.msra.mxu0 %v1609
    %1867 = vmatprep.subr.bf16.mxu0 %v1614
    %1868 = vmatpush1.bf16.msra.mxu0 %v1613
    %1869 = vmatprep.subr.bf16.mxu0 %v1618
    %1870 = vmatpush1.bf16.msra.mxu0 %v1617
    %1871 = vmatprep.subr.bf16.mxu0 %v1622
    %1872 = vmatpush1.bf16.msra.mxu0 %v1621
    %1873 = vmatprep.subr.bf16.mxu0 %v1626
    %1874 = vmatpush1.bf16.msra.mxu0 %v1625
    %1875 = vmatprep.subr.bf16.mxu0 %v1630
    %1876 = vmatpush1.bf16.msra.mxu0 %v1629
    %1877 = vmatprep.subr.bf16.mxu0 %v1634
    %1878 = vmatpush1.bf16.msra.mxu0 %v1633
    %1879 = vmatprep.subr.bf16.mxu0 %v1638
    %1880 = vmatpush1.bf16.msra.mxu0 %v1637
    %1881 = vmatprep.subr.bf16.mxu0 %v1642
    %1882 = vmatpush1.bf16.msra.mxu0 %v1641
    %1883 = vmatprep.subr.bf16.mxu0 %v1646
    %1884 = vmatpush1.bf16.msra.mxu0 %v1645
    %1885 = vmatprep.subr.bf16.mxu0 %v1650
    %1886 = vmatpush1.bf16.msra.mxu0 %v1649
    %1887 = vmatprep.subr.bf16.mxu0 %v1654
    %1888 = vmatpush1.bf16.msra.mxu0 %v1653
    %1889 = vmatprep.subr.bf16.mxu0 %v1658
    %1890 = vmatpush1.bf16.msra.mxu0 %v1657
    %1891 = vmatprep.subr.bf16.mxu0 %v1662
    %1892 = vmatpush1.bf16.msra.mxu0 %v1661
    %1893 = vmatprep.subr.bf16.mxu0 %v1666
    %1894 = vmatpush1.bf16.msra.mxu0 %v1665
    %1895 = vmatprep.subr.bf16.mxu0 %v1670
    %1896 = vmatpush1.bf16.msra.mxu0 %v1669
    %1897 = vmatprep.mubr.bf16.mxu0 %v1072
    %1898 = vmatmul.mubr.bf16.gmra.mrb[0].mxu0 %v1071
    %v1899 = vpop.f32.mrb[0].mxu0
    %v1900 = vadd.f32 %v1208, %v1899
    %v1901 = vpop.f32.mrb[0].mxu0
    %v1902 = vadd.f32 %v1212, %v1901
    %v1903 = vpop.f32.mrb[0].mxu0
    %v1904 = vpop.f32.mrb[0].mxu0
    %1905 = vdwg.mxu0
    %1906 = vmatprep.subr.bf16.mxu0 %v1674
    %1907 = vmatpush1.bf16.msra.mxu0 %v1673
    %1908 = vmatprep.subr.bf16.mxu0 %v1678
    %1909 = vmatpush1.bf16.msra.mxu0 %v1677
    %1910 = vmatprep.subr.bf16.mxu0 %v1682
    %1911 = vmatpush1.bf16.msra.mxu0 %v1681
    %1912 = vmatprep.subr.bf16.mxu0 %v1686
    %1913 = vmatpush1.bf16.msra.mxu0 %v1685
    %1914 = vmatprep.subr.bf16.mxu0 %v1690
    %1915 = vmatpush1.bf16.msra.mxu0 %v1689
    %1916 = vmatprep.subr.bf16.mxu0 %v1694
    %1917 = vmatpush1.bf16.msra.mxu0 %v1693
    %1918 = vmatprep.subr.bf16.mxu0 %v1698
    %1919 = vmatpush1.bf16.msra.mxu0 %v1697
    %1920 = vmatprep.subr.bf16.mxu0 %v1702
    %1921 = vmatpush1.bf16.msra.mxu0 %v1701
    %1922 = vmatprep.subr.bf16.mxu0 %v1706
    %1923 = vmatpush1.bf16.msra.mxu0 %v1705
    %1924 = vmatprep.subr.bf16.mxu0 %v1710
    %1925 = vmatpush1.bf16.msra.mxu0 %v1709
    %1926 = vmatprep.subr.bf16.mxu0 %v1714
    %1927 = vmatpush1.bf16.msra.mxu0 %v1713
    %1928 = vmatprep.subr.bf16.mxu0 %v1718
    %1929 = vmatpush1.bf16.msra.mxu0 %v1717
    %1930 = vmatprep.subr.bf16.mxu0 %v1722
    %1931 = vmatpush1.bf16.msra.mxu0 %v1721
    %1932 = vmatprep.subr.bf16.mxu0 %v1726
    %1933 = vmatpush1.bf16.msra.mxu0 %v1725
    %1934 = vmatprep.subr.bf16.mxu0 %v1730
    %1935 = vmatpush1.bf16.msra.mxu0 %v1729
    %1936 = vmatprep.subr.bf16.mxu0 %v1734
    %1937 = vmatpush1.bf16.msra.mxu0 %v1733
    %1938 = vmatprep.mubr.bf16.mxu0 %v1074
    %1939 = vmatmul.mubr.bf16.gmra.mrb[0].mxu0 %v1073
    %v1940 = vpop.f32.mrb[0].mxu0
    %v1941 = vadd.f32 %v1900, %v1940
    %v1942 = vpop.f32.mrb[0].mxu0
    %v1943 = vadd.f32 %v1902, %v1942
    %v1944 = vpop.f32.mrb[0].mxu0
    %v1945 = vpop.f32.mrb[0].mxu0
    %1946 = vdwg.mxu0
    %1947 = vmatprep.subr.bf16.mxu0 %v1612
    %1948 = vmatpush1.bf16.msra.mxu0 %v1611
    %1949 = vmatprep.subr.bf16.mxu0 %v1616
    %1950 = vmatpush1.bf16.msra.mxu0 %v1615
    %1951 = vmatprep.subr.bf16.mxu0 %v1620
    %1952 = vmatpush1.bf16.msra.mxu0 %v1619
    %1953 = vmatprep.subr.bf16.mxu0 %v1624
    %1954 = vmatpush1.bf16.msra.mxu0 %v1623
    %1955 = vmatprep.subr.bf16.mxu0 %v1628
    %1956 = vmatpush1.bf16.msra.mxu0 %v1627
    %1957 = vmatprep.subr.bf16.mxu0 %v1632
    %1958 = vmatpush1.bf16.msra.mxu0 %v1631
    %1959 = vmatprep.subr.bf16.mxu0 %v1636
    %1960 = vmatpush1.bf16.msra.mxu0 %v1635
    %1961 = vmatprep.subr.bf16.mxu0 %v1640
    %1962 = vmatpush1.bf16.msra.mxu0 %v1639
    %1963 = vmatprep.subr.bf16.mxu0 %v1644
    %1964 = vmatpush1.bf16.msra.mxu0 %v1643
    %1965 = vmatprep.subr.bf16.mxu0 %v1648
    %1966 = vmatpush1.bf16.msra.mxu0 %v1647
    %1967 = vmatprep.subr.bf16.mxu0 %v1652
    %1968 = vmatpush1.bf16.msra.mxu0 %v1651
    %1969 = vmatprep.subr.bf16.mxu0 %v1656
    %1970 = vmatpush1.bf16.msra.mxu0 %v1655
    %1971 = vmatprep.subr.bf16.mxu0 %v1660
    %1972 = vmatpush1.bf16.msra.mxu0 %v1659
    %1973 = vmatprep.subr.bf16.mxu0 %v1664
    %1974 = vmatpush1.bf16.msra.mxu0 %v1663
    %1975 = vmatprep.subr.bf16.mxu0 %v1668
    %1976 = vmatpush1.bf16.msra.mxu0 %v1667
    %1977 = vmatprep.subr.bf16.mxu0 %v1672
    %1978 = vmatpush1.bf16.msra.mxu0 %v1671
    %1979 = vmatprep.mubr.bf16.mxu0 %v1072
    %1980 = vmatmul.mubr.bf16.gmra.mrb[0].mxu0 %v1071
    %v1981 = vpop.f32.mrb[0].mxu0
    %v1982 = vadd.f32 %v1216, %v1981
    %v1983 = vpop.f32.mrb[0].mxu0
    %v1984 = vadd.f32 %v1220, %v1983
    %v1985 = vpop.f32.mrb[0].mxu0
    %v1986 = vpop.f32.mrb[0].mxu0
    %1987 = vdwg.mxu0
    %1988 = vmatprep.subr.bf16.mxu0 %v1676
    %1989 = vmatpush1.bf16.msra.mxu0 %v1675
    %1990 = vmatprep.subr.bf16.mxu0 %v1680
    %1991 = vmatpush1.bf16.msra.mxu0 %v1679
    %1992 = vmatprep.subr.bf16.mxu0 %v1684
    %1993 = vmatpush1.bf16.msra.mxu0 %v1683
    %1994 = vmatprep.subr.bf16.mxu0 %v1688
    %1995 = vmatpush1.bf16.msra.mxu0 %v1687
    %1996 = vmatprep.subr.bf16.mxu0 %v1692
    %1997 = vmatpush1.bf16.msra.mxu0 %v1691
    %1998 = vmatprep.subr.bf16.mxu0 %v1696
    %1999 = vmatpush1.bf16.msra.mxu0 %v1695
    %2000 = vmatprep.subr.bf16.mxu0 %v1700
    %2001 = vmatpush1.bf16.msra.mxu0 %v1699
    %2002 = vmatprep.subr.bf16.mxu0 %v1704
    %2003 = vmatpush1.bf16.msra.mxu0 %v1703
    %2004 = vmatprep.subr.bf16.mxu0 %v1708
    %2005 = vmatpush1.bf16.msra.mxu0 %v1707
    %2006 = vmatprep.subr.bf16.mxu0 %v1712
    %2007 = vmatpush1.bf16.msra.mxu0 %v1711
    %2008 = vmatprep.subr.bf16.mxu0 %v1716
    %2009 = vmatpush1.bf16.msra.mxu0 %v1715
    %2010 = vmatprep.subr.bf16.mxu0 %v1720
    %2011 = vmatpush1.bf16.msra.mxu0 %v1719
    %2012 = vmatprep.subr.bf16.mxu0 %v1724
    %2013 = vmatpush1.bf16.msra.mxu0 %v1723
    %2014 = vmatprep.subr.bf16.mxu0 %v1728
    %2015 = vmatpush1.bf16.msra.mxu0 %v1727
    %2016 = vmatprep.subr.bf16.mxu0 %v1732
    %2017 = vmatpush1.bf16.msra.mxu0 %v1731
    %2018 = vmatprep.subr.bf16.mxu0 %v1736
    %2019 = vmatpush1.bf16.msra.mxu0 %v1735
    %2020 = vmatprep.mubr.bf16.mxu0 %v1074
    %2021 = vmatmul.mubr.bf16.gmra.mrb[0].mxu0 %v1073
    %v2022 = vpop.f32.mrb[0].mxu0
    %v2023 = vadd.f32 %v1982, %v2022
    %v2024 = vpop.f32.mrb[0].mxu0
    %v2025 = vadd.f32 %v1984, %v2024
    %v2026 = vpop.f32.mrb[0].mxu0
    %v2027 = vpop.f32.mrb[0].mxu0
    %2028 = vdwg.mxu0
    %v2029 = vmax.f32 %v1941, 0.0
    %v2030 = vmax.f32 %v1943, 0.0
    %v2031 = vmax.f32 %v2023, 0.0
    %v2032 = vmax.f32 %v2025, 0.0
    %v2033 = vpack.c.bf16 %v2029, %v2029
    %v2034 = vpack.c.bf16 %v2030, %v2030
    %v2035 = vpack.c.bf16 %v2031, %v2031
    %v2036 = vpack.c.bf16 %v2032, %v2032
    %v2037 = vld [vmem:[#allocation14] sm:$0xff]
    %v2038 = vld [vmem:[#allocation14 + $0x8] sm:$0xff]
    %v2039 = vld [vmem:[#allocation14 + $0x10] sm:$0xff]
    %v2040 = vld [vmem:[#allocation14 + $0x18] sm:$0xff]
    %v2041 = vld [vmem:[#allocation14 + $0x20] sm:$0xff]
    %v2042 = vld [vmem:[#allocation14 + $0x28] sm:$0xff]
    %v2043 = vld [vmem:[#allocation14 + $0x30] sm:$0xff]
    %v2044 = vld [vmem:[#allocation14 + $0x38] sm:$0xff]
    %v2045 = vld [vmem:[#allocation14 + $0x40] sm:$0xff]
    %v2046 = vld [vmem:[#allocation14 + $0x48] sm:$0xff]
    %v2047 = vld [vmem:[#allocation14 + $0x50] sm:$0xff]
    %v2048 = vld [vmem:[#allocation14 + $0x58] sm:$0xff]
    %v2049 = vld [vmem:[#allocation14 + $0x60] sm:$0xff]
    %v2050 = vld [vmem:[#allocation14 + $0x68] sm:$0xff]
    %v2051 = vld [vmem:[#allocation14 + $0x70] sm:$0xff]
    %v2052 = vld [vmem:[#allocation14 + $0x78] sm:$0xff]
    %v2053 = vld [vmem:[#allocation14 + $0x80] sm:$0xff]
    %v2054 = vld [vmem:[#allocation14 + $0x88] sm:$0xff]
    %v2055 = vld [vmem:[#allocation14 + $0x90] sm:$0xff]
    %v2056 = vld [vmem:[#allocation14 + $0x98] sm:$0xff]
    %v2057 = vld [vmem:[#allocation14 + $0xa0] sm:$0xff]
    %v2058 = vld [vmem:[#allocation14 + $0xa8] sm:$0xff]
    %v2059 = vld [vmem:[#allocation14 + $0xb0] sm:$0xff]
    %v2060 = vld [vmem:[#allocation14 + $0xb8] sm:$0xff]
    %v2061 = vld [vmem:[#allocation14 + $0xc0] sm:$0xff]
    %v2062 = vld [vmem:[#allocation14 + $0xc8] sm:$0xff]
    %v2063 = vld [vmem:[#allocation14 + $0xd0] sm:$0xff]
    %v2064 = vld [vmem:[#allocation14 + $0xd8] sm:$0xff]
    %v2065 = vld [vmem:[#allocation14 + $0xe0] sm:$0xff]
    %v2066 = vld [vmem:[#allocation14 + $0xe8] sm:$0xff]
    %v2067 = vld [vmem:[#allocation14 + $0xf0] sm:$0xff]
    %v2068 = vld [vmem:[#allocation14 + $0xf8] sm:$0xff]
    %v2069 = vld [vmem:[#allocation14 + $0x100] sm:$0xff]
    %v2070 = vld [vmem:[#allocation14 + $0x108] sm:$0xff]
    %v2071 = vld [vmem:[#allocation14 + $0x110] sm:$0xff]
    %v2072 = vld [vmem:[#allocation14 + $0x118] sm:$0xff]
    %v2073 = vld [vmem:[#allocation14 + $0x120] sm:$0xff]
    %v2074 = vld [vmem:[#allocation14 + $0x128] sm:$0xff]
    %v2075 = vld [vmem:[#allocation14 + $0x130] sm:$0xff]
    %v2076 = vld [vmem:[#allocation14 + $0x138] sm:$0xff]
    %v2077 = vld [vmem:[#allocation14 + $0x140] sm:$0xff]
    %v2078 = vld [vmem:[#allocation14 + $0x148] sm:$0xff]
    %v2079 = vld [vmem:[#allocation14 + $0x150] sm:$0xff]
    %v2080 = vld [vmem:[#allocation14 + $0x158] sm:$0xff]
    %v2081 = vld [vmem:[#allocation14 + $0x160] sm:$0xff]
    %v2082 = vld [vmem:[#allocation14 + $0x168] sm:$0xff]
    %v2083 = vld [vmem:[#allocation14 + $0x170] sm:$0xff]
    %v2084 = vld [vmem:[#allocation14 + $0x178] sm:$0xff]
    %v2085 = vld [vmem:[#allocation14 + $0x180] sm:$0xff]
    %v2086 = vld [vmem:[#allocation14 + $0x188] sm:$0xff]
    %v2087 = vld [vmem:[#allocation14 + $0x190] sm:$0xff]
    %v2088 = vld [vmem:[#allocation14 + $0x198] sm:$0xff]
    %v2089 = vld [vmem:[#allocation14 + $0x1a0] sm:$0xff]
    %v2090 = vld [vmem:[#allocation14 + $0x1a8] sm:$0xff]
    %v2091 = vld [vmem:[#allocation14 + $0x1b0] sm:$0xff]
    %v2092 = vld [vmem:[#allocation14 + $0x1b8] sm:$0xff]
    %v2093 = vld [vmem:[#allocation14 + $0x1c0] sm:$0xff]
    %v2094 = vld [vmem:[#allocation14 + $0x1c8] sm:$0xff]
    %v2095 = vld [vmem:[#allocation14 + $0x1d0] sm:$0xff]
    %v2096 = vld [vmem:[#allocation14 + $0x1d8] sm:$0xff]
    %v2097 = vld [vmem:[#allocation14 + $0x1e0] sm:$0xff]
    %v2098 = vld [vmem:[#allocation14 + $0x1e8] sm:$0xff]
    %v2099 = vld [vmem:[#allocation14 + $0x1f0] sm:$0xff]
    %v2100 = vld [vmem:[#allocation14 + $0x1f8] sm:$0xff]
    %v2101 = vld [vmem:[#allocation14 + $0x200] sm:$0xff]
    %v2102 = vld [vmem:[#allocation14 + $0x208] sm:$0xff]
    %v2103 = vld [vmem:[#allocation14 + $0x210] sm:$0xff]
    %v2104 = vld [vmem:[#allocation14 + $0x218] sm:$0xff]
    %v2105 = vld [vmem:[#allocation14 + $0x220] sm:$0xff]
    %v2106 = vld [vmem:[#allocation14 + $0x228] sm:$0xff]
    %v2107 = vld [vmem:[#allocation14 + $0x230] sm:$0xff]
    %v2108 = vld [vmem:[#allocation14 + $0x238] sm:$0xff]
    %v2109 = vld [vmem:[#allocation14 + $0x240] sm:$0xff]
    %v2110 = vld [vmem:[#allocation14 + $0x248] sm:$0xff]
    %v2111 = vld [vmem:[#allocation14 + $0x250] sm:$0xff]
    %v2112 = vld [vmem:[#allocation14 + $0x258] sm:$0xff]
    %v2113 = vld [vmem:[#allocation14 + $0x260] sm:$0xff]
    %v2114 = vld [vmem:[#allocation14 + $0x268] sm:$0xff]
    %v2115 = vld [vmem:[#allocation14 + $0x270] sm:$0xff]
    %v2116 = vld [vmem:[#allocation14 + $0x278] sm:$0xff]
    %v2117 = vld [vmem:[#allocation14 + $0x280] sm:$0xff]
    %v2118 = vld [vmem:[#allocation14 + $0x288] sm:$0xff]
    %v2119 = vld [vmem:[#allocation14 + $0x290] sm:$0xff]
    %v2120 = vld [vmem:[#allocation14 + $0x298] sm:$0xff]
    %v2121 = vld [vmem:[#allocation14 + $0x2a0] sm:$0xff]
    %v2122 = vld [vmem:[#allocation14 + $0x2a8] sm:$0xff]
    %v2123 = vld [vmem:[#allocation14 + $0x2b0] sm:$0xff]
    %v2124 = vld [vmem:[#allocation14 + $0x2b8] sm:$0xff]
    %v2125 = vld [vmem:[#allocation14 + $0x2c0] sm:$0xff]
    %v2126 = vld [vmem:[#allocation14 + $0x2c8] sm:$0xff]
    %v2127 = vld [vmem:[#allocation14 + $0x2d0] sm:$0xff]
    %v2128 = vld [vmem:[#allocation14 + $0x2d8] sm:$0xff]
    %v2129 = vld [vmem:[#allocation14 + $0x2e0] sm:$0xff]
    %v2130 = vld [vmem:[#allocation14 + $0x2e8] sm:$0xff]
    %v2131 = vld [vmem:[#allocation14 + $0x2f0] sm:$0xff]
    %v2132 = vld [vmem:[#allocation14 + $0x2f8] sm:$0xff]
    %v2133 = vld [vmem:[#allocation14 + $0x300] sm:$0xff]
    %v2134 = vld [vmem:[#allocation14 + $0x308] sm:$0xff]
    %v2135 = vld [vmem:[#allocation14 + $0x310] sm:$0xff]
    %v2136 = vld [vmem:[#allocation14 + $0x318] sm:$0xff]
    %v2137 = vld [vmem:[#allocation14 + $0x320] sm:$0xff]
    %v2138 = vld [vmem:[#allocation14 + $0x328] sm:$0xff]
    %v2139 = vld [vmem:[#allocation14 + $0x330] sm:$0xff]
    %v2140 = vld [vmem:[#allocation14 + $0x338] sm:$0xff]
    %v2141 = vld [vmem:[#allocation14 + $0x340] sm:$0xff]
    %v2142 = vld [vmem:[#allocation14 + $0x348] sm:$0xff]
    %v2143 = vld [vmem:[#allocation14 + $0x350] sm:$0xff]
    %v2144 = vld [vmem:[#allocation14 + $0x358] sm:$0xff]
    %v2145 = vld [vmem:[#allocation14 + $0x360] sm:$0xff]
    %v2146 = vld [vmem:[#allocation14 + $0x368] sm:$0xff]
    %v2147 = vld [vmem:[#allocation14 + $0x370] sm:$0xff]
    %v2148 = vld [vmem:[#allocation14 + $0x378] sm:$0xff]
    %v2149 = vld [vmem:[#allocation14 + $0x380] sm:$0xff]
    %v2150 = vld [vmem:[#allocation14 + $0x388] sm:$0xff]
    %v2151 = vld [vmem:[#allocation14 + $0x390] sm:$0xff]
    %v2152 = vld [vmem:[#allocation14 + $0x398] sm:$0xff]
    %v2153 = vld [vmem:[#allocation14 + $0x3a0] sm:$0xff]
    %v2154 = vld [vmem:[#allocation14 + $0x3a8] sm:$0xff]
    %v2155 = vld [vmem:[#allocation14 + $0x3b0] sm:$0xff]
    %v2156 = vld [vmem:[#allocation14 + $0x3b8] sm:$0xff]
    %v2157 = vld [vmem:[#allocation14 + $0x3c0] sm:$0xff]
    %v2158 = vld [vmem:[#allocation14 + $0x3c8] sm:$0xff]
    %v2159 = vld [vmem:[#allocation14 + $0x3d0] sm:$0xff]
    %v2160 = vld [vmem:[#allocation14 + $0x3d8] sm:$0xff]
    %v2161 = vld [vmem:[#allocation14 + $0x3e0] sm:$0xff]
    %v2162 = vld [vmem:[#allocation14 + $0x3e8] sm:$0xff]
    %v2163 = vld [vmem:[#allocation14 + $0x3f0] sm:$0xff]
    %v2164 = vld [vmem:[#allocation14 + $0x3f8] sm:$0xff]
    %v2165 = vld [vmem:[%s12] sm:$0xf]
    %v2167 = vlaneseq
    %v2168 = vshrl.u32 %v2167, 7
    %v2169 = vsub.s32 0, %v2168
    %v2170 = vrot.slane %v2165, %v2169
    %v2171 = vlaneseq
    %v2172 = vshrl.u32 %v2171, 7
    %v2173 = vsub.s32 1, %v2172
    %v2174 = vrot.slane %v2165, %v2173
    %v2175 = vlaneseq
    %v2176 = vshrl.u32 %v2175, 7
    %v2177 = vsub.s32 2, %v2176
    %v2178 = vrot.slane %v2165, %v2177
    %v2179 = vlaneseq
    %v2180 = vshrl.u32 %v2179, 7
    %v2181 = vsub.s32 3, %v2180
    %v2182 = vrot.slane %v2165, %v2181
    %v2315 = vunpack.c.l.b16 %v2037
    %v2316 = vunpack.c.h.b16 %v2037
    %v2317 = vunpack.c.l.b16 %v2038
    %v2318 = vunpack.c.h.b16 %v2038
    %v2319 = vunpack.c.l.b16 %v2039
    %v2320 = vunpack.c.h.b16 %v2039
    %v2321 = vunpack.c.l.b16 %v2040
    %v2322 = vunpack.c.h.b16 %v2040
    %v2323 = vunpack.c.l.b16 %v2041
    %v2324 = vunpack.c.h.b16 %v2041
    %v2325 = vunpack.c.l.b16 %v2042
    %v2326 = vunpack.c.h.b16 %v2042
    %v2327 = vunpack.c.l.b16 %v2043
    %v2328 = vunpack.c.h.b16 %v2043
    %v2329 = vunpack.c.l.b16 %v2044
    %v2330 = vunpack.c.h.b16 %v2044
    %v2331 = vunpack.c.l.b16 %v2045
    %v2332 = vunpack.c.h.b16 %v2045
    %v2333 = vunpack.c.l.b16 %v2046
    %v2334 = vunpack.c.h.b16 %v2046
    %v2335 = vunpack.c.l.b16 %v2047
    %v2336 = vunpack.c.h.b16 %v2047
    %v2337 = vunpack.c.l.b16 %v2048
    %v2338 = vunpack.c.h.b16 %v2048
    %v2339 = vunpack.c.l.b16 %v2049
    %v2340 = vunpack.c.h.b16 %v2049
    %v2341 = vunpack.c.l.b16 %v2050
    %v2342 = vunpack.c.h.b16 %v2050
    %v2343 = vunpack.c.l.b16 %v2051
    %v2344 = vunpack.c.h.b16 %v2051
    %v2345 = vunpack.c.l.b16 %v2052
    %v2346 = vunpack.c.h.b16 %v2052
    %v2347 = vunpack.c.l.b16 %v2053
    %v2348 = vunpack.c.h.b16 %v2053
    %v2349 = vunpack.c.l.b16 %v2054
    %v2350 = vunpack.c.h.b16 %v2054
    %v2351 = vunpack.c.l.b16 %v2055
    %v2352 = vunpack.c.h.b16 %v2055
    %v2353 = vunpack.c.l.b16 %v2056
    %v2354 = vunpack.c.h.b16 %v2056
    %v2355 = vunpack.c.l.b16 %v2057
    %v2356 = vunpack.c.h.b16 %v2057
    %v2357 = vunpack.c.l.b16 %v2058
    %v2358 = vunpack.c.h.b16 %v2058
    %v2359 = vunpack.c.l.b16 %v2059
    %v2360 = vunpack.c.h.b16 %v2059
    %v2361 = vunpack.c.l.b16 %v2060
    %v2362 = vunpack.c.h.b16 %v2060
    %v2363 = vunpack.c.l.b16 %v2061
    %v2364 = vunpack.c.h.b16 %v2061
    %v2365 = vunpack.c.l.b16 %v2062
    %v2366 = vunpack.c.h.b16 %v2062
    %v2367 = vunpack.c.l.b16 %v2063
    %v2368 = vunpack.c.h.b16 %v2063
    %v2369 = vunpack.c.l.b16 %v2064
    %v2370 = vunpack.c.h.b16 %v2064
    %v2371 = vunpack.c.l.b16 %v2065
    %v2372 = vunpack.c.h.b16 %v2065
    %v2373 = vunpack.c.l.b16 %v2066
    %v2374 = vunpack.c.h.b16 %v2066
    %v2375 = vunpack.c.l.b16 %v2067
    %v2376 = vunpack.c.h.b16 %v2067
    %v2377 = vunpack.c.l.b16 %v2068
    %v2378 = vunpack.c.h.b16 %v2068
    %v2379 = vunpack.c.l.b16 %v2069
    %v2380 = vunpack.c.h.b16 %v2069
    %v2381 = vunpack.c.l.b16 %v2070
    %v2382 = vunpack.c.h.b16 %v2070
    %v2383 = vunpack.c.l.b16 %v2071
    %v2384 = vunpack.c.h.b16 %v2071
    %v2385 = vunpack.c.l.b16 %v2072
    %v2386 = vunpack.c.h.b16 %v2072
    %v2387 = vunpack.c.l.b16 %v2073
    %v2388 = vunpack.c.h.b16 %v2073
    %v2389 = vunpack.c.l.b16 %v2074
    %v2390 = vunpack.c.h.b16 %v2074
    %v2391 = vunpack.c.l.b16 %v2075
    %v2392 = vunpack.c.h.b16 %v2075
    %v2393 = vunpack.c.l.b16 %v2076
    %v2394 = vunpack.c.h.b16 %v2076
    %v2395 = vunpack.c.l.b16 %v2077
    %v2396 = vunpack.c.h.b16 %v2077
    %v2397 = vunpack.c.l.b16 %v2078
    %v2398 = vunpack.c.h.b16 %v2078
    %v2399 = vunpack.c.l.b16 %v2079
    %v2400 = vunpack.c.h.b16 %v2079
    %v2401 = vunpack.c.l.b16 %v2080
    %v2402 = vunpack.c.h.b16 %v2080
    %v2403 = vunpack.c.l.b16 %v2081
    %v2404 = vunpack.c.h.b16 %v2081
    %v2405 = vunpack.c.l.b16 %v2082
    %v2406 = vunpack.c.h.b16 %v2082
    %v2407 = vunpack.c.l.b16 %v2083
    %v2408 = vunpack.c.h.b16 %v2083
    %v2409 = vunpack.c.l.b16 %v2084
    %v2410 = vunpack.c.h.b16 %v2084
    %v2411 = vunpack.c.l.b16 %v2085
    %v2412 = vunpack.c.h.b16 %v2085
    %v2413 = vunpack.c.l.b16 %v2086
    %v2414 = vunpack.c.h.b16 %v2086
    %v2415 = vunpack.c.l.b16 %v2087
    %v2416 = vunpack.c.h.b16 %v2087
    %v2417 = vunpack.c.l.b16 %v2088
    %v2418 = vunpack.c.h.b16 %v2088
    %v2419 = vunpack.c.l.b16 %v2089
    %v2420 = vunpack.c.h.b16 %v2089
    %v2421 = vunpack.c.l.b16 %v2090
    %v2422 = vunpack.c.h.b16 %v2090
    %v2423 = vunpack.c.l.b16 %v2091
    %v2424 = vunpack.c.h.b16 %v2091
    %v2425 = vunpack.c.l.b16 %v2092
    %v2426 = vunpack.c.h.b16 %v2092
    %v2427 = vunpack.c.l.b16 %v2093
    %v2428 = vunpack.c.h.b16 %v2093
    %v2429 = vunpack.c.l.b16 %v2094
    %v2430 = vunpack.c.h.b16 %v2094
    %v2431 = vunpack.c.l.b16 %v2095
    %v2432 = vunpack.c.h.b16 %v2095
    %v2433 = vunpack.c.l.b16 %v2096
    %v2434 = vunpack.c.h.b16 %v2096
    %v2435 = vunpack.c.l.b16 %v2097
    %v2436 = vunpack.c.h.b16 %v2097
    %v2437 = vunpack.c.l.b16 %v2098
    %v2438 = vunpack.c.h.b16 %v2098
    %v2439 = vunpack.c.l.b16 %v2099
    %v2440 = vunpack.c.h.b16 %v2099
    %v2441 = vunpack.c.l.b16 %v2100
    %v2442 = vunpack.c.h.b16 %v2100
    %v2443 = vunpack.c.l.b16 %v2101
    %v2444 = vunpack.c.h.b16 %v2101
    %v2445 = vunpack.c.l.b16 %v2102
    %v2446 = vunpack.c.h.b16 %v2102
    %v2447 = vunpack.c.l.b16 %v2103
    %v2448 = vunpack.c.h.b16 %v2103
    %v2449 = vunpack.c.l.b16 %v2104
    %v2450 = vunpack.c.h.b16 %v2104
    %v2451 = vunpack.c.l.b16 %v2105
    %v2452 = vunpack.c.h.b16 %v2105
    %v2453 = vunpack.c.l.b16 %v2106
    %v2454 = vunpack.c.h.b16 %v2106
    %v2455 = vunpack.c.l.b16 %v2107
    %v2456 = vunpack.c.h.b16 %v2107
    %v2457 = vunpack.c.l.b16 %v2108
    %v2458 = vunpack.c.h.b16 %v2108
    %v2459 = vunpack.c.l.b16 %v2109
    %v2460 = vunpack.c.h.b16 %v2109
    %v2461 = vunpack.c.l.b16 %v2110
    %v2462 = vunpack.c.h.b16 %v2110
    %v2463 = vunpack.c.l.b16 %v2111
    %v2464 = vunpack.c.h.b16 %v2111
    %v2465 = vunpack.c.l.b16 %v2112
    %v2466 = vunpack.c.h.b16 %v2112
    %v2467 = vunpack.c.l.b16 %v2113
    %v2468 = vunpack.c.h.b16 %v2113
    %v2469 = vunpack.c.l.b16 %v2114
    %v2470 = vunpack.c.h.b16 %v2114
    %v2471 = vunpack.c.l.b16 %v2115
    %v2472 = vunpack.c.h.b16 %v2115
    %v2473 = vunpack.c.l.b16 %v2116
    %v2474 = vunpack.c.h.b16 %v2116
    %v2475 = vunpack.c.l.b16 %v2117
    %v2476 = vunpack.c.h.b16 %v2117
    %v2477 = vunpack.c.l.b16 %v2118
    %v2478 = vunpack.c.h.b16 %v2118
    %v2479 = vunpack.c.l.b16 %v2119
    %v2480 = vunpack.c.h.b16 %v2119
    %v2481 = vunpack.c.l.b16 %v2120
    %v2482 = vunpack.c.h.b16 %v2120
    %v2483 = vunpack.c.l.b16 %v2121
    %v2484 = vunpack.c.h.b16 %v2121
    %v2485 = vunpack.c.l.b16 %v2122
    %v2486 = vunpack.c.h.b16 %v2122
    %v2487 = vunpack.c.l.b16 %v2123
    %v2488 = vunpack.c.h.b16 %v2123
    %v2489 = vunpack.c.l.b16 %v2124
    %v2490 = vunpack.c.h.b16 %v2124
    %v2491 = vunpack.c.l.b16 %v2125
    %v2492 = vunpack.c.h.b16 %v2125
    %v2493 = vunpack.c.l.b16 %v2126
    %v2494 = vunpack.c.h.b16 %v2126
    %v2495 = vunpack.c.l.b16 %v2127
    %v2496 = vunpack.c.h.b16 %v2127
    %v2497 = vunpack.c.l.b16 %v2128
    %v2498 = vunpack.c.h.b16 %v2128
    %v2499 = vunpack.c.l.b16 %v2129
    %v2500 = vunpack.c.h.b16 %v2129
    %v2501 = vunpack.c.l.b16 %v2130
    %v2502 = vunpack.c.h.b16 %v2130
    %v2503 = vunpack.c.l.b16 %v2131
    %v2504 = vunpack.c.h.b16 %v2131
    %v2505 = vunpack.c.l.b16 %v2132
    %v2506 = vunpack.c.h.b16 %v2132
    %v2507 = vunpack.c.l.b16 %v2133
    %v2508 = vunpack.c.h.b16 %v2133
    %v2509 = vunpack.c.l.b16 %v2134
    %v2510 = vunpack.c.h.b16 %v2134
    %v2511 = vunpack.c.l.b16 %v2135
    %v2512 = vunpack.c.h.b16 %v2135
    %v2513 = vunpack.c.l.b16 %v2136
    %v2514 = vunpack.c.h.b16 %v2136
    %v2515 = vunpack.c.l.b16 %v2137
    %v2516 = vunpack.c.h.b16 %v2137
    %v2517 = vunpack.c.l.b16 %v2138
    %v2518 = vunpack.c.h.b16 %v2138
    %v2519 = vunpack.c.l.b16 %v2139
    %v2520 = vunpack.c.h.b16 %v2139
    %v2521 = vunpack.c.l.b16 %v2140
    %v2522 = vunpack.c.h.b16 %v2140
    %v2523 = vunpack.c.l.b16 %v2141
    %v2524 = vunpack.c.h.b16 %v2141
    %v2525 = vunpack.c.l.b16 %v2142
    %v2526 = vunpack.c.h.b16 %v2142
    %v2527 = vunpack.c.l.b16 %v2143
    %v2528 = vunpack.c.h.b16 %v2143
    %v2529 = vunpack.c.l.b16 %v2144
    %v2530 = vunpack.c.h.b16 %v2144
    %v2531 = vunpack.c.l.b16 %v2145
    %v2532 = vunpack.c.h.b16 %v2145
    %v2533 = vunpack.c.l.b16 %v2146
    %v2534 = vunpack.c.h.b16 %v2146
    %v2535 = vunpack.c.l.b16 %v2147
    %v2536 = vunpack.c.h.b16 %v2147
    %v2537 = vunpack.c.l.b16 %v2148
    %v2538 = vunpack.c.h.b16 %v2148
    %v2539 = vunpack.c.l.b16 %v2149
    %v2540 = vunpack.c.h.b16 %v2149
    %v2541 = vunpack.c.l.b16 %v2150
    %v2542 = vunpack.c.h.b16 %v2150
    %v2543 = vunpack.c.l.b16 %v2151
    %v2544 = vunpack.c.h.b16 %v2151
    %v2545 = vunpack.c.l.b16 %v2152
    %v2546 = vunpack.c.h.b16 %v2152
    %v2547 = vunpack.c.l.b16 %v2153
    %v2548 = vunpack.c.h.b16 %v2153
    %v2549 = vunpack.c.l.b16 %v2154
    %v2550 = vunpack.c.h.b16 %v2154
    %v2551 = vunpack.c.l.b16 %v2155
    %v2552 = vunpack.c.h.b16 %v2155
    %v2553 = vunpack.c.l.b16 %v2156
    %v2554 = vunpack.c.h.b16 %v2156
    %v2555 = vunpack.c.l.b16 %v2157
    %v2556 = vunpack.c.h.b16 %v2157
    %v2557 = vunpack.c.l.b16 %v2158
    %v2558 = vunpack.c.h.b16 %v2158
    %v2559 = vunpack.c.l.b16 %v2159
    %v2560 = vunpack.c.h.b16 %v2159
    %v2561 = vunpack.c.l.b16 %v2160
    %v2562 = vunpack.c.h.b16 %v2160
    %v2563 = vunpack.c.l.b16 %v2161
    %v2564 = vunpack.c.h.b16 %v2161
    %v2565 = vunpack.c.l.b16 %v2162
    %v2566 = vunpack.c.h.b16 %v2162
    %v2567 = vunpack.c.l.b16 %v2163
    %v2568 = vunpack.c.h.b16 %v2163
    %v2569 = vunpack.c.l.b16 %v2164
    %v2570 = vunpack.c.h.b16 %v2164
    %v2571 = vpack.c.b16 %v2319, %v2315
    %v2572 = vpack.c.b16 %v2320, %v2316
    %v2573 = vpack.c.b16 %v2321, %v2317
    %v2574 = vpack.c.b16 %v2322, %v2318
    %v2575 = vpack.c.b16 %v2327, %v2323
    %v2576 = vpack.c.b16 %v2328, %v2324
    %v2577 = vpack.c.b16 %v2329, %v2325
    %v2578 = vpack.c.b16 %v2330, %v2326
    %v2579 = vpack.c.b16 %v2335, %v2331
    %v2580 = vpack.c.b16 %v2336, %v2332
    %v2581 = vpack.c.b16 %v2337, %v2333
    %v2582 = vpack.c.b16 %v2338, %v2334
    %v2583 = vpack.c.b16 %v2343, %v2339
    %v2584 = vpack.c.b16 %v2344, %v2340
    %v2585 = vpack.c.b16 %v2345, %v2341
    %v2586 = vpack.c.b16 %v2346, %v2342
    %v2587 = vpack.c.b16 %v2351, %v2347
    %v2588 = vpack.c.b16 %v2352, %v2348
    %v2589 = vpack.c.b16 %v2353, %v2349
    %v2590 = vpack.c.b16 %v2354, %v2350
    %v2591 = vpack.c.b16 %v2359, %v2355
    %v2592 = vpack.c.b16 %v2360, %v2356
    %v2593 = vpack.c.b16 %v2361, %v2357
    %v2594 = vpack.c.b16 %v2362, %v2358
    %v2595 = vpack.c.b16 %v2367, %v2363
    %v2596 = vpack.c.b16 %v2368, %v2364
    %v2597 = vpack.c.b16 %v2369, %v2365
    %v2598 = vpack.c.b16 %v2370, %v2366
    %v2599 = vpack.c.b16 %v2375, %v2371
    %v2600 = vpack.c.b16 %v2376, %v2372
    %v2601 = vpack.c.b16 %v2377, %v2373
    %v2602 = vpack.c.b16 %v2378, %v2374
    %v2603 = vpack.c.b16 %v2383, %v2379
    %v2604 = vpack.c.b16 %v2384, %v2380
    %v2605 = vpack.c.b16 %v2385, %v2381
    %v2606 = vpack.c.b16 %v2386, %v2382
    %v2607 = vpack.c.b16 %v2391, %v2387
    %v2608 = vpack.c.b16 %v2392, %v2388
    %v2609 = vpack.c.b16 %v2393, %v2389
    %v2610 = vpack.c.b16 %v2394, %v2390
    %v2611 = vpack.c.b16 %v2399, %v2395
    %v2612 = vpack.c.b16 %v2400, %v2396
    %v2613 = vpack.c.b16 %v2401, %v2397
    %v2614 = vpack.c.b16 %v2402, %v2398
    %v2615 = vpack.c.b16 %v2407, %v2403
    %v2616 = vpack.c.b16 %v2408, %v2404
    %v2617 = vpack.c.b16 %v2409, %v2405
    %v2618 = vpack.c.b16 %v2410, %v2406
    %v2619 = vpack.c.b16 %v2415, %v2411
    %v2620 = vpack.c.b16 %v2416, %v2412
    %v2621 = vpack.c.b16 %v2417, %v2413
    %v2622 = vpack.c.b16 %v2418, %v2414
    %v2623 = vpack.c.b16 %v2423, %v2419
    %v2624 = vpack.c.b16 %v2424, %v2420
    %v2625 = vpack.c.b16 %v2425, %v2421
    %v2626 = vpack.c.b16 %v2426, %v2422
    %v2627 = vpack.c.b16 %v2431, %v2427
    %v2628 = vpack.c.b16 %v2432, %v2428
    %v2629 = vpack.c.b16 %v2433, %v2429
    %v2630 = vpack.c.b16 %v2434, %v2430
    %v2631 = vpack.c.b16 %v2439, %v2435
    %v2632 = vpack.c.b16 %v2440, %v2436
    %v2633 = vpack.c.b16 %v2441, %v2437
    %v2634 = vpack.c.b16 %v2442, %v2438
    %v2635 = vpack.c.b16 %v2447, %v2443
    %v2636 = vpack.c.b16 %v2448, %v2444
    %v2637 = vpack.c.b16 %v2449, %v2445
    %v2638 = vpack.c.b16 %v2450, %v2446
    %v2639 = vpack.c.b16 %v2455, %v2451
    %v2640 = vpack.c.b16 %v2456, %v2452
    %v2641 = vpack.c.b16 %v2457, %v2453
    %v2642 = vpack.c.b16 %v2458, %v2454
    %v2643 = vpack.c.b16 %v2463, %v2459
    %v2644 = vpack.c.b16 %v2464, %v2460
    %v2645 = vpack.c.b16 %v2465, %v2461
    %v2646 = vpack.c.b16 %v2466, %v2462
    %v2647 = vpack.c.b16 %v2471, %v2467
    %v2648 = vpack.c.b16 %v2472, %v2468
    %v2649 = vpack.c.b16 %v2473, %v2469
    %v2650 = vpack.c.b16 %v2474, %v2470
    %v2651 = vpack.c.b16 %v2479, %v2475
    %v2652 = vpack.c.b16 %v2480, %v2476
    %v2653 = vpack.c.b16 %v2481, %v2477
    %v2654 = vpack.c.b16 %v2482, %v2478
    %v2655 = vpack.c.b16 %v2487, %v2483
    %v2656 = vpack.c.b16 %v2488, %v2484
    %v2657 = vpack.c.b16 %v2489, %v2485
    %v2658 = vpack.c.b16 %v2490, %v2486
    %v2659 = vpack.c.b16 %v2495, %v2491
    %v2660 = vpack.c.b16 %v2496, %v2492
    %v2661 = vpack.c.b16 %v2497, %v2493
    %v2662 = vpack.c.b16 %v2498, %v2494
    %v2663 = vpack.c.b16 %v2503, %v2499
    %v2664 = vpack.c.b16 %v2504, %v2500
    %v2665 = vpack.c.b16 %v2505, %v2501
    %v2666 = vpack.c.b16 %v2506, %v2502
    %v2667 = vpack.c.b16 %v2511, %v2507
    %v2668 = vpack.c.b16 %v2512, %v2508
    %v2669 = vpack.c.b16 %v2513, %v2509
    %v2670 = vpack.c.b16 %v2514, %v2510
    %v2671 = vpack.c.b16 %v2519, %v2515
    %v2672 = vpack.c.b16 %v2520, %v2516
    %v2673 = vpack.c.b16 %v2521, %v2517
    %v2674 = vpack.c.b16 %v2522, %v2518
    %v2675 = vpack.c.b16 %v2527, %v2523
    %v2676 = vpack.c.b16 %v2528, %v2524
    %v2677 = vpack.c.b16 %v2529, %v2525
    %v2678 = vpack.c.b16 %v2530, %v2526
    %v2679 = vpack.c.b16 %v2535, %v2531
    %v2680 = vpack.c.b16 %v2536, %v2532
    %v2681 = vpack.c.b16 %v2537, %v2533
    %v2682 = vpack.c.b16 %v2538, %v2534
    %v2683 = vpack.c.b16 %v2543, %v2539
    %v2684 = vpack.c.b16 %v2544, %v2540
    %v2685 = vpack.c.b16 %v2545, %v2541
    %v2686 = vpack.c.b16 %v2546, %v2542
    %v2687 = vpack.c.b16 %v2551, %v2547
    %v2688 = vpack.c.b16 %v2552, %v2548
    %v2689 = vpack.c.b16 %v2553, %v2549
    %v2690 = vpack.c.b16 %v2554, %v2550
    %v2691 = vpack.c.b16 %v2559, %v2555
    %v2692 = vpack.c.b16 %v2560, %v2556
    %v2693 = vpack.c.b16 %v2561, %v2557
    %v2694 = vpack.c.b16 %v2562, %v2558
    %v2695 = vpack.c.b16 %v2567, %v2563
    %v2696 = vpack.c.b16 %v2568, %v2564
    %v2697 = vpack.c.b16 %v2569, %v2565
    %v2698 = vpack.c.b16 %v2570, %v2566
    %2827 = vmatprep.subr.bf16.mxu0 %v2572
    %2828 = vmatpush1.bf16.msra.mxu0 %v2571
    %2829 = vmatprep.subr.bf16.mxu0 %v2576
    %2830 = vmatpush1.bf16.msra.mxu0 %v2575
    %2831 = vmatprep.subr.bf16.mxu0 %v2580
    %2832 = vmatpush1.bf16.msra.mxu0 %v2579
    %2833 = vmatprep.subr.bf16.mxu0 %v2584
    %2834 = vmatpush1.bf16.msra.mxu0 %v2583
    %2835 = vmatprep.subr.bf16.mxu0 %v2588
    %2836 = vmatpush1.bf16.msra.mxu0 %v2587
    %2837 = vmatprep.subr.bf16.mxu0 %v2592
    %2838 = vmatpush1.bf16.msra.mxu0 %v2591
    %2839 = vmatprep.subr.bf16.mxu0 %v2596
    %2840 = vmatpush1.bf16.msra.mxu0 %v2595
    %2841 = vmatprep.subr.bf16.mxu0 %v2600
    %2842 = vmatpush1.bf16.msra.mxu0 %v2599
    %2843 = vmatprep.subr.bf16.mxu0 %v2604
    %2844 = vmatpush1.bf16.msra.mxu0 %v2603
    %2845 = vmatprep.subr.bf16.mxu0 %v2608
    %2846 = vmatpush1.bf16.msra.mxu0 %v2607
    %2847 = vmatprep.subr.bf16.mxu0 %v2612
    %2848 = vmatpush1.bf16.msra.mxu0 %v2611
    %2849 = vmatprep.subr.bf16.mxu0 %v2616
    %2850 = vmatpush1.bf16.msra.mxu0 %v2615
    %2851 = vmatprep.subr.bf16.mxu0 %v2620
    %2852 = vmatpush1.bf16.msra.mxu0 %v2619
    %2853 = vmatprep.subr.bf16.mxu0 %v2624
    %2854 = vmatpush1.bf16.msra.mxu0 %v2623
    %2855 = vmatprep.subr.bf16.mxu0 %v2628
    %2856 = vmatpush1.bf16.msra.mxu0 %v2627
    %2857 = vmatprep.subr.bf16.mxu0 %v2632
    %2858 = vmatpush1.bf16.msra.mxu0 %v2631
    %2859 = vmatprep.mubr.bf16.mxu0 %v2034
    %2860 = vmatmul.mubr.bf16.gmra.mrb[0].mxu0 %v2033
    %v2861 = vpop.f32.mrb[0].mxu0
    %v2862 = vadd.f32 %v2170, %v2861
    %v2863 = vpop.f32.mrb[0].mxu0
    %v2864 = vadd.f32 %v2174, %v2863
    %v2865 = vpop.f32.mrb[0].mxu0
    %v2866 = vpop.f32.mrb[0].mxu0
    %2867 = vdwg.mxu0
    %2868 = vmatprep.subr.bf16.mxu0 %v2636
    %2869 = vmatpush1.bf16.msra.mxu0 %v2635
    %2870 = vmatprep.subr.bf16.mxu0 %v2640
    %2871 = vmatpush1.bf16.msra.mxu0 %v2639
    %2872 = vmatprep.subr.bf16.mxu0 %v2644
    %2873 = vmatpush1.bf16.msra.mxu0 %v2643
    %2874 = vmatprep.subr.bf16.mxu0 %v2648
    %2875 = vmatpush1.bf16.msra.mxu0 %v2647
    %2876 = vmatprep.subr.bf16.mxu0 %v2652
    %2877 = vmatpush1.bf16.msra.mxu0 %v2651
    %2878 = vmatprep.subr.bf16.mxu0 %v2656
    %2879 = vmatpush1.bf16.msra.mxu0 %v2655
    %2880 = vmatprep.subr.bf16.mxu0 %v2660
    %2881 = vmatpush1.bf16.msra.mxu0 %v2659
    %2882 = vmatprep.subr.bf16.mxu0 %v2664
    %2883 = vmatpush1.bf16.msra.mxu0 %v2663
    %2884 = vmatprep.subr.bf16.mxu0 %v2668
    %2885 = vmatpush1.bf16.msra.mxu0 %v2667
    %2886 = vmatprep.subr.bf16.mxu0 %v2672
    %2887 = vmatpush1.bf16.msra.mxu0 %v2671
    %2888 = vmatprep.subr.bf16.mxu0 %v2676
    %2889 = vmatpush1.bf16.msra.mxu0 %v2675
    %2890 = vmatprep.subr.bf16.mxu0 %v2680
    %2891 = vmatpush1.bf16.msra.mxu0 %v2679
    %2892 = vmatprep.subr.bf16.mxu0 %v2684
    %2893 = vmatpush1.bf16.msra.mxu0 %v2683
    %2894 = vmatprep.subr.bf16.mxu0 %v2688
    %2895 = vmatpush1.bf16.msra.mxu0 %v2687
    %2896 = vmatprep.subr.bf16.mxu0 %v2692
    %2897 = vmatpush1.bf16.msra.mxu0 %v2691
    %2898 = vmatprep.subr.bf16.mxu0 %v2696
    %2899 = vmatpush1.bf16.msra.mxu0 %v2695
    %2900 = vmatprep.mubr.bf16.mxu0 %v2036
    %2901 = vmatmul.mubr.bf16.gmra.mrb[0].mxu0 %v2035
    %v2902 = vpop.f32.mrb[0].mxu0
    %v2903 = vadd.f32 %v2862, %v2902
    %v2904 = vpop.f32.mrb[0].mxu0
    %v2905 = vadd.f32 %v2864, %v2904
    %v2906 = vpop.f32.mrb[0].mxu0
    %v2907 = vpop.f32.mrb[0].mxu0
    %2908 = vdwg.mxu0
    %2909 = vmatprep.subr.bf16.mxu0 %v2574
    %2910 = vmatpush1.bf16.msra.mxu0 %v2573
    %2911 = vmatprep.subr.bf16.mxu0 %v2578
    %2912 = vmatpush1.bf16.msra.mxu0 %v2577
    %2913 = vmatprep.subr.bf16.mxu0 %v2582
    %2914 = vmatpush1.bf16.msra.mxu0 %v2581
    %2915 = vmatprep.subr.bf16.mxu0 %v2586
    %2916 = vmatpush1.bf16.msra.mxu0 %v2585
    %2917 = vmatprep.subr.bf16.mxu0 %v2590
    %2918 = vmatpush1.bf16.msra.mxu0 %v2589
    %2919 = vmatprep.subr.bf16.mxu0 %v2594
    %2920 = vmatpush1.bf16.msra.mxu0 %v2593
    %2921 = vmatprep.subr.bf16.mxu0 %v2598
    %2922 = vmatpush1.bf16.msra.mxu0 %v2597
    %2923 = vmatprep.subr.bf16.mxu0 %v2602
    %2924 = vmatpush1.bf16.msra.mxu0 %v2601
    %2925 = vmatprep.subr.bf16.mxu0 %v2606
    %2926 = vmatpush1.bf16.msra.mxu0 %v2605
    %2927 = vmatprep.subr.bf16.mxu0 %v2610
    %2928 = vmatpush1.bf16.msra.mxu0 %v2609
    %2929 = vmatprep.subr.bf16.mxu0 %v2614
    %2930 = vmatpush1.bf16.msra.mxu0 %v2613
    %2931 = vmatprep.subr.bf16.mxu0 %v2618
    %2932 = vmatpush1.bf16.msra.mxu0 %v2617
    %2933 = vmatprep.subr.bf16.mxu0 %v2622
    %2934 = vmatpush1.bf16.msra.mxu0 %v2621
    %2935 = vmatprep.subr.bf16.mxu0 %v2626
    %2936 = vmatpush1.bf16.msra.mxu0 %v2625
    %2937 = vmatprep.subr.bf16.mxu0 %v2630
    %2938 = vmatpush1.bf16.msra.mxu0 %v2629
    %2939 = vmatprep.subr.bf16.mxu0 %v2634
    %2940 = vmatpush1.bf16.msra.mxu0 %v2633
    %2941 = vmatprep.mubr.bf16.mxu0 %v2034
    %2942 = vmatmul.mubr.bf16.gmra.mrb[0].mxu0 %v2033
    %v2943 = vpop.f32.mrb[0].mxu0
    %v2944 = vadd.f32 %v2178, %v2943
    %v2945 = vpop.f32.mrb[0].mxu0
    %v2946 = vadd.f32 %v2182, %v2945
    %v2947 = vpop.f32.mrb[0].mxu0
    %v2948 = vpop.f32.mrb[0].mxu0
    %2949 = vdwg.mxu0
    %2950 = vmatprep.subr.bf16.mxu0 %v2638
    %2951 = vmatpush1.bf16.msra.mxu0 %v2637
    %2952 = vmatprep.subr.bf16.mxu0 %v2642
    %2953 = vmatpush1.bf16.msra.mxu0 %v2641
    %2954 = vmatprep.subr.bf16.mxu0 %v2646
    %2955 = vmatpush1.bf16.msra.mxu0 %v2645
    %2956 = vmatprep.subr.bf16.mxu0 %v2650
    %2957 = vmatpush1.bf16.msra.mxu0 %v2649
    %2958 = vmatprep.subr.bf16.mxu0 %v2654
    %2959 = vmatpush1.bf16.msra.mxu0 %v2653
    %2960 = vmatprep.subr.bf16.mxu0 %v2658
    %2961 = vmatpush1.bf16.msra.mxu0 %v2657
    %2962 = vmatprep.subr.bf16.mxu0 %v2662
    %2963 = vmatpush1.bf16.msra.mxu0 %v2661
    %2964 = vmatprep.subr.bf16.mxu0 %v2666
    %2965 = vmatpush1.bf16.msra.mxu0 %v2665
    %2966 = vmatprep.subr.bf16.mxu0 %v2670
    %2967 = vmatpush1.bf16.msra.mxu0 %v2669
    %2968 = vmatprep.subr.bf16.mxu0 %v2674
    %2969 = vmatpush1.bf16.msra.mxu0 %v2673
    %2970 = vmatprep.subr.bf16.mxu0 %v2678
    %2971 = vmatpush1.bf16.msra.mxu0 %v2677
    %2972 = vmatprep.subr.bf16.mxu0 %v2682
    %2973 = vmatpush1.bf16.msra.mxu0 %v2681
    %2974 = vmatprep.subr.bf16.mxu0 %v2686
    %2975 = vmatpush1.bf16.msra.mxu0 %v2685
    %2976 = vmatprep.subr.bf16.mxu0 %v2690
    %2977 = vmatpush1.bf16.msra.mxu0 %v2689
    %2978 = vmatprep.subr.bf16.mxu0 %v2694
    %2979 = vmatpush1.bf16.msra.mxu0 %v2693
    %2980 = vmatprep.subr.bf16.mxu0 %v2698
    %2981 = vmatpush1.bf16.msra.mxu0 %v2697
    %2982 = vmatprep.mubr.bf16.mxu0 %v2036
    %2983 = vmatmul.mubr.bf16.gmra.mrb[0].mxu0 %v2035
    %v2984 = vpop.f32.mrb[0].mxu0
    %v2985 = vadd.f32 %v2944, %v2984
    %v2986 = vpop.f32.mrb[0].mxu0
    %v2987 = vadd.f32 %v2946, %v2986
    %v2988 = vpop.f32.mrb[0].mxu0
    %v2989 = vpop.f32.mrb[0].mxu0
    %2990 = vdwg.mxu0
    %2991 = vst [vmem:[#allocation19] sm:$0xff] %v2903
    %2992 = vst [vmem:[#allocation19 + $0x8] sm:$0xff] %v2905
    %2993 = vst [vmem:[#allocation19 + $0x10] sm:$0xff] %v2985
    %2994 = vst [vmem:[#allocation19 + $0x18] sm:$0xff] %v2987
    %v2995 = vpack.c.bf16 %v420, %v420
    %v2996 = vld [vmem:[#allocation16] sm:$0xff]
    %v2997 = vld [vmem:[#allocation16 + $0x8] sm:$0xff]
    %v2998 = vld [vmem:[#allocation16 + $0x10] sm:$0xff]
    %v2999 = vld [vmem:[#allocation16 + $0x18] sm:$0xff]
    %v3000 = vld [vmem:[#allocation16 + $0x20] sm:$0xff]
    %v3001 = vld [vmem:[#allocation16 + $0x28] sm:$0xff]
    %v3002 = vld [vmem:[#allocation16 + $0x30] sm:$0xff]
    %v3003 = vld [vmem:[#allocation16 + $0x38] sm:$0xff]
    %v3004 = vld [vmem:[#allocation16 + $0x40] sm:$0xff]
    %v3005 = vld [vmem:[#allocation16 + $0x48] sm:$0xff]
    %v3006 = vld [vmem:[#allocation16 + $0x50] sm:$0xff]
    %v3007 = vld [vmem:[#allocation16 + $0x58] sm:$0xff]
    %v3008 = vld [vmem:[#allocation16 + $0x60] sm:$0xff]
    %v3009 = vld [vmem:[#allocation16 + $0x68] sm:$0xff]
    %v3010 = vld [vmem:[#allocation16 + $0x70] sm:$0xff]
    %v3011 = vld [vmem:[#allocation16 + $0x78] sm:$0xff]
    %v3012 = vld [vmem:[%s14] sm:$0x3]
    %v3014 = vlaneseq
    %v3015 = vshrl.u32 %v3014, 7
    %v3016 = vsub.s32 0, %v3015
    %v3017 = vrot.slane %v3012, %v3016
    %v3018 = vlaneseq
    %v3019 = vshrl.u32 %v3018, 7
    %v3020 = vsub.s32 1, %v3019
    %v3021 = vrot.slane %v3012, %v3020
    %v3040 = vunpack.c.l.b16 %v2996
    %v3041 = vunpack.c.h.b16 %v2996
    %v3042 = vunpack.c.l.b16 %v2997
    %v3043 = vunpack.c.h.b16 %v2997
    %v3044 = vunpack.c.l.b16 %v2998
    %v3045 = vunpack.c.h.b16 %v2998
    %v3046 = vunpack.c.l.b16 %v2999
    %v3047 = vunpack.c.h.b16 %v2999
    %v3048 = vunpack.c.l.b16 %v3000
    %v3049 = vunpack.c.h.b16 %v3000
    %v3050 = vunpack.c.l.b16 %v3001
    %v3051 = vunpack.c.h.b16 %v3001
    %v3052 = vunpack.c.l.b16 %v3002
    %v3053 = vunpack.c.h.b16 %v3002
    %v3054 = vunpack.c.l.b16 %v3003
    %v3055 = vunpack.c.h.b16 %v3003
    %v3056 = vunpack.c.l.b16 %v3004
    %v3057 = vunpack.c.h.b16 %v3004
    %v3058 = vunpack.c.l.b16 %v3005
    %v3059 = vunpack.c.h.b16 %v3005
    %v3060 = vunpack.c.l.b16 %v3006
    %v3061 = vunpack.c.h.b16 %v3006
    %v3062 = vunpack.c.l.b16 %v3007
    %v3063 = vunpack.c.h.b16 %v3007
    %v3064 = vunpack.c.l.b16 %v3008
    %v3065 = vunpack.c.h.b16 %v3008
    %v3066 = vunpack.c.l.b16 %v3009
    %v3067 = vunpack.c.h.b16 %v3009
    %v3068 = vunpack.c.l.b16 %v3010
    %v3069 = vunpack.c.h.b16 %v3010
    %v3070 = vunpack.c.l.b16 %v3011
    %v3071 = vunpack.c.h.b16 %v3011
    %v3072 = vpack.c.b16 %v3042, %v3040
    %v3073 = vpack.c.b16 %v3043, %v3041
    %v3074 = vpack.c.b16 %v3046, %v3044
    %v3075 = vpack.c.b16 %v3047, %v3045
    %v3076 = vpack.c.b16 %v3050, %v3048
    %v3077 = vpack.c.b16 %v3051, %v3049
    %v3078 = vpack.c.b16 %v3054, %v3052
    %v3079 = vpack.c.b16 %v3055, %v3053
    %v3080 = vpack.c.b16 %v3058, %v3056
    %v3081 = vpack.c.b16 %v3059, %v3057
    %v3082 = vpack.c.b16 %v3062, %v3060
    %v3083 = vpack.c.b16 %v3063, %v3061
    %v3084 = vpack.c.b16 %v3066, %v3064
    %v3085 = vpack.c.b16 %v3067, %v3065
    %v3086 = vpack.c.b16 %v3070, %v3068
    %v3087 = vpack.c.b16 %v3071, %v3069
    %3104 = vmatprep.subr.bf16.mxu0 %v3073
    %3105 = vmatpush1.bf16.msra.mxu0 %v3072
    %3106 = vmatprep.subr.bf16.mxu0 %v3075
    %3107 = vmatpush1.bf16.msra.mxu0 %v3074
    %3108 = vmatprep.subr.bf16.mxu0 %v3077
    %3109 = vmatpush1.bf16.msra.mxu0 %v3076
    %3110 = vmatprep.subr.bf16.mxu0 %v3079
    %3111 = vmatpush1.bf16.msra.mxu0 %v3078
    %3112 = vmatprep.subr.bf16.mxu0 %v3081
    %3113 = vmatpush1.bf16.msra.mxu0 %v3080
    %3114 = vmatprep.subr.bf16.mxu0 %v3083
    %3115 = vmatpush1.bf16.msra.mxu0 %v3082
    %3116 = vmatprep.subr.bf16.mxu0 %v3085
    %3117 = vmatpush1.bf16.msra.mxu0 %v3084
    %3118 = vmatprep.subr.bf16.mxu0 %v3087
    %3119 = vmatpush1.bf16.msra.mxu0 %v3086
    %3120 = vmatprep.subr.bf16.mxu0 0
    %3121 = vmatpush1.bf16.msra.mxu0 0
    %3122 = vmatprep.subr.bf16.mxu0 0
    %3123 = vmatpush1.bf16.msra.mxu0 0
    %3124 = vmatprep.subr.bf16.mxu0 0
    %3125 = vmatpush1.bf16.msra.mxu0 0
    %3126 = vmatprep.subr.bf16.mxu0 0
    %3127 = vmatpush1.bf16.msra.mxu0 0
    %3128 = vmatprep.subr.bf16.mxu0 0
    %3129 = vmatpush1.bf16.msra.mxu0 0
    %3130 = vmatprep.subr.bf16.mxu0 0
    %3131 = vmatpush1.bf16.msra.mxu0 0
    %3132 = vmatprep.subr.bf16.mxu0 0
    %3133 = vmatpush1.bf16.msra.mxu0 0
    %3134 = vmatprep.subr.bf16.mxu0 0
    %3135 = vmatpush1.bf16.msra.mxu0 0
    %3136 = vmatprep.mubr.bf16.mxu0 0
    %3137 = vmatmul.mubr.bf16.gmra.mrb[0].mxu0 %v2995
    %v3138 = vpop.f32.mrb[0].mxu0
    %v3139 = vadd.f32 %v3017, %v3138
    %v3140 = vpop.f32.mrb[0].mxu0
    %v3141 = vadd.f32 %v3021, %v3140
    %v3142 = vpop.f32.mrb[0].mxu0
    %v3143 = vpop.f32.mrb[0].mxu0
    %3144 = vdwg.mxu0
    %vm3145 = vcmp.ge.f32.partialorder %v3139, 0.0
    %vm3146 = vcmp.ge.f32.partialorder %v3141, 0.0
    %v3147 = vmul.f32 %v3139, 0.01
    %v3148 = vmul.f32 %v3141, 0.01
    %v3149 = vsel %vm3145, %v3139, %v3147
    %v3150 = vsel %vm3146, %v3141, %v3148
    %v3151 = vpack.c.bf16 %v3149, %v3149
    %v3152 = vpack.c.bf16 %v3150, %v3150
    %v3153 = vld [vmem:[#allocation17] sm:$0xff]
    %v3154 = vld [vmem:[#allocation17 + $0x8] sm:$0xff]
    %v3155 = vld [vmem:[#allocation17 + $0x10] sm:$0xff]
    %v3156 = vld [vmem:[#allocation17 + $0x18] sm:$0xff]
    %v3157 = vld [vmem:[#allocation17 + $0x20] sm:$0xff]
    %v3158 = vld [vmem:[#allocation17 + $0x28] sm:$0xff]
    %v3159 = vld [vmem:[#allocation17 + $0x30] sm:$0xff]
    %v3160 = vld [vmem:[#allocation17 + $0x38] sm:$0xff]
    %v3161 = vld [vmem:[#allocation17 + $0x40] sm:$0xff]
    %v3162 = vld [vmem:[#allocation17 + $0x48] sm:$0xff]
    %v3163 = vld [vmem:[#allocation17 + $0x50] sm:$0xff]
    %v3164 = vld [vmem:[#allocation17 + $0x58] sm:$0xff]
    %v3165 = vld [vmem:[#allocation17 + $0x60] sm:$0xff]
    %v3166 = vld [vmem:[#allocation17 + $0x68] sm:$0xff]
    %v3167 = vld [vmem:[#allocation17 + $0x70] sm:$0xff]
    %v3168 = vld [vmem:[#allocation17 + $0x78] sm:$0xff]
    %v3169 = vld [vmem:[#allocation17 + $0x80] sm:$0xff]
    %v3170 = vld [vmem:[#allocation17 + $0x88] sm:$0xff]
    %v3171 = vld [vmem:[#allocation17 + $0x90] sm:$0xff]
    %v3172 = vld [vmem:[#allocation17 + $0x98] sm:$0xff]
    %v3173 = vld [vmem:[#allocation17 + $0xa0] sm:$0xff]
    %v3174 = vld [vmem:[#allocation17 + $0xa8] sm:$0xff]
    %v3175 = vld [vmem:[#allocation17 + $0xb0] sm:$0xff]
    %v3176 = vld [vmem:[#allocation17 + $0xb8] sm:$0xff]
    %v3177 = vld [vmem:[#allocation17 + $0xc0] sm:$0xff]
    %v3178 = vld [vmem:[#allocation17 + $0xc8] sm:$0xff]
    %v3179 = vld [vmem:[#allocation17 + $0xd0] sm:$0xff]
    %v3180 = vld [vmem:[#allocation17 + $0xd8] sm:$0xff]
    %v3181 = vld [vmem:[#allocation17 + $0xe0] sm:$0xff]
    %v3182 = vld [vmem:[#allocation17 + $0xe8] sm:$0xff]
    %v3183 = vld [vmem:[#allocation17 + $0xf0] sm:$0xff]
    %v3184 = vld [vmem:[#allocation17 + $0xf8] sm:$0xff]
    %v3185 = vld [vmem:[#allocation17 + $0x100] sm:$0xff]
    %v3186 = vld [vmem:[#allocation17 + $0x108] sm:$0xff]
    %v3187 = vld [vmem:[#allocation17 + $0x110] sm:$0xff]
    %v3188 = vld [vmem:[#allocation17 + $0x118] sm:$0xff]
    %v3189 = vld [vmem:[#allocation17 + $0x120] sm:$0xff]
    %v3190 = vld [vmem:[#allocation17 + $0x128] sm:$0xff]
    %v3191 = vld [vmem:[#allocation17 + $0x130] sm:$0xff]
    %v3192 = vld [vmem:[#allocation17 + $0x138] sm:$0xff]
    %v3193 = vld [vmem:[#allocation17 + $0x140] sm:$0xff]
    %v3194 = vld [vmem:[#allocation17 + $0x148] sm:$0xff]
    %v3195 = vld [vmem:[#allocation17 + $0x150] sm:$0xff]
    %v3196 = vld [vmem:[#allocation17 + $0x158] sm:$0xff]
    %v3197 = vld [vmem:[#allocation17 + $0x160] sm:$0xff]
    %v3198 = vld [vmem:[#allocation17 + $0x168] sm:$0xff]
    %v3199 = vld [vmem:[#allocation17 + $0x170] sm:$0xff]
    %v3200 = vld [vmem:[#allocation17 + $0x178] sm:$0xff]
    %v3201 = vld [vmem:[#allocation17 + $0x180] sm:$0xff]
    %v3202 = vld [vmem:[#allocation17 + $0x188] sm:$0xff]
    %v3203 = vld [vmem:[#allocation17 + $0x190] sm:$0xff]
    %v3204 = vld [vmem:[#allocation17 + $0x198] sm:$0xff]
    %v3205 = vld [vmem:[#allocation17 + $0x1a0] sm:$0xff]
    %v3206 = vld [vmem:[#allocation17 + $0x1a8] sm:$0xff]
    %v3207 = vld [vmem:[#allocation17 + $0x1b0] sm:$0xff]
    %v3208 = vld [vmem:[#allocation17 + $0x1b8] sm:$0xff]
    %v3209 = vld [vmem:[#allocation17 + $0x1c0] sm:$0xff]
    %v3210 = vld [vmem:[#allocation17 + $0x1c8] sm:$0xff]
    %v3211 = vld [vmem:[#allocation17 + $0x1d0] sm:$0xff]
    %v3212 = vld [vmem:[#allocation17 + $0x1d8] sm:$0xff]
    %v3213 = vld [vmem:[#allocation17 + $0x1e0] sm:$0xff]
    %v3214 = vld [vmem:[#allocation17 + $0x1e8] sm:$0xff]
    %v3215 = vld [vmem:[#allocation17 + $0x1f0] sm:$0xff]
    %v3216 = vld [vmem:[#allocation17 + $0x1f8] sm:$0xff]
    %v3217 = vld [vmem:[%s16] sm:$0xf]
    %v3219 = vlaneseq
    %v3220 = vshrl.u32 %v3219, 7
    %v3221 = vsub.s32 0, %v3220
    %v3222 = vrot.slane %v3217, %v3221
    %v3223 = vlaneseq
    %v3224 = vshrl.u32 %v3223, 7
    %v3225 = vsub.s32 1, %v3224
    %v3226 = vrot.slane %v3217, %v3225
    %v3227 = vlaneseq
    %v3228 = vshrl.u32 %v3227, 7
    %v3229 = vsub.s32 2, %v3228
    %v3230 = vrot.slane %v3217, %v3229
    %v3231 = vlaneseq
    %v3232 = vshrl.u32 %v3231, 7
    %v3233 = vsub.s32 3, %v3232
    %v3234 = vrot.slane %v3217, %v3233
    %v3303 = vunpack.c.l.b16 %v3153
    %v3304 = vunpack.c.h.b16 %v3153
    %v3305 = vunpack.c.l.b16 %v3154
    %v3306 = vunpack.c.h.b16 %v3154
    %v3307 = vunpack.c.l.b16 %v3155
    %v3308 = vunpack.c.h.b16 %v3155
    %v3309 = vunpack.c.l.b16 %v3156
    %v3310 = vunpack.c.h.b16 %v3156
    %v3311 = vunpack.c.l.b16 %v3157
    %v3312 = vunpack.c.h.b16 %v3157
    %v3313 = vunpack.c.l.b16 %v3158
    %v3314 = vunpack.c.h.b16 %v3158
    %v3315 = vunpack.c.l.b16 %v3159
    %v3316 = vunpack.c.h.b16 %v3159
    %v3317 = vunpack.c.l.b16 %v3160
    %v3318 = vunpack.c.h.b16 %v3160
    %v3319 = vunpack.c.l.b16 %v3161
    %v3320 = vunpack.c.h.b16 %v3161
    %v3321 = vunpack.c.l.b16 %v3162
    %v3322 = vunpack.c.h.b16 %v3162
    %v3323 = vunpack.c.l.b16 %v3163
    %v3324 = vunpack.c.h.b16 %v3163
    %v3325 = vunpack.c.l.b16 %v3164
    %v3326 = vunpack.c.h.b16 %v3164
    %v3327 = vunpack.c.l.b16 %v3165
    %v3328 = vunpack.c.h.b16 %v3165
    %v3329 = vunpack.c.l.b16 %v3166
    %v3330 = vunpack.c.h.b16 %v3166
    %v3331 = vunpack.c.l.b16 %v3167
    %v3332 = vunpack.c.h.b16 %v3167
    %v3333 = vunpack.c.l.b16 %v3168
    %v3334 = vunpack.c.h.b16 %v3168
    %v3335 = vunpack.c.l.b16 %v3169
    %v3336 = vunpack.c.h.b16 %v3169
    %v3337 = vunpack.c.l.b16 %v3170
    %v3338 = vunpack.c.h.b16 %v3170
    %v3339 = vunpack.c.l.b16 %v3171
    %v3340 = vunpack.c.h.b16 %v3171
    %v3341 = vunpack.c.l.b16 %v3172
    %v3342 = vunpack.c.h.b16 %v3172
    %v3343 = vunpack.c.l.b16 %v3173
    %v3344 = vunpack.c.h.b16 %v3173
    %v3345 = vunpack.c.l.b16 %v3174
    %v3346 = vunpack.c.h.b16 %v3174
    %v3347 = vunpack.c.l.b16 %v3175
    %v3348 = vunpack.c.h.b16 %v3175
    %v3349 = vunpack.c.l.b16 %v3176
    %v3350 = vunpack.c.h.b16 %v3176
    %v3351 = vunpack.c.l.b16 %v3177
    %v3352 = vunpack.c.h.b16 %v3177
    %v3353 = vunpack.c.l.b16 %v3178
    %v3354 = vunpack.c.h.b16 %v3178
    %v3355 = vunpack.c.l.b16 %v3179
    %v3356 = vunpack.c.h.b16 %v3179
    %v3357 = vunpack.c.l.b16 %v3180
    %v3358 = vunpack.c.h.b16 %v3180
    %v3359 = vunpack.c.l.b16 %v3181
    %v3360 = vunpack.c.h.b16 %v3181
    %v3361 = vunpack.c.l.b16 %v3182
    %v3362 = vunpack.c.h.b16 %v3182
    %v3363 = vunpack.c.l.b16 %v3183
    %v3364 = vunpack.c.h.b16 %v3183
    %v3365 = vunpack.c.l.b16 %v3184
    %v3366 = vunpack.c.h.b16 %v3184
    %v3367 = vunpack.c.l.b16 %v3185
    %v3368 = vunpack.c.h.b16 %v3185
    %v3369 = vunpack.c.l.b16 %v3186
    %v3370 = vunpack.c.h.b16 %v3186
    %v3371 = vunpack.c.l.b16 %v3187
    %v3372 = vunpack.c.h.b16 %v3187
    %v3373 = vunpack.c.l.b16 %v3188
    %v3374 = vunpack.c.h.b16 %v3188
    %v3375 = vunpack.c.l.b16 %v3189
    %v3376 = vunpack.c.h.b16 %v3189
    %v3377 = vunpack.c.l.b16 %v3190
    %v3378 = vunpack.c.h.b16 %v3190
    %v3379 = vunpack.c.l.b16 %v3191
    %v3380 = vunpack.c.h.b16 %v3191
    %v3381 = vunpack.c.l.b16 %v3192
    %v3382 = vunpack.c.h.b16 %v3192
    %v3383 = vunpack.c.l.b16 %v3193
    %v3384 = vunpack.c.h.b16 %v3193
    %v3385 = vunpack.c.l.b16 %v3194
    %v3386 = vunpack.c.h.b16 %v3194
    %v3387 = vunpack.c.l.b16 %v3195
    %v3388 = vunpack.c.h.b16 %v3195
    %v3389 = vunpack.c.l.b16 %v3196
    %v3390 = vunpack.c.h.b16 %v3196
    %v3391 = vunpack.c.l.b16 %v3197
    %v3392 = vunpack.c.h.b16 %v3197
    %v3393 = vunpack.c.l.b16 %v3198
    %v3394 = vunpack.c.h.b16 %v3198
    %v3395 = vunpack.c.l.b16 %v3199
    %v3396 = vunpack.c.h.b16 %v3199
    %v3397 = vunpack.c.l.b16 %v3200
    %v3398 = vunpack.c.h.b16 %v3200
    %v3399 = vunpack.c.l.b16 %v3201
    %v3400 = vunpack.c.h.b16 %v3201
    %v3401 = vunpack.c.l.b16 %v3202
    %v3402 = vunpack.c.h.b16 %v3202
    %v3403 = vunpack.c.l.b16 %v3203
    %v3404 = vunpack.c.h.b16 %v3203
    %v3405 = vunpack.c.l.b16 %v3204
    %v3406 = vunpack.c.h.b16 %v3204
    %v3407 = vunpack.c.l.b16 %v3205
    %v3408 = vunpack.c.h.b16 %v3205
    %v3409 = vunpack.c.l.b16 %v3206
    %v3410 = vunpack.c.h.b16 %v3206
    %v3411 = vunpack.c.l.b16 %v3207
    %v3412 = vunpack.c.h.b16 %v3207
    %v3413 = vunpack.c.l.b16 %v3208
    %v3414 = vunpack.c.h.b16 %v3208
    %v3415 = vunpack.c.l.b16 %v3209
    %v3416 = vunpack.c.h.b16 %v3209
    %v3417 = vunpack.c.l.b16 %v3210
    %v3418 = vunpack.c.h.b16 %v3210
    %v3419 = vunpack.c.l.b16 %v3211
    %v3420 = vunpack.c.h.b16 %v3211
    %v3421 = vunpack.c.l.b16 %v3212
    %v3422 = vunpack.c.h.b16 %v3212
    %v3423 = vunpack.c.l.b16 %v3213
    %v3424 = vunpack.c.h.b16 %v3213
    %v3425 = vunpack.c.l.b16 %v3214
    %v3426 = vunpack.c.h.b16 %v3214
    %v3427 = vunpack.c.l.b16 %v3215
    %v3428 = vunpack.c.h.b16 %v3215
    %v3429 = vunpack.c.l.b16 %v3216
    %v3430 = vunpack.c.h.b16 %v3216
    %v3431 = vpack.c.b16 %v3307, %v3303
    %v3432 = vpack.c.b16 %v3308, %v3304
    %v3433 = vpack.c.b16 %v3309, %v3305
    %v3434 = vpack.c.b16 %v3310, %v3306
    %v3435 = vpack.c.b16 %v3315, %v3311
    %v3436 = vpack.c.b16 %v3316, %v3312
    %v3437 = vpack.c.b16 %v3317, %v3313
    %v3438 = vpack.c.b16 %v3318, %v3314
    %v3439 = vpack.c.b16 %v3323, %v3319
    %v3440 = vpack.c.b16 %v3324, %v3320
    %v3441 = vpack.c.b16 %v3325, %v3321
    %v3442 = vpack.c.b16 %v3326, %v3322
    %v3443 = vpack.c.b16 %v3331, %v3327
    %v3444 = vpack.c.b16 %v3332, %v3328
    %v3445 = vpack.c.b16 %v3333, %v3329
    %v3446 = vpack.c.b16 %v3334, %v3330
    %v3447 = vpack.c.b16 %v3339, %v3335
    %v3448 = vpack.c.b16 %v3340, %v3336
    %v3449 = vpack.c.b16 %v3341, %v3337
    %v3450 = vpack.c.b16 %v3342, %v3338
    %v3451 = vpack.c.b16 %v3347, %v3343
    %v3452 = vpack.c.b16 %v3348, %v3344
    %v3453 = vpack.c.b16 %v3349, %v3345
    %v3454 = vpack.c.b16 %v3350, %v3346
    %v3455 = vpack.c.b16 %v3355, %v3351
    %v3456 = vpack.c.b16 %v3356, %v3352
    %v3457 = vpack.c.b16 %v3357, %v3353
    %v3458 = vpack.c.b16 %v3358, %v3354
    %v3459 = vpack.c.b16 %v3363, %v3359
    %v3460 = vpack.c.b16 %v3364, %v3360
    %v3461 = vpack.c.b16 %v3365, %v3361
    %v3462 = vpack.c.b16 %v3366, %v3362
    %v3463 = vpack.c.b16 %v3371, %v3367
    %v3464 = vpack.c.b16 %v3372, %v3368
    %v3465 = vpack.c.b16 %v3373, %v3369
    %v3466 = vpack.c.b16 %v3374, %v3370
    %v3467 = vpack.c.b16 %v3379, %v3375
    %v3468 = vpack.c.b16 %v3380, %v3376
    %v3469 = vpack.c.b16 %v3381, %v3377
    %v3470 = vpack.c.b16 %v3382, %v3378
    %v3471 = vpack.c.b16 %v3387, %v3383
    %v3472 = vpack.c.b16 %v3388, %v3384
    %v3473 = vpack.c.b16 %v3389, %v3385
    %v3474 = vpack.c.b16 %v3390, %v3386
    %v3475 = vpack.c.b16 %v3395, %v3391
    %v3476 = vpack.c.b16 %v3396, %v3392
    %v3477 = vpack.c.b16 %v3397, %v3393
    %v3478 = vpack.c.b16 %v3398, %v3394
    %v3479 = vpack.c.b16 %v3403, %v3399
    %v3480 = vpack.c.b16 %v3404, %v3400
    %v3481 = vpack.c.b16 %v3405, %v3401
    %v3482 = vpack.c.b16 %v3406, %v3402
    %v3483 = vpack.c.b16 %v3411, %v3407
    %v3484 = vpack.c.b16 %v3412, %v3408
    %v3485 = vpack.c.b16 %v3413, %v3409
    %v3486 = vpack.c.b16 %v3414, %v3410
    %v3487 = vpack.c.b16 %v3419, %v3415
    %v3488 = vpack.c.b16 %v3420, %v3416
    %v3489 = vpack.c.b16 %v3421, %v3417
    %v3490 = vpack.c.b16 %v3422, %v3418
    %v3491 = vpack.c.b16 %v3427, %v3423
    %v3492 = vpack.c.b16 %v3428, %v3424
    %v3493 = vpack.c.b16 %v3429, %v3425
    %v3494 = vpack.c.b16 %v3430, %v3426
    %3559 = vmatprep.subr.bf16.mxu0 %v3432
    %3560 = vmatpush1.bf16.msra.mxu0 %v3431
    %3561 = vmatprep.subr.bf16.mxu0 %v3436
    %3562 = vmatpush1.bf16.msra.mxu0 %v3435
    %3563 = vmatprep.subr.bf16.mxu0 %v3440
    %3564 = vmatpush1.bf16.msra.mxu0 %v3439
    %3565 = vmatprep.subr.bf16.mxu0 %v3444
    %3566 = vmatpush1.bf16.msra.mxu0 %v3443
    %3567 = vmatprep.subr.bf16.mxu0 %v3448
    %3568 = vmatpush1.bf16.msra.mxu0 %v3447
    %3569 = vmatprep.subr.bf16.mxu0 %v3452
    %3570 = vmatpush1.bf16.msra.mxu0 %v3451
    %3571 = vmatprep.subr.bf16.mxu0 %v3456
    %3572 = vmatpush1.bf16.msra.mxu0 %v3455
    %3573 = vmatprep.subr.bf16.mxu0 %v3460
    %3574 = vmatpush1.bf16.msra.mxu0 %v3459
    %3575 = vmatprep.subr.bf16.mxu0 %v3464
    %3576 = vmatpush1.bf16.msra.mxu0 %v3463
    %3577 = vmatprep.subr.bf16.mxu0 %v3468
    %3578 = vmatpush1.bf16.msra.mxu0 %v3467
    %3579 = vmatprep.subr.bf16.mxu0 %v3472
    %3580 = vmatpush1.bf16.msra.mxu0 %v3471
    %3581 = vmatprep.subr.bf16.mxu0 %v3476
    %3582 = vmatpush1.bf16.msra.mxu0 %v3475
    %3583 = vmatprep.subr.bf16.mxu0 %v3480
    %3584 = vmatpush1.bf16.msra.mxu0 %v3479
    %3585 = vmatprep.subr.bf16.mxu0 %v3484
    %3586 = vmatpush1.bf16.msra.mxu0 %v3483
    %3587 = vmatprep.subr.bf16.mxu0 %v3488
    %3588 = vmatpush1.bf16.msra.mxu0 %v3487
    %3589 = vmatprep.subr.bf16.mxu0 %v3492
    %3590 = vmatpush1.bf16.msra.mxu0 %v3491
    %3591 = vmatprep.mubr.bf16.mxu0 %v3152
    %3592 = vmatmul.mubr.bf16.gmra.mrb[0].mxu0 %v3151
    %v3593 = vpop.f32.mrb[0].mxu0
    %v3594 = vadd.f32 %v3222, %v3593
    %v3595 = vpop.f32.mrb[0].mxu0
    %v3596 = vadd.f32 %v3226, %v3595
    %v3597 = vpop.f32.mrb[0].mxu0
    %v3598 = vpop.f32.mrb[0].mxu0
    %3599 = vdwg.mxu0
    %3600 = vmatprep.subr.bf16.mxu0 %v3434
    %3601 = vmatpush1.bf16.msra.mxu0 %v3433
    %3602 = vmatprep.subr.bf16.mxu0 %v3438
    %3603 = vmatpush1.bf16.msra.mxu0 %v3437
    %3604 = vmatprep.subr.bf16.mxu0 %v3442
    %3605 = vmatpush1.bf16.msra.mxu0 %v3441
    %3606 = vmatprep.subr.bf16.mxu0 %v3446
    %3607 = vmatpush1.bf16.msra.mxu0 %v3445
    %3608 = vmatprep.subr.bf16.mxu0 %v3450
    %3609 = vmatpush1.bf16.msra.mxu0 %v3449
    %3610 = vmatprep.subr.bf16.mxu0 %v3454
    %3611 = vmatpush1.bf16.msra.mxu0 %v3453
    %3612 = vmatprep.subr.bf16.mxu0 %v3458
    %3613 = vmatpush1.bf16.msra.mxu0 %v3457
    %3614 = vmatprep.subr.bf16.mxu0 %v3462
    %3615 = vmatpush1.bf16.msra.mxu0 %v3461
    %3616 = vmatprep.subr.bf16.mxu0 %v3466
    %3617 = vmatpush1.bf16.msra.mxu0 %v3465
    %3618 = vmatprep.subr.bf16.mxu0 %v3470
    %3619 = vmatpush1.bf16.msra.mxu0 %v3469
    %3620 = vmatprep.subr.bf16.mxu0 %v3474
    %3621 = vmatpush1.bf16.msra.mxu0 %v3473
    %3622 = vmatprep.subr.bf16.mxu0 %v3478
    %3623 = vmatpush1.bf16.msra.mxu0 %v3477
    %3624 = vmatprep.subr.bf16.mxu0 %v3482
    %3625 = vmatpush1.bf16.msra.mxu0 %v3481
    %3626 = vmatprep.subr.bf16.mxu0 %v3486
    %3627 = vmatpush1.bf16.msra.mxu0 %v3485
    %3628 = vmatprep.subr.bf16.mxu0 %v3490
    %3629 = vmatpush1.bf16.msra.mxu0 %v3489
    %3630 = vmatprep.subr.bf16.mxu0 %v3494
    %3631 = vmatpush1.bf16.msra.mxu0 %v3493
    %3632 = vmatprep.mubr.bf16.mxu0 %v3152
    %3633 = vmatmul.mubr.bf16.gmra.mrb[0].mxu0 %v3151
    %v3634 = vpop.f32.mrb[0].mxu0
    %v3635 = vadd.f32 %v3230, %v3634
    %v3636 = vpop.f32.mrb[0].mxu0
    %v3637 = vadd.f32 %v3234, %v3636
    %v3638 = vpop.f32.mrb[0].mxu0
    %v3639 = vpop.f32.mrb[0].mxu0
    %3640 = vdwg.mxu0
    %3641 = vst [vmem:[#allocation20] sm:$0xff] %v3594
    %3642 = vst [vmem:[#allocation20 + $0x8] sm:$0xff] %v3596
    %3643 = vst [vmem:[#allocation20 + $0x10] sm:$0xff] %v3635
    %3644 = vst [vmem:[#allocation20 + $0x18] sm:$0xff] %v3637
    // Predicated region
    $region110: #{tpu_custom_call.1} parent=1 // pred_check
      _
    $region111: #{tpu_custom_call.1} parent=1 // pred_check_branch
      %3646 = sbr.rel (0) target = $region113
    $region112: #{tpu_custom_call.1} parent=1 // pred_region
      %s3648 = ssub.s32 512, 512
      %3649 = vsyncadd [#allocation4], %s3648
      %s3651 = sshll.u32 [#allocation19], 4
      %s3652 = int_to_ptr.vmem [resolvable:$true] %s3651
      %3654 = dma.vmem_to_hbm [thread:$0]  %s3652, 512, %s17, [#allocation4]
    $region113: #{tpu_custom_call.1} parent=1 // pred_fallthru
      _
    // Predicated region
    $region114: #{tpu_custom_call.1} parent=1 // pred_check
      _
    $region115: #{tpu_custom_call.1} parent=1 // pred_check_branch
      %3656 = sbr.rel (0) target = $region117
    $region116: #{tpu_custom_call.1} parent=1 // pred_region
      %s3658 = ssub.s32 512, 512
      %3659 = vsyncadd [#allocation21], %s3658
      %s3661 = sshll.u32 [#allocation20], 4
      %s3662 = int_to_ptr.vmem [resolvable:$true] %s3661
      %3664 = dma.vmem_to_hbm [thread:$0]  %s3662, 512, %s18, [#allocation21]
    $region117: #{tpu_custom_call.1} parent=1 // pred_fallthru
      _
    // Predicated region
    $region118: #{tpu_custom_call.1} parent=1 // pred_check
      _
    $region119: #{tpu_custom_call.1} parent=1 // pred_check_branch
      %3666 = sbr.rel (0) target = $region121
    $region120: #{tpu_custom_call.1} parent=1 // pred_region
      %3667 = dma.done [#allocation4], 512
    $region121: #{tpu_custom_call.1} parent=1 // pred_fallthru
      _
    // Predicated region
    $region122: #{tpu_custom_call.1} parent=1 // pred_check
      _
    $region123: #{tpu_custom_call.1} parent=1 // pred_check_branch
      %3669 = sbr.rel (0) target = $region125
    $region124: #{tpu_custom_call.1} parent=1 // pred_region
      %3670 = dma.done [#allocation21], 512
    $region125: #{tpu_custom_call.1} parent=1 // pred_fallthru
      _
    %3671 = vsyncpa [#allocation3], 1
    %3672 = vsyncpa [#allocation6], 1
    %3673 = vsyncpa [#allocation9], 1
    %3674 = vsyncpa [#allocation12], 1
    %3675 = vsyncpa [#allocation15], 1
    %3676 = vsyncpa [#allocation18], 1
    %3677 = vsyncpa [#allocation4], 1
    %3678 = vsyncpa [#allocation21], 1

</llo_original>
